<compile_context>
chip_gen: v5e
topology: v5e:2x2
jax: 0.10.0
libtpu: 0.0.40
codegen_flags: <defaults>
</compile_context>

<pallas_src>
import jax
import jax.numpy as jnp
from jax.experimental import pallas as pl
from jax.experimental.pallas import tpu as pltpu

HIDDEN = 512
N_BLOCKS = 4       # number of Linear+BN+ReLU blocks
BN_EPS = 1e-5


def domain_classifier_kernel(h_ref, w_hbm, gamma_ref, beta_ref, w5_ref, b5_ref,
                             o_ref, wbuf, sem):
    """Whole forward pass in VMEM with per-layer weight double-buffering.

    h_ref     : (B, 512)        f32   input features (VMEM)
    w_hbm     : (4, 512, 512)   bf16  stacked hidden-layer weights (in, out), HBM (pl.ANY)
    gamma_ref : (4, 1, 512)     f32   BatchNorm1d weight (gamma)
    beta_ref  : (4, 1, 512)     f32   BatchNorm1d bias (beta)
    w5_ref    : (1, 512)        f32   final Linear weight as a lane-dense row
    b5_ref    : (1, 1)          f32   final Linear bias (SMEM scalar)
    o_ref     : (B, 1)          f32   output logits
    wbuf      : (2, 512, 512)   bf16  VMEM double buffer for one layer's weights
    sem       : DMA semaphores, shape (2,)
    """
    B = h_ref.shape[0]
    inv_b = jnp.float32(1.0 / B)

    def start_fetch(layer, slot):
        pltpu.make_async_copy(w_hbm.at[layer], wbuf.at[slot], sem.at[slot]).start()

    def wait_fetch(layer, slot):
        pltpu.make_async_copy(w_hbm.at[layer], wbuf.at[slot], sem.at[slot]).wait()

    # Prime layer 0's weight slab; it streams in while we cast the input.
    start_fetch(0, 0)

    x = h_ref[...].astype(jnp.bfloat16)                 # bf16 MXU operand

    # Static Python loop over the 4 (Linear -> BN -> ReLU) blocks.
    for i in range(N_BLOCKS):
        slot = i & 1
        wait_fetch(i, slot)
        if i + 1 < N_BLOCKS:
            # Overlap next layer's 512 KiB weight DMA with this layer's matmul/BN.
            start_fetch(i + 1, 1 - slot)

        # Linear (bias omitted: cancelled exactly by BN mean subtraction).
        y = jnp.dot(x, wbuf[slot], preferred_element_type=jnp.float32)   # (B, 512) f32

        # BatchNorm1d (training mode, biased variance) folded to one affine.
        sum_y = jnp.sum(y, axis=0, keepdims=True)                        # (1, 512)
        sum_y2 = jnp.sum(y * y, axis=0, keepdims=True)                   # (1, 512)
        mean = sum_y * inv_b
        # Clamp: E[y^2] - mean^2 can go slightly negative in f32.
        var = jnp.maximum(sum_y2 * inv_b - mean * mean, 0.0)
        scale = gamma_ref[i] * jax.lax.rsqrt(var + BN_EPS)               # (1, 512)
        shift = beta_ref[i] - mean * scale                               # (1, 512)

        # Fused affine + ReLU (f32 VPU — safe on v5e too), re-cast to bf16 for next matmul.
        x = jnp.maximum(y * scale + shift, 0.0).astype(jnp.bfloat16)

    # Final Linear(512, 1) as a lane-dense VPU multiply + lane reduce
    # (avoids an N=1 MXU matmul and a lane-padded (512,1) weight tile).
    out = jnp.sum(x.astype(jnp.float32) * w5_ref[...], axis=-1, keepdims=True)
    o_ref[...] = out + b5_ref[0, 0]


def domain_classifier_forward(h, w_stack, gamma_stack, beta_stack, w5, b5):
    B = h.shape[0]
    vmem = pl.BlockSpec(memory_space=pltpu.MemorySpace.VMEM)
    smem = pl.BlockSpec(memory_space=pltpu.MemorySpace.SMEM)
    hbm = pl.BlockSpec(memory_space=pl.ANY)   # raw HBM ref; DMA'd manually per layer
    return pl.pallas_call(
        domain_classifier_kernel,
        out_shape=jax.ShapeDtypeStruct((B, 1), jnp.float32),
        in_specs=[vmem, hbm, vmem, vmem, vmem, smem],
        out_specs=vmem,
        scratch_shapes=[
            pltpu.VMEM((2, HIDDEN, HIDDEN), jnp.bfloat16),   # weight double buffer (1 MiB)
            pltpu.SemaphoreType.DMA((2,)),
        ],
        # Actual footprint at demo batch is ~1.3 MiB; 8 MiB leaves ample headroom and is
        # well under the default scoped limits on v5e/v6e/v7x.
        compiler_params=pltpu.CompilerParams(vmem_limit_bytes=8 * 1024 * 1024),
    )(h, w_stack, gamma_stack, beta_stack, w5, b5)


def init_params(key):
    """Deterministic synthetic parameters matching the PyTorch module's shapes."""
    keys = jax.random.split(key, N_BLOCKS + 2)
    ws, gammas, betas = [], [], []
    for i in range(N_BLOCKS):
        # PyTorch Linear weight is (out, in); transpose to (in, out) for x @ W.
        w_oi = jax.random.normal(keys[i], (HIDDEN, HIDDEN), jnp.float32) * 0.02
        ws.append(w_oi.T)
        # BatchNorm1d init: gamma=1, beta=0.
        gammas.append(jnp.ones((1, HIDDEN), jnp.float32))
        betas.append(jnp.zeros((1, HIDDEN), jnp.float32))
    # Hidden weights as bf16: halves HBM->VMEM DMA bytes, native MXU input dtype.
    w_stack = jnp.stack(ws, axis=0).astype(jnp.bfloat16)      # (4, 512, 512) bf16
    gamma_stack = jnp.stack(gammas, axis=0)                   # (4, 1, 512)   f32
    beta_stack = jnp.stack(betas, axis=0)                     # (4, 1, 512)   f32
    # Final Linear(512,1): PyTorch weight is (1, 512); keep it as a lane-dense row.
    w5 = jax.random.normal(keys[-2], (1, HIDDEN), jnp.float32) * 0.02      # (1, 512) f32
    b5 = jax.random.normal(keys[-1], (1, 1), jnp.float32) * 0.01
    return w_stack, gamma_stack, beta_stack, w5, b5


def reference_forward(h, w_stack, gamma_stack, beta_stack, w5, b5):
    """Pure-JAX reference with PyTorch BatchNorm1d (training-mode) semantics,
    using the same bf16 weights / bf16 matmul operands as the kernel.
    (Input is cast f32->bf16 before the first matmul, matching the kernel; this
    deviates from a pure-f32 PyTorch model within bf16 rounding.)"""
    x = h.astype(jnp.bfloat16)
    for i in range(N_BLOCKS):
        y = jnp.dot(x, w_stack[i], preferred_element_type=jnp.float32)
        mean = jnp.mean(y, axis=0, keepdims=True)
        var = jnp.mean((y - mean) ** 2, axis=0, keepdims=True)       # biased variance
        scale = gamma_stack[i] * jax.lax.rsqrt(var + BN_EPS)
        shift = beta_stack[i] - mean * scale
        x = jnp.maximum(y * scale + shift, 0.0).astype(jnp.bfloat16)
    return jnp.sum(x.astype(jnp.float32) * w5, axis=-1, keepdims=True) + b5[0, 0]


if __name__ == "__main__":
    key = jax.random.PRNGKey(0)
    k_h, k_p = jax.random.split(key)

    B = 8  # small demo batch (BatchNorm1d in training mode needs B > 1)
    h = jax.random.normal(k_h, (B, HIDDEN), jnp.float32)

    params = init_params(k_p)

    out = domain_classifier_forward(h, *params)
    out = jax.block_until_ready(out)

    ref = reference_forward(h, *params)
    assert out.shape == (B, 1)
    assert jnp.allclose(out, ref, atol=1e-2, rtol=1e-2), "mismatch vs JAX reference"

    print("KERNEL_OK")
</pallas_src>

<mosaic_0001>
module attributes {stable_mosaic.version = 11 : i64} {
  func.func @domain_classifier_kernel(%arg0: memref<8x512xf32, #tpu.memory_space<vmem>>, %arg1: memref<4x512x512xbf16, #tpu.memory_space<any>>, %arg2: memref<4x1x512xf32, #tpu.memory_space<vmem>>, %arg3: memref<4x1x512xf32, #tpu.memory_space<vmem>>, %arg4: memref<1x512xf32, #tpu.memory_space<vmem>>, %arg5: memref<1x1xf32, #tpu.memory_space<smem>>, %arg6: memref<8x1xf32, #tpu.memory_space<vmem>>, %arg7: memref<2x512x512xbf16, #tpu.memory_space<vmem>>, %arg8: memref<2x!tpu.dma_semaphore, #tpu.memory_space<semaphore_mem>>) attributes {dimension_semantics = [], scalar_prefetch = 0 : i64, scratch_operands = 2 : i64, tpu.core_type = #tpu.core_type<tc>} {
    %c0_i32 = arith.constant 0 : i32
    %c0_i32_0 = arith.constant 0 : i32
    %c0_i32_1 = arith.constant 0 : i32
    %c0_i32_2 = arith.constant 0 : i32
    %c0_i32_3 = arith.constant 0 : i32
    %0 = tpu.memref_slice %arg1[%c0_i32, %c0_i32_2, %c0_i32_3] : memref<4x512x512xbf16, #tpu.memory_space<any>> -> memref<1x512x512xbf16, #tpu.memory_space<any>>
    %1 = tpu.memref_squeeze %0 : memref<1x512x512xbf16, #tpu.memory_space<any>> -> memref<512x512xbf16, #tpu.memory_space<any>>
    %c0_i32_4 = arith.constant 0 : i32
    %c0_i32_5 = arith.constant 0 : i32
    %2 = tpu.memref_slice %arg7[%c0_i32_0, %c0_i32_4, %c0_i32_5] : memref<2x512x512xbf16, #tpu.memory_space<vmem>> -> memref<1x512x512xbf16, #tpu.memory_space<vmem>>
    %3 = tpu.memref_squeeze %2 : memref<1x512x512xbf16, #tpu.memory_space<vmem>> -> memref<512x512xbf16, #tpu.memory_space<vmem>>
    %4 = tpu.memref_slice %arg8[%c0_i32_1] : memref<2x!tpu.dma_semaphore, #tpu.memory_space<semaphore_mem>> -> memref<1x!tpu.dma_semaphore, #tpu.memory_space<semaphore_mem>>
    %5 = tpu.memref_squeeze %4 : memref<1x!tpu.dma_semaphore, #tpu.memory_space<semaphore_mem>> -> memref<!tpu.dma_semaphore, #tpu.memory_space<semaphore_mem>>
    tpu.enqueue_dma source(%1 : memref<512x512xbf16, #tpu.memory_space<any>>) target(%3 : memref<512x512xbf16, #tpu.memory_space<vmem>>) target_semaphore(%5 : memref<!tpu.dma_semaphore, #tpu.memory_space<semaphore_mem>>)
    %c0 = arith.constant 0 : index
    %c0_6 = arith.constant 0 : index
    %6 = vector.load %arg0[%c0, %c0_6] : memref<8x512xf32, #tpu.memory_space<vmem>>, vector<8x512xf32>
    %7 = arith.truncf %6 : vector<8x512xf32> to vector<8x512xbf16>
    %c0_i32_7 = arith.constant 0 : i32
    %c0_i32_8 = arith.constant 0 : i32
    %c0_i32_9 = arith.constant 0 : i32
    %c0_i32_10 = arith.constant 0 : i32
    %c0_i32_11 = arith.constant 0 : i32
    %8 = tpu.memref_slice %arg1[%c0_i32_7, %c0_i32_10, %c0_i32_11] : memref<4x512x512xbf16, #tpu.memory_space<any>> -> memref<1x512x512xbf16, #tpu.memory_space<any>>
    %9 = tpu.memref_squeeze %8 : memref<1x512x512xbf16, #tpu.memory_space<any>> -> memref<512x512xbf16, #tpu.memory_space<any>>
    %c0_i32_12 = arith.constant 0 : i32
    %c0_i32_13 = arith.constant 0 : i32
    %10 = tpu.memref_slice %arg7[%c0_i32_8, %c0_i32_12, %c0_i32_13] : memref<2x512x512xbf16, #tpu.memory_space<vmem>> -> memref<1x512x512xbf16, #tpu.memory_space<vmem>>
    %11 = tpu.memref_squeeze %10 : memref<1x512x512xbf16, #tpu.memory_space<vmem>> -> memref<512x512xbf16, #tpu.memory_space<vmem>>
    %12 = tpu.memref_slice %arg8[%c0_i32_9] : memref<2x!tpu.dma_semaphore, #tpu.memory_space<semaphore_mem>> -> memref<1x!tpu.dma_semaphore, #tpu.memory_space<semaphore_mem>>
    %13 = tpu.memref_squeeze %12 : memref<1x!tpu.dma_semaphore, #tpu.memory_space<semaphore_mem>> -> memref<!tpu.dma_semaphore, #tpu.memory_space<semaphore_mem>>
    tpu.wait_dma2 semaphore(%13 : memref<!tpu.dma_semaphore, #tpu.memory_space<semaphore_mem>>) src(%9 : memref<512x512xbf16, #tpu.memory_space<any>>) dst(%11 : memref<512x512xbf16, #tpu.memory_space<vmem>>)
    %c1_i32 = arith.constant 1 : i32
    %c1_i32_14 = arith.constant 1 : i32
    %c1_i32_15 = arith.constant 1 : i32
    %c0_i32_16 = arith.constant 0 : i32
    %c0_i32_17 = arith.constant 0 : i32
    %14 = tpu.memref_slice %arg1[%c1_i32, %c0_i32_16, %c0_i32_17] : memref<4x512x512xbf16, #tpu.memory_space<any>> -> memref<1x512x512xbf16, #tpu.memory_space<any>>
    %15 = tpu.memref_squeeze %14 : memref<1x512x512xbf16, #tpu.memory_space<any>> -> memref<512x512xbf16, #tpu.memory_space<any>>
    %c0_i32_18 = arith.constant 0 : i32
    %c0_i32_19 = arith.constant 0 : i32
    %16 = tpu.memref_slice %arg7[%c1_i32_14, %c0_i32_18, %c0_i32_19] : memref<2x512x512xbf16, #tpu.memory_space<vmem>> -> memref<1x512x512xbf16, #tpu.memory_space<vmem>>
    %17 = tpu.memref_squeeze %16 : memref<1x512x512xbf16, #tpu.memory_space<vmem>> -> memref<512x512xbf16, #tpu.memory_space<vmem>>
    %18 = tpu.memref_slice %arg8[%c1_i32_15] : memref<2x!tpu.dma_semaphore, #tpu.memory_space<semaphore_mem>> -> memref<1x!tpu.dma_semaphore, #tpu.memory_space<semaphore_mem>>
    %19 = tpu.memref_squeeze %18 : memref<1x!tpu.dma_semaphore, #tpu.memory_space<semaphore_mem>> -> memref<!tpu.dma_semaphore, #tpu.memory_space<semaphore_mem>>
    tpu.enqueue_dma source(%15 : memref<512x512xbf16, #tpu.memory_space<any>>) target(%17 : memref<512x512xbf16, #tpu.memory_space<vmem>>) target_semaphore(%19 : memref<!tpu.dma_semaphore, #tpu.memory_space<semaphore_mem>>)
    %c0_20 = arith.constant 0 : index
    %c0_21 = arith.constant 0 : index
    %c0_22 = arith.constant 0 : index
    %20 = vector.load %arg7[%c0_20, %c0_21, %c0_22] : memref<2x512x512xbf16, #tpu.memory_space<vmem>>, vector<1x512x512xbf16>
    %21 = vector.shape_cast %20 : vector<1x512x512xbf16> to vector<512x512xbf16>
    %cst = arith.constant dense<0.000000e+00> : vector<8x512xf32>
    %22 = tpu.matmul %7, %21, %cst {dimension_numbers = #tpu.dot_dimension_numbers<[1], [0], [0], [1], [0, 0, 1, 1], [], []>} : vector<8x512xbf16>, vector<512x512xbf16>, vector<8x512xf32> -> vector<8x512xf32>
    %cst_23 = arith.constant dense<0.000000e+00> : vector<512xf32>
    %23 = vector.multi_reduction <add>, %22, %cst_23 [0] : vector<8x512xf32> to vector<512xf32>
    %24 = vector.shape_cast %23 : vector<512xf32> to vector<1x512xf32>
    %25 = arith.mulf %22, %22 : vector<8x512xf32>
    %cst_24 = arith.constant dense<0.000000e+00> : vector<512xf32>
    %26 = vector.multi_reduction <add>, %25, %cst_24 [0] : vector<8x512xf32> to vector<512xf32>
    %27 = vector.shape_cast %26 : vector<512xf32> to vector<1x512xf32>
    %cst_25 = arith.constant 1.250000e-01 : f32
    %28 = vector.broadcast %cst_25 : f32 to vector<1x512xf32>
    %29 = arith.mulf %24, %28 : vector<1x512xf32>
    %cst_26 = arith.constant 1.250000e-01 : f32
    %30 = vector.broadcast %cst_26 : f32 to vector<1x512xf32>
    %31 = arith.mulf %27, %30 : vector<1x512xf32>
    %32 = arith.mulf %29, %29 : vector<1x512xf32>
    %33 = arith.subf %31, %32 : vector<1x512xf32>
    %cst_27 = arith.constant 0.000000e+00 : f32
    %34 = vector.broadcast %cst_27 : f32 to vector<1x512xf32>
    %35 = arith.maximumf %33, %34 : vector<1x512xf32>
    %c0_28 = arith.constant 0 : index
    %c0_29 = arith.constant 0 : index
    %c0_30 = arith.constant 0 : index
    %36 = vector.load %arg2[%c0_28, %c0_29, %c0_30] : memref<4x1x512xf32, #tpu.memory_space<vmem>>, vector<1x1x512xf32>
    %37 = vector.shape_cast %36 : vector<1x1x512xf32> to vector<1x512xf32>
    %cst_31 = arith.constant 9.99999974E-6 : f32
    %38 = vector.broadcast %cst_31 : f32 to vector<1x512xf32>
    %39 = arith.addf %35, %38 : vector<1x512xf32>
    %40 = math.rsqrt %39 : vector<1x512xf32>
    %41 = arith.mulf %37, %40 : vector<1x512xf32>
    %c0_32 = arith.constant 0 : index
    %c0_33 = arith.constant 0 : index
    %c0_34 = arith.constant 0 : index
    %42 = vector.load %arg3[%c0_32, %c0_33, %c0_34] : memref<4x1x512xf32, #tpu.memory_space<vmem>>, vector<1x1x512xf32>
    %43 = vector.shape_cast %42 : vector<1x1x512xf32> to vector<1x512xf32>
    %44 = arith.mulf %29, %41 : vector<1x512xf32>
    %45 = arith.subf %43, %44 : vector<1x512xf32>
    %46 = vector.broadcast %41 : vector<1x512xf32> to vector<8x512xf32>
    %47 = arith.mulf %22, %46 : vector<8x512xf32>
    %48 = vector.broadcast %45 : vector<1x512xf32> to vector<8x512xf32>
    %49 = arith.addf %47, %48 : vector<8x512xf32>
    %cst_35 = arith.constant 0.000000e+00 : f32
    %50 = vector.broadcast %cst_35 : f32 to vector<8x512xf32>
    %51 = arith.maximumf %49, %50 : vector<8x512xf32>
    %52 = arith.truncf %51 : vector<8x512xf32> to vector<8x512xbf16>
    %c1_i32_36 = arith.constant 1 : i32
    %c1_i32_37 = arith.constant 1 : i32
    %c1_i32_38 = arith.constant 1 : i32
    %c0_i32_39 = arith.constant 0 : i32
    %c0_i32_40 = arith.constant 0 : i32
    %53 = tpu.memref_slice %arg1[%c1_i32_36, %c0_i32_39, %c0_i32_40] : memref<4x512x512xbf16, #tpu.memory_space<any>> -> memref<1x512x512xbf16, #tpu.memory_space<any>>
    %54 = tpu.memref_squeeze %53 : memref<1x512x512xbf16, #tpu.memory_space<any>> -> memref<512x512xbf16, #tpu.memory_space<any>>
    %c0_i32_41 = arith.constant 0 : i32
    %c0_i32_42 = arith.constant 0 : i32
    %55 = tpu.memref_slice %arg7[%c1_i32_37, %c0_i32_41, %c0_i32_42] : memref<2x512x512xbf16, #tpu.memory_space<vmem>> -> memref<1x512x512xbf16, #tpu.memory_space<vmem>>
    %56 = tpu.memref_squeeze %55 : memref<1x512x512xbf16, #tpu.memory_space<vmem>> -> memref<512x512xbf16, #tpu.memory_space<vmem>>
    %57 = tpu.memref_slice %arg8[%c1_i32_38] : memref<2x!tpu.dma_semaphore, #tpu.memory_space<semaphore_mem>> -> memref<1x!tpu.dma_semaphore, #tpu.memory_space<semaphore_mem>>
    %58 = tpu.memref_squeeze %57 : memref<1x!tpu.dma_semaphore, #tpu.memory_space<semaphore_mem>> -> memref<!tpu.dma_semaphore, #tpu.memory_space<semaphore_mem>>
    tpu.wait_dma2 semaphore(%58 : memref<!tpu.dma_semaphore, #tpu.memory_space<semaphore_mem>>) src(%54 : memref<512x512xbf16, #tpu.memory_space<any>>) dst(%56 : memref<512x512xbf16, #tpu.memory_space<vmem>>)
    %c2_i32 = arith.constant 2 : i32
    %c0_i32_43 = arith.constant 0 : i32
    %c0_i32_44 = arith.constant 0 : i32
    %c0_i32_45 = arith.constant 0 : i32
    %c0_i32_46 = arith.constant 0 : i32
    %59 = tpu.memref_slice %arg1[%c2_i32, %c0_i32_45, %c0_i32_46] : memref<4x512x512xbf16, #tpu.memory_space<any>> -> memref<1x512x512xbf16, #tpu.memory_space<any>>
    %60 = tpu.memref_squeeze %59 : memref<1x512x512xbf16, #tpu.memory_space<any>> -> memref<512x512xbf16, #tpu.memory_space<any>>
    %c0_i32_47 = arith.constant 0 : i32
    %c0_i32_48 = arith.constant 0 : i32
    %61 = tpu.memref_slice %arg7[%c0_i32_43, %c0_i32_47, %c0_i32_48] : memref<2x512x512xbf16, #tpu.memory_space<vmem>> -> memref<1x512x512xbf16, #tpu.memory_space<vmem>>
    %62 = tpu.memref_squeeze %61 : memref<1x512x512xbf16, #tpu.memory_space<vmem>> -> memref<512x512xbf16, #tpu.memory_space<vmem>>
    %63 = tpu.memref_slice %arg8[%c0_i32_44] : memref<2x!tpu.dma_semaphore, #tpu.memory_space<semaphore_mem>> -> memref<1x!tpu.dma_semaphore, #tpu.memory_space<semaphore_mem>>
    %64 = tpu.memref_squeeze %63 : memref<1x!tpu.dma_semaphore, #tpu.memory_space<semaphore_mem>> -> memref<!tpu.dma_semaphore, #tpu.memory_space<semaphore_mem>>
    tpu.enqueue_dma source(%60 : memref<512x512xbf16, #tpu.memory_space<any>>) target(%62 : memref<512x512xbf16, #tpu.memory_space<vmem>>) target_semaphore(%64 : memref<!tpu.dma_semaphore, #tpu.memory_space<semaphore_mem>>)
    %c1 = arith.constant 1 : index
    %c0_49 = arith.constant 0 : index
    %c0_50 = arith.constant 0 : index
    %65 = vector.load %arg7[%c1, %c0_49, %c0_50] : memref<2x512x512xbf16, #tpu.memory_space<vmem>>, vector<1x512x512xbf16>
    %66 = vector.shape_cast %65 : vector<1x512x512xbf16> to vector<512x512xbf16>
    %cst_51 = arith.constant dense<0.000000e+00> : vector<8x512xf32>
    %67 = tpu.matmul %52, %66, %cst_51 {dimension_numbers = #tpu.dot_dimension_numbers<[1], [0], [0], [1], [0, 0, 1, 1], [], []>} : vector<8x512xbf16>, vector<512x512xbf16>, vector<8x512xf32> -> vector<8x512xf32>
    %cst_52 = arith.constant dense<0.000000e+00> : vector<512xf32>
    %68 = vector.multi_reduction <add>, %67, %cst_52 [0] : vector<8x512xf32> to vector<512xf32>
    %69 = vector.shape_cast %68 : vector<512xf32> to vector<1x512xf32>
    %70 = arith.mulf %67, %67 : vector<8x512xf32>
    %cst_53 = arith.constant dense<0.000000e+00> : vector<512xf32>
    %71 = vector.multi_reduction <add>, %70, %cst_53 [0] : vector<8x512xf32> to vector<512xf32>
    %72 = vector.shape_cast %71 : vector<512xf32> to vector<1x512xf32>
    %cst_54 = arith.constant 1.250000e-01 : f32
    %73 = vector.broadcast %cst_54 : f32 to vector<1x512xf32>
    %74 = arith.mulf %69, %73 : vector<1x512xf32>
    %cst_55 = arith.constant 1.250000e-01 : f32
    %75 = vector.broadcast %cst_55 : f32 to vector<1x512xf32>
    %76 = arith.mulf %72, %75 : vector<1x512xf32>
    %77 = arith.mulf %74, %74 : vector<1x512xf32>
    %78 = arith.subf %76, %77 : vector<1x512xf32>
    %cst_56 = arith.constant 0.000000e+00 : f32
    %79 = vector.broadcast %cst_56 : f32 to vector<1x512xf32>
    %80 = arith.maximumf %78, %79 : vector<1x512xf32>
    %c1_57 = arith.constant 1 : index
    %c0_58 = arith.constant 0 : index
    %c0_59 = arith.constant 0 : index
    %81 = vector.load %arg2[%c1_57, %c0_58, %c0_59] : memref<4x1x512xf32, #tpu.memory_space<vmem>>, vector<1x1x512xf32>
    %82 = vector.shape_cast %81 : vector<1x1x512xf32> to vector<1x512xf32>
    %cst_60 = arith.constant 9.99999974E-6 : f32
    %83 = vector.broadcast %cst_60 : f32 to vector<1x512xf32>
    %84 = arith.addf %80, %83 : vector<1x512xf32>
    %85 = math.rsqrt %84 : vector<1x512xf32>
    %86 = arith.mulf %82, %85 : vector<1x512xf32>
    %c1_61 = arith.constant 1 : index
    %c0_62 = arith.constant 0 : index
    %c0_63 = arith.constant 0 : index
    %87 = vector.load %arg3[%c1_61, %c0_62, %c0_63] : memref<4x1x512xf32, #tpu.memory_space<vmem>>, vector<1x1x512xf32>
    %88 = vector.shape_cast %87 : vector<1x1x512xf32> to vector<1x512xf32>
    %89 = arith.mulf %74, %86 : vector<1x512xf32>
    %90 = arith.subf %88, %89 : vector<1x512xf32>
    %91 = vector.broadcast %86 : vector<1x512xf32> to vector<8x512xf32>
    %92 = arith.mulf %67, %91 : vector<8x512xf32>
    %93 = vector.broadcast %90 : vector<1x512xf32> to vector<8x512xf32>
    %94 = arith.addf %92, %93 : vector<8x512xf32>
    %cst_64 = arith.constant 0.000000e+00 : f32
    %95 = vector.broadcast %cst_64 : f32 to vector<8x512xf32>
    %96 = arith.maximumf %94, %95 : vector<8x512xf32>
    %97 = arith.truncf %96 : vector<8x512xf32> to vector<8x512xbf16>
    %c2_i32_65 = arith.constant 2 : i32
    %c0_i32_66 = arith.constant 0 : i32
    %c0_i32_67 = arith.constant 0 : i32
    %c0_i32_68 = arith.constant 0 : i32
    %c0_i32_69 = arith.constant 0 : i32
    %98 = tpu.memref_slice %arg1[%c2_i32_65, %c0_i32_68, %c0_i32_69] : memref<4x512x512xbf16, #tpu.memory_space<any>> -> memref<1x512x512xbf16, #tpu.memory_space<any>>
    %99 = tpu.memref_squeeze %98 : memref<1x512x512xbf16, #tpu.memory_space<any>> -> memref<512x512xbf16, #tpu.memory_space<any>>
    %c0_i32_70 = arith.constant 0 : i32
    %c0_i32_71 = arith.constant 0 : i32
    %100 = tpu.memref_slice %arg7[%c0_i32_66, %c0_i32_70, %c0_i32_71] : memref<2x512x512xbf16, #tpu.memory_space<vmem>> -> memref<1x512x512xbf16, #tpu.memory_space<vmem>>
    %101 = tpu.memref_squeeze %100 : memref<1x512x512xbf16, #tpu.memory_space<vmem>> -> memref<512x512xbf16, #tpu.memory_space<vmem>>
    %102 = tpu.memref_slice %arg8[%c0_i32_67] : memref<2x!tpu.dma_semaphore, #tpu.memory_space<semaphore_mem>> -> memref<1x!tpu.dma_semaphore, #tpu.memory_space<semaphore_mem>>
    %103 = tpu.memref_squeeze %102 : memref<1x!tpu.dma_semaphore, #tpu.memory_space<semaphore_mem>> -> memref<!tpu.dma_semaphore, #tpu.memory_space<semaphore_mem>>
    tpu.wait_dma2 semaphore(%103 : memref<!tpu.dma_semaphore, #tpu.memory_space<semaphore_mem>>) src(%99 : memref<512x512xbf16, #tpu.memory_space<any>>) dst(%101 : memref<512x512xbf16, #tpu.memory_space<vmem>>)
    %c3_i32 = arith.constant 3 : i32
    %c1_i32_72 = arith.constant 1 : i32
    %c1_i32_73 = arith.constant 1 : i32
    %c0_i32_74 = arith.constant 0 : i32
    %c0_i32_75 = arith.constant 0 : i32
    %104 = tpu.memref_slice %arg1[%c3_i32, %c0_i32_74, %c0_i32_75] : memref<4x512x512xbf16, #tpu.memory_space<any>> -> memref<1x512x512xbf16, #tpu.memory_space<any>>
    %105 = tpu.memref_squeeze %104 : memref<1x512x512xbf16, #tpu.memory_space<any>> -> memref<512x512xbf16, #tpu.memory_space<any>>
    %c0_i32_76 = arith.constant 0 : i32
    %c0_i32_77 = arith.constant 0 : i32
    %106 = tpu.memref_slice %arg7[%c1_i32_72, %c0_i32_76, %c0_i32_77] : memref<2x512x512xbf16, #tpu.memory_space<vmem>> -> memref<1x512x512xbf16, #tpu.memory_space<vmem>>
    %107 = tpu.memref_squeeze %106 : memref<1x512x512xbf16, #tpu.memory_space<vmem>> -> memref<512x512xbf16, #tpu.memory_space<vmem>>
    %108 = tpu.memref_slice %arg8[%c1_i32_73] : memref<2x!tpu.dma_semaphore, #tpu.memory_space<semaphore_mem>> -> memref<1x!tpu.dma_semaphore, #tpu.memory_space<semaphore_mem>>
    %109 = tpu.memref_squeeze %108 : memref<1x!tpu.dma_semaphore, #tpu.memory_space<semaphore_mem>> -> memref<!tpu.dma_semaphore, #tpu.memory_space<semaphore_mem>>
    tpu.enqueue_dma source(%105 : memref<512x512xbf16, #tpu.memory_space<any>>) target(%107 : memref<512x512xbf16, #tpu.memory_space<vmem>>) target_semaphore(%109 : memref<!tpu.dma_semaphore, #tpu.memory_space<semaphore_mem>>)
    %c0_78 = arith.constant 0 : index
    %c0_79 = arith.constant 0 : index
    %c0_80 = arith.constant 0 : index
    %110 = vector.load %arg7[%c0_78, %c0_79, %c0_80] : memref<2x512x512xbf16, #tpu.memory_space<vmem>>, vector<1x512x512xbf16>
    %111 = vector.shape_cast %110 : vector<1x512x512xbf16> to vector<512x512xbf16>
    %cst_81 = arith.constant dense<0.000000e+00> : vector<8x512xf32>
    %112 = tpu.matmul %97, %111, %cst_81 {dimension_numbers = #tpu.dot_dimension_numbers<[1], [0], [0], [1], [0, 0, 1, 1], [], []>} : vector<8x512xbf16>, vector<512x512xbf16>, vector<8x512xf32> -> vector<8x512xf32>
    %cst_82 = arith.constant dense<0.000000e+00> : vector<512xf32>
    %113 = vector.multi_reduction <add>, %112, %cst_82 [0] : vector<8x512xf32> to vector<512xf32>
    %114 = vector.shape_cast %113 : vector<512xf32> to vector<1x512xf32>
    %115 = arith.mulf %112, %112 : vector<8x512xf32>
    %cst_83 = arith.constant dense<0.000000e+00> : vector<512xf32>
    %116 = vector.multi_reduction <add>, %115, %cst_83 [0] : vector<8x512xf32> to vector<512xf32>
    %117 = vector.shape_cast %116 : vector<512xf32> to vector<1x512xf32>
    %cst_84 = arith.constant 1.250000e-01 : f32
    %118 = vector.broadcast %cst_84 : f32 to vector<1x512xf32>
    %119 = arith.mulf %114, %118 : vector<1x512xf32>
    %cst_85 = arith.constant 1.250000e-01 : f32
    %120 = vector.broadcast %cst_85 : f32 to vector<1x512xf32>
    %121 = arith.mulf %117, %120 : vector<1x512xf32>
    %122 = arith.mulf %119, %119 : vector<1x512xf32>
    %123 = arith.subf %121, %122 : vector<1x512xf32>
    %cst_86 = arith.constant 0.000000e+00 : f32
    %124 = vector.broadcast %cst_86 : f32 to vector<1x512xf32>
    %125 = arith.maximumf %123, %124 : vector<1x512xf32>
    %c2 = arith.constant 2 : index
    %c0_87 = arith.constant 0 : index
    %c0_88 = arith.constant 0 : index
    %126 = vector.load %arg2[%c2, %c0_87, %c0_88] : memref<4x1x512xf32, #tpu.memory_space<vmem>>, vector<1x1x512xf32>
    %127 = vector.shape_cast %126 : vector<1x1x512xf32> to vector<1x512xf32>
    %cst_89 = arith.constant 9.99999974E-6 : f32
    %128 = vector.broadcast %cst_89 : f32 to vector<1x512xf32>
    %129 = arith.addf %125, %128 : vector<1x512xf32>
    %130 = math.rsqrt %129 : vector<1x512xf32>
    %131 = arith.mulf %127, %130 : vector<1x512xf32>
    %c2_90 = arith.constant 2 : index
    %c0_91 = arith.constant 0 : index
    %c0_92 = arith.constant 0 : index
    %132 = vector.load %arg3[%c2_90, %c0_91, %c0_92] : memref<4x1x512xf32, #tpu.memory_space<vmem>>, vector<1x1x512xf32>
    %133 = vector.shape_cast %132 : vector<1x1x512xf32> to vector<1x512xf32>
    %134 = arith.mulf %119, %131 : vector<1x512xf32>
    %135 = arith.subf %133, %134 : vector<1x512xf32>
    %136 = vector.broadcast %131 : vector<1x512xf32> to vector<8x512xf32>
    %137 = arith.mulf %112, %136 : vector<8x512xf32>
    %138 = vector.broadcast %135 : vector<1x512xf32> to vector<8x512xf32>
    %139 = arith.addf %137, %138 : vector<8x512xf32>
    %cst_93 = arith.constant 0.000000e+00 : f32
    %140 = vector.broadcast %cst_93 : f32 to vector<8x512xf32>
    %141 = arith.maximumf %139, %140 : vector<8x512xf32>
    %142 = arith.truncf %141 : vector<8x512xf32> to vector<8x512xbf16>
    %c3_i32_94 = arith.constant 3 : i32
    %c1_i32_95 = arith.constant 1 : i32
    %c1_i32_96 = arith.constant 1 : i32
    %c0_i32_97 = arith.constant 0 : i32
    %c0_i32_98 = arith.constant 0 : i32
    %143 = tpu.memref_slice %arg1[%c3_i32_94, %c0_i32_97, %c0_i32_98] : memref<4x512x512xbf16, #tpu.memory_space<any>> -> memref<1x512x512xbf16, #tpu.memory_space<any>>
    %144 = tpu.memref_squeeze %143 : memref<1x512x512xbf16, #tpu.memory_space<any>> -> memref<512x512xbf16, #tpu.memory_space<any>>
    %c0_i32_99 = arith.constant 0 : i32
    %c0_i32_100 = arith.constant 0 : i32
    %145 = tpu.memref_slice %arg7[%c1_i32_95, %c0_i32_99, %c0_i32_100] : memref<2x512x512xbf16, #tpu.memory_space<vmem>> -> memref<1x512x512xbf16, #tpu.memory_space<vmem>>
    %146 = tpu.memref_squeeze %145 : memref<1x512x512xbf16, #tpu.memory_space<vmem>> -> memref<512x512xbf16, #tpu.memory_space<vmem>>
    %147 = tpu.memref_slice %arg8[%c1_i32_96] : memref<2x!tpu.dma_semaphore, #tpu.memory_space<semaphore_mem>> -> memref<1x!tpu.dma_semaphore, #tpu.memory_space<semaphore_mem>>
    %148 = tpu.memref_squeeze %147 : memref<1x!tpu.dma_semaphore, #tpu.memory_space<semaphore_mem>> -> memref<!tpu.dma_semaphore, #tpu.memory_space<semaphore_mem>>
    tpu.wait_dma2 semaphore(%148 : memref<!tpu.dma_semaphore, #tpu.memory_space<semaphore_mem>>) src(%144 : memref<512x512xbf16, #tpu.memory_space<any>>) dst(%146 : memref<512x512xbf16, #tpu.memory_space<vmem>>)
    %c1_101 = arith.constant 1 : index
    %c0_102 = arith.constant 0 : index
    %c0_103 = arith.constant 0 : index
    %149 = vector.load %arg7[%c1_101, %c0_102, %c0_103] : memref<2x512x512xbf16, #tpu.memory_space<vmem>>, vector<1x512x512xbf16>
    %150 = vector.shape_cast %149 : vector<1x512x512xbf16> to vector<512x512xbf16>
    %cst_104 = arith.constant dense<0.000000e+00> : vector<8x512xf32>
    %151 = tpu.matmul %142, %150, %cst_104 {dimension_numbers = #tpu.dot_dimension_numbers<[1], [0], [0], [1], [0, 0, 1, 1], [], []>} : vector<8x512xbf16>, vector<512x512xbf16>, vector<8x512xf32> -> vector<8x512xf32>
    %cst_105 = arith.constant dense<0.000000e+00> : vector<512xf32>
    %152 = vector.multi_reduction <add>, %151, %cst_105 [0] : vector<8x512xf32> to vector<512xf32>
    %153 = vector.shape_cast %152 : vector<512xf32> to vector<1x512xf32>
    %154 = arith.mulf %151, %151 : vector<8x512xf32>
    %cst_106 = arith.constant dense<0.000000e+00> : vector<512xf32>
    %155 = vector.multi_reduction <add>, %154, %cst_106 [0] : vector<8x512xf32> to vector<512xf32>
    %156 = vector.shape_cast %155 : vector<512xf32> to vector<1x512xf32>
    %cst_107 = arith.constant 1.250000e-01 : f32
    %157 = vector.broadcast %cst_107 : f32 to vector<1x512xf32>
    %158 = arith.mulf %153, %157 : vector<1x512xf32>
    %cst_108 = arith.constant 1.250000e-01 : f32
    %159 = vector.broadcast %cst_108 : f32 to vector<1x512xf32>
    %160 = arith.mulf %156, %159 : vector<1x512xf32>
    %161 = arith.mulf %158, %158 : vector<1x512xf32>
    %162 = arith.subf %160, %161 : vector<1x512xf32>
    %cst_109 = arith.constant 0.000000e+00 : f32
    %163 = vector.broadcast %cst_109 : f32 to vector<1x512xf32>
    %164 = arith.maximumf %162, %163 : vector<1x512xf32>
    %c3 = arith.constant 3 : index
    %c0_110 = arith.constant 0 : index
    %c0_111 = arith.constant 0 : index
    %165 = vector.load %arg2[%c3, %c0_110, %c0_111] : memref<4x1x512xf32, #tpu.memory_space<vmem>>, vector<1x1x512xf32>
    %166 = vector.shape_cast %165 : vector<1x1x512xf32> to vector<1x512xf32>
    %cst_112 = arith.constant 9.99999974E-6 : f32
    %167 = vector.broadcast %cst_112 : f32 to vector<1x512xf32>
    %168 = arith.addf %164, %167 : vector<1x512xf32>
    %169 = math.rsqrt %168 : vector<1x512xf32>
    %170 = arith.mulf %166, %169 : vector<1x512xf32>
    %c3_113 = arith.constant 3 : index
    %c0_114 = arith.constant 0 : index
    %c0_115 = arith.constant 0 : index
    %171 = vector.load %arg3[%c3_113, %c0_114, %c0_115] : memref<4x1x512xf32, #tpu.memory_space<vmem>>, vector<1x1x512xf32>
    %172 = vector.shape_cast %171 : vector<1x1x512xf32> to vector<1x512xf32>
    %173 = arith.mulf %158, %170 : vector<1x512xf32>
    %174 = arith.subf %172, %173 : vector<1x512xf32>
    %175 = vector.broadcast %170 : vector<1x512xf32> to vector<8x512xf32>
    %176 = arith.mulf %151, %175 : vector<8x512xf32>
    %177 = vector.broadcast %174 : vector<1x512xf32> to vector<8x512xf32>
    %178 = arith.addf %176, %177 : vector<8x512xf32>
    %cst_116 = arith.constant 0.000000e+00 : f32
    %179 = vector.broadcast %cst_116 : f32 to vector<8x512xf32>
    %180 = arith.maximumf %178, %179 : vector<8x512xf32>
    %181 = arith.truncf %180 : vector<8x512xf32> to vector<8x512xbf16>
    %182 = arith.extf %181 : vector<8x512xbf16> to vector<8x512xf32>
    %c0_117 = arith.constant 0 : index
    %c0_118 = arith.constant 0 : index
    %183 = vector.load %arg4[%c0_117, %c0_118] : memref<1x512xf32, #tpu.memory_space<vmem>>, vector<1x512xf32>
    %184 = vector.broadcast %183 : vector<1x512xf32> to vector<8x512xf32>
    %185 = arith.mulf %182, %184 : vector<8x512xf32>
    %cst_119 = arith.constant dense<0.000000e+00> : vector<8xf32>
    %186 = vector.multi_reduction <add>, %185, %cst_119 [1] : vector<8x512xf32> to vector<8xf32>
    %187 = vector.shape_cast %186 : vector<8xf32> to vector<8x1xf32>
    %c0_120 = arith.constant 0 : index
    %c0_121 = arith.constant 0 : index
    %188 = memref.load %arg5[%c0_120, %c0_121] : memref<1x1xf32, #tpu.memory_space<smem>>
    %189 = vector.broadcast %188 : f32 to vector<8x1xf32>
    %190 = arith.addf %187, %189 : vector<8x1xf32>
    %c0_122 = arith.constant 0 : index
    %c0_123 = arith.constant 0 : index
    %191 = vector.load %arg6[%c0_122, %c0_123] : memref<8x1xf32, #tpu.memory_space<vmem>>, vector<8x1xf32>
    tpu.vector_store %arg6[%c0_122, %c0_123], %190 {strides = array<i32>} : memref<8x1xf32, #tpu.memory_space<vmem>>, vector<8x1xf32>,
    return
  }
}

</mosaic_0001>

<llo_original>
// kernel: tpu_custom_call.1
$region0: #{tpu_custom_call.1}
  #allocation0 [shape = 'u32[]', space=smem, size = 0x4, offset = 0x4, fixed_abs, tag = 'smem constant byte address 0x4 - core index']
  #allocation1 [shape = 'u32[72,128]{1,0:T(1,128)}', space=vmem, size = 0x9000, scoped, tag = 'internal scratch']
  #allocation2 [shape = 'bf16[2,512,512]{2,1,0:T(8,128)(2,1)}', space=vmem, size = 0x100000, scoped, tag = 'scratch operand']
  #allocation3 [shape = 's32[2]{0}', space=sflag, size = 0x8, scoped, tag = 'scratch operand']
  #allocation4 [shape = 'f32[1,1]{1,0:T(1,128)S(6)}', space=smem, size = 0x200, scoped, tag = 'scoped memory for tpu_custom_call.1']
  #allocation12 [shape = 's32[]', space=sflag, size = 0x4, offset = 0, fixed_abs, tag = 'sflag constant byte address 0x0 - dummy sync flag']
  #allocation13 [shape = 's32[]', space=sflag, size = 0x4, offset = 0, fixed_abs, tag = 'sflag constant byte address 0x0 - dummy sync flag']
  #allocation14 [shape = 'u32[]', space=smem, size = 0x4, offset = 0x44, fixed_abs, tag = 'smem constant byte address 0x44 - assertion arg 0']
  #allocation15 [shape = 'u32[]', space=smem, size = 0x4, offset = 0x48, fixed_abs, tag = 'smem constant byte address 0x48 - assertion arg 1']
  #allocation16 [shape = 's32[]', space=sflag, size = 0x4, offset = 0, fixed_abs, tag = 'sflag constant byte address 0x0 - dummy sync flag']
  #allocation17 [shape = 's32[]', space=sflag, size = 0x4, offset = 0, fixed_abs, tag = 'sflag constant byte address 0x0 - dummy sync flag']
  #allocation18 [shape = 's32[]', space=sflag, size = 0x4, offset = 0, fixed_abs, tag = 'sflag constant byte address 0x0 - dummy sync flag']
  #allocation19 [shape = 's32[]', space=sflag, size = 0x4, offset = 0, fixed_abs, tag = 'sflag constant byte address 0x0 - dummy sync flag']
  #allocation20 [shape = 's32[]', space=sflag, size = 0x4, offset = 0, fixed_abs, tag = 'sflag constant byte address 0x0 - dummy sync flag']
  #allocation21 [shape = 's32[]', space=sflag, size = 0x4, offset = 0, fixed_abs, tag = 'sflag constant byte address 0x0 - dummy sync flag']
  %s0 = inlined_call_operand.hbm [shape: f32[8,512], index: 0, kind: input, shape index: {}]
  %s1 = inlined_call_operand.hbm [shape: bf16[4,512,512], index: 1, kind: input, shape index: {}]
  %s2 = inlined_call_operand.hbm [shape: f32[4,1,512], index: 2, kind: input, shape index: {}]
  %s3 = inlined_call_operand.hbm [shape: f32[4,1,512], index: 3, kind: input, shape index: {}]
  %s4 = inlined_call_operand.hbm [shape: f32[1,512], index: 4, kind: input, shape index: {}]
  %s5 = inlined_call_operand.<no memory space> [shape: f32[1,1], index: 5, kind: input, shape index: {}]
  %s6 = inlined_call_operand.vmem [shape: f32[8,1], index: 6, kind: output, shape index: {}]
  %s7 = sld [smem:[#allocation0]]
  $region62: #{tpu_custom_call.1} parent=0
    _
  %s9 = ssub.s32 1, %s7
  %s10 = scalar_select 0, %s9, %s7
  %11 = sst [smem:[#allocation4]] %s5
  $region1: #{tpu_custom_call.1} parent=0
    #allocation5 [shape = 'u8[16384]{0}', space=vmem, size = 0x4000, scoped, tag = 'input window, operand 0, single buffered']
    #allocation6 [shape = 's32[1]{0}', space=sflag, size = 0x4, scoped, tag = 'scoped memory for tpu_custom_call.1']
    #allocation7 [shape = 'u8[8192]{0}', space=vmem, size = 0x2000, scoped, tag = 'input window, operand 2, single buffered']
    #allocation8 [shape = 's32[1]{0}', space=sflag, size = 0x4, scoped, tag = 'scoped memory for tpu_custom_call.1']
    #allocation9 [shape = 'u8[8192]{0}', space=vmem, size = 0x2000, scoped, tag = 'input window, operand 3, single buffered']
    #allocation10 [shape = 'u8[2048]{0}', space=vmem, size = 0x800, scoped, tag = 'input window, operand 4, single buffered']
    #allocation11 [shape = 's32[1]{0}', space=sflag, size = 0x4, scoped, tag = 'scoped memory for tpu_custom_call.1']
    %12 = vsyncpa [#allocation6], 0
    %13 = vsyncpa [#allocation8], 0
    %14 = vsyncpa [#allocation11], 0
    // Predicated region
    $region2: #{tpu_custom_call.1} parent=1 // pred_check
      _
    $region3: #{tpu_custom_call.1} parent=1 // pred_check_branch
      %16 = sbr.rel (0) target = $region5
    $region4: #{tpu_custom_call.1} parent=1 // pred_region
      %18 = vsyncadd [#allocation6], 0
      %s20 = sshll.u32 %s0, 4
      %s21 = int_to_ptr.hbm [resolvable:$true] %s20
      %s22 = sshll.u32 [#allocation5], 4
      %s23 = int_to_ptr.vmem [resolvable:$true] %s22
      %25 = dma.hbm_to_vmem [thread:$0]  %s21, 512, %s23, [#allocation6]
    $region5: #{tpu_custom_call.1} parent=1 // pred_fallthru
      _
    // Predicated region
    $region6: #{tpu_custom_call.1} parent=1 // pred_check
      _
    $region7: #{tpu_custom_call.1} parent=1 // pred_check_branch
      %27 = sbr.rel (0) target = $region9
    $region8: #{tpu_custom_call.1} parent=1 // pred_region
      %29 = vsyncadd [#allocation8], 0
      %s30 = sshll.u32 %s2, 4
      %s31 = int_to_ptr.hbm [resolvable:$true] %s30
      %s32 = sshll.u32 [#allocation7], 4
      %s33 = int_to_ptr.vmem [resolvable:$true] %s32
      %38 = dma.hbm_to_vmem [thread:$0]  %s31, 256, %s33, [#allocation8], 64, 64, 4
    $region9: #{tpu_custom_call.1} parent=1 // pred_fallthru
      _
    // Predicated region
    $region10: #{tpu_custom_call.1} parent=1 // pred_check
      _
    $region11: #{tpu_custom_call.1} parent=1 // pred_check_branch
      %40 = sbr.rel (0) target = $region13
    $region12: #{tpu_custom_call.1} parent=1 // pred_region
      %42 = vsyncadd [#allocation8], 0
      %s43 = sshll.u32 %s3, 4
      %s44 = int_to_ptr.hbm [resolvable:$true] %s43
      %s45 = sshll.u32 [#allocation9], 4
      %s46 = int_to_ptr.vmem [resolvable:$true] %s45
      %51 = dma.hbm_to_vmem [thread:$0]  %s44, 256, %s46, [#allocation8], 64, 64, 4
    $region13: #{tpu_custom_call.1} parent=1 // pred_fallthru
      _
    // Predicated region
    $region14: #{tpu_custom_call.1} parent=1 // pred_check
      _
    $region15: #{tpu_custom_call.1} parent=1 // pred_check_branch
      %53 = sbr.rel (0) target = $region17
    $region16: #{tpu_custom_call.1} parent=1 // pred_region
      %55 = vsyncadd [#allocation11], 0
      %s57 = sshll.u32 %s4, 4
      %s58 = int_to_ptr.hbm [resolvable:$true] %s57
      %s59 = sshll.u32 [#allocation10], 4
      %s60 = int_to_ptr.vmem [resolvable:$true] %s59
      %62 = dma.hbm_to_vmem [thread:$0]  %s58, 64, %s60, [#allocation11]
    $region17: #{tpu_custom_call.1} parent=1 // pred_fallthru
      _
    // Predicated region
    $region18: #{tpu_custom_call.1} parent=1 // pred_check
      _
    $region19: #{tpu_custom_call.1} parent=1 // pred_check_branch
      %64 = sbr.rel (0) target = $region21
    $region20: #{tpu_custom_call.1} parent=1 // pred_region
      _
    $region21: #{tpu_custom_call.1} parent=1 // pred_fallthru
      _
    // Predicated region
    $region22: #{tpu_custom_call.1} parent=1 // pred_check
      _
    $region23: #{tpu_custom_call.1} parent=1 // pred_check_branch
      %66 = sbr.rel (0) target = $region25
    $region24: #{tpu_custom_call.1} parent=1 // pred_region
      %68 = dma.done [#allocation6], 512
    $region25: #{tpu_custom_call.1} parent=1 // pred_fallthru
      _
    // Predicated region
    $region26: #{tpu_custom_call.1} parent=1 // pred_check
      _
    $region27: #{tpu_custom_call.1} parent=1 // pred_check_branch
      %70 = sbr.rel (0) target = $region29
    $region28: #{tpu_custom_call.1} parent=1 // pred_region
      %72 = dma.done [#allocation8], 256
    $region29: #{tpu_custom_call.1} parent=1 // pred_fallthru
      _
    // Predicated region
    $region30: #{tpu_custom_call.1} parent=1 // pred_check
      _
    $region31: #{tpu_custom_call.1} parent=1 // pred_check_branch
      %74 = sbr.rel (0) target = $region33
    $region32: #{tpu_custom_call.1} parent=1 // pred_region
      %76 = dma.done [#allocation8], 256
    $region33: #{tpu_custom_call.1} parent=1 // pred_fallthru
      _
    // Predicated region
    $region34: #{tpu_custom_call.1} parent=1 // pred_check
      _
    $region35: #{tpu_custom_call.1} parent=1 // pred_check_branch
      %78 = sbr.rel (0) target = $region37
    $region36: #{tpu_custom_call.1} parent=1 // pred_region
      %80 = dma.done [#allocation11], 64
    $region37: #{tpu_custom_call.1} parent=1 // pred_fallthru
      _
    // Predicated region
    $region38: #{tpu_custom_call.1} parent=1 // pred_check
      _
    $region39: #{tpu_custom_call.1} parent=1 // pred_check_branch
      %82 = sbr.rel target = $region41
    $region40: #{tpu_custom_call.1} parent=1 // pred_region
      %83 = sst [smem:[#allocation14]] [#allocation13]
      %84 = sst [smem:[#allocation15]] [#allocation12]
    $region41: #{tpu_custom_call.1} parent=1 // pred_fallthru
      _
    %86 = shalt.err (0)
    %s88 = sshll.u32 %s1, 4
    %s89 = int_to_ptr.hbm [resolvable:$true] %s88
    %s90 = sshll.u32 [#allocation2], 4
    %s91 = int_to_ptr.vmem [resolvable:$true] %s90
    %93 = dma.hbm_to_vmem [thread:$0]  %s89, 16384, %s91, [#allocation3]
    %v94 = vld [vmem:[#allocation5] sm:$0xff]
    %v95 = vld [vmem:[#allocation5 + $0x8] sm:$0xff]
    %v96 = vld [vmem:[#allocation5 + $0x10] sm:$0xff]
    %v97 = vld [vmem:[#allocation5 + $0x18] sm:$0xff]
    %v98 = vpack.c.bf16 %v94, %v94
    %v99 = vpack.c.bf16 %v95, %v95
    %v100 = vpack.c.bf16 %v96, %v96
    %v101 = vpack.c.bf16 %v97, %v97
    %s102 = smul.u32 4, 64
    %s103 = smul.u32 %s102, 4
    %s104 = sshll.u32 %s103, 4
    %105 = dma.done [#allocation3], %s104
    %s106 = scalar_lea.hbm %s1, 1024
    %s107 = scalar_lea.vmem [#allocation2], 1024
    %s108 = scalar_lea.sflag [#allocation3], 1
    // Predicated region
    $region42: #{tpu_custom_call.1} parent=1 // pred_check
      _
    $region43: #{tpu_custom_call.1} parent=1 // pred_check_branch
      %110 = sbr.rel target = $region45
    $region44: #{tpu_custom_call.1} parent=1 // pred_region
      %111 = sst [smem:[#allocation14]] [#allocation17]
      %112 = sst [smem:[#allocation15]] [#allocation16]
    $region45: #{tpu_custom_call.1} parent=1 // pred_fallthru
      _
    %114 = shalt.err (0)
    %s116 = sshll.u32 %s106, 4
    %s117 = int_to_ptr.hbm [resolvable:$true] %s116
    %s118 = sshll.u32 %s107, 4
    %s119 = int_to_ptr.vmem [resolvable:$true] %s118
    %121 = dma.hbm_to_vmem [thread:$0]  %s117, 16384, %s119, %s108
    %v122 = vld [vmem:[#allocation2] sm:$0xff]
    %v123 = vld [vmem:[#allocation2 + $0x8] sm:$0xff]
    %v124 = vld [vmem:[#allocation2 + $0x10] sm:$0xff]
    %v125 = vld [vmem:[#allocation2 + $0x18] sm:$0xff]
    %v126 = vld [vmem:[#allocation2 + $0x20] sm:$0xff]
    %v127 = vld [vmem:[#allocation2 + $0x28] sm:$0xff]
    %v128 = vld [vmem:[#allocation2 + $0x30] sm:$0xff]
    %v129 = vld [vmem:[#allocation2 + $0x38] sm:$0xff]
    %v130 = vld [vmem:[#allocation2 + $0x40] sm:$0xff]
    %v131 = vld [vmem:[#allocation2 + $0x48] sm:$0xff]
    %v132 = vld [vmem:[#allocation2 + $0x50] sm:$0xff]
    %v133 = vld [vmem:[#allocation2 + $0x58] sm:$0xff]
    %v134 = vld [vmem:[#allocation2 + $0x60] sm:$0xff]
    %v135 = vld [vmem:[#allocation2 + $0x68] sm:$0xff]
    %v136 = vld [vmem:[#allocation2 + $0x70] sm:$0xff]
    %v137 = vld [vmem:[#allocation2 + $0x78] sm:$0xff]
    %v138 = vld [vmem:[#allocation2 + $0x80] sm:$0xff]
    %v139 = vld [vmem:[#allocation2 + $0x88] sm:$0xff]
    %v140 = vld [vmem:[#allocation2 + $0x90] sm:$0xff]
    %v141 = vld [vmem:[#allocation2 + $0x98] sm:$0xff]
    %v142 = vld [vmem:[#allocation2 + $0xa0] sm:$0xff]
    %v143 = vld [vmem:[#allocation2 + $0xa8] sm:$0xff]
    %v144 = vld [vmem:[#allocation2 + $0xb0] sm:$0xff]
    %v145 = vld [vmem:[#allocation2 + $0xb8] sm:$0xff]
    %v146 = vld [vmem:[#allocation2 + $0xc0] sm:$0xff]
    %v147 = vld [vmem:[#allocation2 + $0xc8] sm:$0xff]
    %v148 = vld [vmem:[#allocation2 + $0xd0] sm:$0xff]
    %v149 = vld [vmem:[#allocation2 + $0xd8] sm:$0xff]
    %v150 = vld [vmem:[#allocation2 + $0xe0] sm:$0xff]
    %v151 = vld [vmem:[#allocation2 + $0xe8] sm:$0xff]
    %v152 = vld [vmem:[#allocation2 + $0xf0] sm:$0xff]
    %v153 = vld [vmem:[#allocation2 + $0xf8] sm:$0xff]
    %v154 = vld [vmem:[#allocation2 + $0x100] sm:$0xff]
    %v155 = vld [vmem:[#allocation2 + $0x108] sm:$0xff]
    %v156 = vld [vmem:[#allocation2 + $0x110] sm:$0xff]
    %v157 = vld [vmem:[#allocation2 + $0x118] sm:$0xff]
    %v158 = vld [vmem:[#allocation2 + $0x120] sm:$0xff]
    %v159 = vld [vmem:[#allocation2 + $0x128] sm:$0xff]
    %v160 = vld [vmem:[#allocation2 + $0x130] sm:$0xff]
    %v161 = vld [vmem:[#allocation2 + $0x138] sm:$0xff]
    %v162 = vld [vmem:[#allocation2 + $0x140] sm:$0xff]
    %v163 = vld [vmem:[#allocation2 + $0x148] sm:$0xff]
    %v164 = vld [vmem:[#allocation2 + $0x150] sm:$0xff]
    %v165 = vld [vmem:[#allocation2 + $0x158] sm:$0xff]
    %v166 = vld [vmem:[#allocation2 + $0x160] sm:$0xff]
    %v167 = vld [vmem:[#allocation2 + $0x168] sm:$0xff]
    %v168 = vld [vmem:[#allocation2 + $0x170] sm:$0xff]
    %v169 = vld [vmem:[#allocation2 + $0x178] sm:$0xff]
    %v170 = vld [vmem:[#allocation2 + $0x180] sm:$0xff]
    %v171 = vld [vmem:[#allocation2 + $0x188] sm:$0xff]
    %v172 = vld [vmem:[#allocation2 + $0x190] sm:$0xff]
    %v173 = vld [vmem:[#allocation2 + $0x198] sm:$0xff]
    %v174 = vld [vmem:[#allocation2 + $0x1a0] sm:$0xff]
    %v175 = vld [vmem:[#allocation2 + $0x1a8] sm:$0xff]
    %v176 = vld [vmem:[#allocation2 + $0x1b0] sm:$0xff]
    %v177 = vld [vmem:[#allocation2 + $0x1b8] sm:$0xff]
    %v178 = vld [vmem:[#allocation2 + $0x1c0] sm:$0xff]
    %v179 = vld [vmem:[#allocation2 + $0x1c8] sm:$0xff]
    %v180 = vld [vmem:[#allocation2 + $0x1d0] sm:$0xff]
    %v181 = vld [vmem:[#allocation2 + $0x1d8] sm:$0xff]
    %v182 = vld [vmem:[#allocation2 + $0x1e0] sm:$0xff]
    %v183 = vld [vmem:[#allocation2 + $0x1e8] sm:$0xff]
    %v184 = vld [vmem:[#allocation2 + $0x1f0] sm:$0xff]
    %v185 = vld [vmem:[#allocation2 + $0x1f8] sm:$0xff]
    %v186 = vld [vmem:[#allocation2 + $0x200] sm:$0xff]
    %v187 = vld [vmem:[#allocation2 + $0x208] sm:$0xff]
    %v188 = vld [vmem:[#allocation2 + $0x210] sm:$0xff]
    %v189 = vld [vmem:[#allocation2 + $0x218] sm:$0xff]
    %v190 = vld [vmem:[#allocation2 + $0x220] sm:$0xff]
    %v191 = vld [vmem:[#allocation2 + $0x228] sm:$0xff]
    %v192 = vld [vmem:[#allocation2 + $0x230] sm:$0xff]
    %v193 = vld [vmem:[#allocation2 + $0x238] sm:$0xff]
    %v194 = vld [vmem:[#allocation2 + $0x240] sm:$0xff]
    %v195 = vld [vmem:[#allocation2 + $0x248] sm:$0xff]
    %v196 = vld [vmem:[#allocation2 + $0x250] sm:$0xff]
    %v197 = vld [vmem:[#allocation2 + $0x258] sm:$0xff]
    %v198 = vld [vmem:[#allocation2 + $0x260] sm:$0xff]
    %v199 = vld [vmem:[#allocation2 + $0x268] sm:$0xff]
    %v200 = vld [vmem:[#allocation2 + $0x270] sm:$0xff]
    %v201 = vld [vmem:[#allocation2 + $0x278] sm:$0xff]
    %v202 = vld [vmem:[#allocation2 + $0x280] sm:$0xff]
    %v203 = vld [vmem:[#allocation2 + $0x288] sm:$0xff]
    %v204 = vld [vmem:[#allocation2 + $0x290] sm:$0xff]
    %v205 = vld [vmem:[#allocation2 + $0x298] sm:$0xff]
    %v206 = vld [vmem:[#allocation2 + $0x2a0] sm:$0xff]
    %v207 = vld [vmem:[#allocation2 + $0x2a8] sm:$0xff]
    %v208 = vld [vmem:[#allocation2 + $0x2b0] sm:$0xff]
    %v209 = vld [vmem:[#allocation2 + $0x2b8] sm:$0xff]
    %v210 = vld [vmem:[#allocation2 + $0x2c0] sm:$0xff]
    %v211 = vld [vmem:[#allocation2 + $0x2c8] sm:$0xff]
    %v212 = vld [vmem:[#allocation2 + $0x2d0] sm:$0xff]
    %v213 = vld [vmem:[#allocation2 + $0x2d8] sm:$0xff]
    %v214 = vld [vmem:[#allocation2 + $0x2e0] sm:$0xff]
    %v215 = vld [vmem:[#allocation2 + $0x2e8] sm:$0xff]
    %v216 = vld [vmem:[#allocation2 + $0x2f0] sm:$0xff]
    %v217 = vld [vmem:[#allocation2 + $0x2f8] sm:$0xff]
    %v218 = vld [vmem:[#allocation2 + $0x300] sm:$0xff]
    %v219 = vld [vmem:[#allocation2 + $0x308] sm:$0xff]
    %v220 = vld [vmem:[#allocation2 + $0x310] sm:$0xff]
    %v221 = vld [vmem:[#allocation2 + $0x318] sm:$0xff]
    %v222 = vld [vmem:[#allocation2 + $0x320] sm:$0xff]
    %v223 = vld [vmem:[#allocation2 + $0x328] sm:$0xff]
    %v224 = vld [vmem:[#allocation2 + $0x330] sm:$0xff]
    %v225 = vld [vmem:[#allocation2 + $0x338] sm:$0xff]
    %v226 = vld [vmem:[#allocation2 + $0x340] sm:$0xff]
    %v227 = vld [vmem:[#allocation2 + $0x348] sm:$0xff]
    %v228 = vld [vmem:[#allocation2 + $0x350] sm:$0xff]
    %v229 = vld [vmem:[#allocation2 + $0x358] sm:$0xff]
    %v230 = vld [vmem:[#allocation2 + $0x360] sm:$0xff]
    %v231 = vld [vmem:[#allocation2 + $0x368] sm:$0xff]
    %v232 = vld [vmem:[#allocation2 + $0x370] sm:$0xff]
    %v233 = vld [vmem:[#allocation2 + $0x378] sm:$0xff]
    %v234 = vld [vmem:[#allocation2 + $0x380] sm:$0xff]
    %v235 = vld [vmem:[#allocation2 + $0x388] sm:$0xff]
    %v236 = vld [vmem:[#allocation2 + $0x390] sm:$0xff]
    %v237 = vld [vmem:[#allocation2 + $0x398] sm:$0xff]
    %v238 = vld [vmem:[#allocation2 + $0x3a0] sm:$0xff]
    %v239 = vld [vmem:[#allocation2 + $0x3a8] sm:$0xff]
    %v240 = vld [vmem:[#allocation2 + $0x3b0] sm:$0xff]
    %v241 = vld [vmem:[#allocation2 + $0x3b8] sm:$0xff]
    %v242 = vld [vmem:[#allocation2 + $0x3c0] sm:$0xff]
    %v243 = vld [vmem:[#allocation2 + $0x3c8] sm:$0xff]
    %v244 = vld [vmem:[#allocation2 + $0x3d0] sm:$0xff]
    %v245 = vld [vmem:[#allocation2 + $0x3d8] sm:$0xff]
    %v246 = vld [vmem:[#allocation2 + $0x3e0] sm:$0xff]
    %v247 = vld [vmem:[#allocation2 + $0x3e8] sm:$0xff]
    %v248 = vld [vmem:[#allocation2 + $0x3f0] sm:$0xff]
    %v249 = vld [vmem:[#allocation2 + $0x3f8] sm:$0xff]
    %v378 = vunpack.c.l.b16 %v122
    %v379 = vunpack.c.h.b16 %v122
    %v380 = vunpack.c.l.b16 %v123
    %v381 = vunpack.c.h.b16 %v123
    %v382 = vunpack.c.l.b16 %v124
    %v383 = vunpack.c.h.b16 %v124
    %v384 = vunpack.c.l.b16 %v125
    %v385 = vunpack.c.h.b16 %v125
    %v386 = vunpack.c.l.b16 %v126
    %v387 = vunpack.c.h.b16 %v126
    %v388 = vunpack.c.l.b16 %v127
    %v389 = vunpack.c.h.b16 %v127
    %v390 = vunpack.c.l.b16 %v128
    %v391 = vunpack.c.h.b16 %v128
    %v392 = vunpack.c.l.b16 %v129
    %v393 = vunpack.c.h.b16 %v129
    %v394 = vunpack.c.l.b16 %v130
    %v395 = vunpack.c.h.b16 %v130
    %v396 = vunpack.c.l.b16 %v131
    %v397 = vunpack.c.h.b16 %v131
    %v398 = vunpack.c.l.b16 %v132
    %v399 = vunpack.c.h.b16 %v132
    %v400 = vunpack.c.l.b16 %v133
    %v401 = vunpack.c.h.b16 %v133
    %v402 = vunpack.c.l.b16 %v134
    %v403 = vunpack.c.h.b16 %v134
    %v404 = vunpack.c.l.b16 %v135
    %v405 = vunpack.c.h.b16 %v135
    %v406 = vunpack.c.l.b16 %v136
    %v407 = vunpack.c.h.b16 %v136
    %v408 = vunpack.c.l.b16 %v137
    %v409 = vunpack.c.h.b16 %v137
    %v410 = vunpack.c.l.b16 %v138
    %v411 = vunpack.c.h.b16 %v138
    %v412 = vunpack.c.l.b16 %v139
    %v413 = vunpack.c.h.b16 %v139
    %v414 = vunpack.c.l.b16 %v140
    %v415 = vunpack.c.h.b16 %v140
    %v416 = vunpack.c.l.b16 %v141
    %v417 = vunpack.c.h.b16 %v141
    %v418 = vunpack.c.l.b16 %v142
    %v419 = vunpack.c.h.b16 %v142
    %v420 = vunpack.c.l.b16 %v143
    %v421 = vunpack.c.h.b16 %v143
    %v422 = vunpack.c.l.b16 %v144
    %v423 = vunpack.c.h.b16 %v144
    %v424 = vunpack.c.l.b16 %v145
    %v425 = vunpack.c.h.b16 %v145
    %v426 = vunpack.c.l.b16 %v146
    %v427 = vunpack.c.h.b16 %v146
    %v428 = vunpack.c.l.b16 %v147
    %v429 = vunpack.c.h.b16 %v147
    %v430 = vunpack.c.l.b16 %v148
    %v431 = vunpack.c.h.b16 %v148
    %v432 = vunpack.c.l.b16 %v149
    %v433 = vunpack.c.h.b16 %v149
    %v434 = vunpack.c.l.b16 %v150
    %v435 = vunpack.c.h.b16 %v150
    %v436 = vunpack.c.l.b16 %v151
    %v437 = vunpack.c.h.b16 %v151
    %v438 = vunpack.c.l.b16 %v152
    %v439 = vunpack.c.h.b16 %v152
    %v440 = vunpack.c.l.b16 %v153
    %v441 = vunpack.c.h.b16 %v153
    %v442 = vunpack.c.l.b16 %v154
    %v443 = vunpack.c.h.b16 %v154
    %v444 = vunpack.c.l.b16 %v155
    %v445 = vunpack.c.h.b16 %v155
    %v446 = vunpack.c.l.b16 %v156
    %v447 = vunpack.c.h.b16 %v156
    %v448 = vunpack.c.l.b16 %v157
    %v449 = vunpack.c.h.b16 %v157
    %v450 = vunpack.c.l.b16 %v158
    %v451 = vunpack.c.h.b16 %v158
    %v452 = vunpack.c.l.b16 %v159
    %v453 = vunpack.c.h.b16 %v159
    %v454 = vunpack.c.l.b16 %v160
    %v455 = vunpack.c.h.b16 %v160
    %v456 = vunpack.c.l.b16 %v161
    %v457 = vunpack.c.h.b16 %v161
    %v458 = vunpack.c.l.b16 %v162
    %v459 = vunpack.c.h.b16 %v162
    %v460 = vunpack.c.l.b16 %v163
    %v461 = vunpack.c.h.b16 %v163
    %v462 = vunpack.c.l.b16 %v164
    %v463 = vunpack.c.h.b16 %v164
    %v464 = vunpack.c.l.b16 %v165
    %v465 = vunpack.c.h.b16 %v165
    %v466 = vunpack.c.l.b16 %v166
    %v467 = vunpack.c.h.b16 %v166
    %v468 = vunpack.c.l.b16 %v167
    %v469 = vunpack.c.h.b16 %v167
    %v470 = vunpack.c.l.b16 %v168
    %v471 = vunpack.c.h.b16 %v168
    %v472 = vunpack.c.l.b16 %v169
    %v473 = vunpack.c.h.b16 %v169
    %v474 = vunpack.c.l.b16 %v170
    %v475 = vunpack.c.h.b16 %v170
    %v476 = vunpack.c.l.b16 %v171
    %v477 = vunpack.c.h.b16 %v171
    %v478 = vunpack.c.l.b16 %v172
    %v479 = vunpack.c.h.b16 %v172
    %v480 = vunpack.c.l.b16 %v173
    %v481 = vunpack.c.h.b16 %v173
    %v482 = vunpack.c.l.b16 %v174
    %v483 = vunpack.c.h.b16 %v174
    %v484 = vunpack.c.l.b16 %v175
    %v485 = vunpack.c.h.b16 %v175
    %v486 = vunpack.c.l.b16 %v176
    %v487 = vunpack.c.h.b16 %v176
    %v488 = vunpack.c.l.b16 %v177
    %v489 = vunpack.c.h.b16 %v177
    %v490 = vunpack.c.l.b16 %v178
    %v491 = vunpack.c.h.b16 %v178
    %v492 = vunpack.c.l.b16 %v179
    %v493 = vunpack.c.h.b16 %v179
    %v494 = vunpack.c.l.b16 %v180
    %v495 = vunpack.c.h.b16 %v180
    %v496 = vunpack.c.l.b16 %v181
    %v497 = vunpack.c.h.b16 %v181
    %v498 = vunpack.c.l.b16 %v182
    %v499 = vunpack.c.h.b16 %v182
    %v500 = vunpack.c.l.b16 %v183
    %v501 = vunpack.c.h.b16 %v183
    %v502 = vunpack.c.l.b16 %v184
    %v503 = vunpack.c.h.b16 %v184
    %v504 = vunpack.c.l.b16 %v185
    %v505 = vunpack.c.h.b16 %v185
    %v506 = vunpack.c.l.b16 %v186
    %v507 = vunpack.c.h.b16 %v186
    %v508 = vunpack.c.l.b16 %v187
    %v509 = vunpack.c.h.b16 %v187
    %v510 = vunpack.c.l.b16 %v188
    %v511 = vunpack.c.h.b16 %v188
    %v512 = vunpack.c.l.b16 %v189
    %v513 = vunpack.c.h.b16 %v189
    %v514 = vunpack.c.l.b16 %v190
    %v515 = vunpack.c.h.b16 %v190
    %v516 = vunpack.c.l.b16 %v191
    %v517 = vunpack.c.h.b16 %v191
    %v518 = vunpack.c.l.b16 %v192
    %v519 = vunpack.c.h.b16 %v192
    %v520 = vunpack.c.l.b16 %v193
    %v521 = vunpack.c.h.b16 %v193
    %v522 = vunpack.c.l.b16 %v194
    %v523 = vunpack.c.h.b16 %v194
    %v524 = vunpack.c.l.b16 %v195
    %v525 = vunpack.c.h.b16 %v195
    %v526 = vunpack.c.l.b16 %v196
    %v527 = vunpack.c.h.b16 %v196
    %v528 = vunpack.c.l.b16 %v197
    %v529 = vunpack.c.h.b16 %v197
    %v530 = vunpack.c.l.b16 %v198
    %v531 = vunpack.c.h.b16 %v198
    %v532 = vunpack.c.l.b16 %v199
    %v533 = vunpack.c.h.b16 %v199
    %v534 = vunpack.c.l.b16 %v200
    %v535 = vunpack.c.h.b16 %v200
    %v536 = vunpack.c.l.b16 %v201
    %v537 = vunpack.c.h.b16 %v201
    %v538 = vunpack.c.l.b16 %v202
    %v539 = vunpack.c.h.b16 %v202
    %v540 = vunpack.c.l.b16 %v203
    %v541 = vunpack.c.h.b16 %v203
    %v542 = vunpack.c.l.b16 %v204
    %v543 = vunpack.c.h.b16 %v204
    %v544 = vunpack.c.l.b16 %v205
    %v545 = vunpack.c.h.b16 %v205
    %v546 = vunpack.c.l.b16 %v206
    %v547 = vunpack.c.h.b16 %v206
    %v548 = vunpack.c.l.b16 %v207
    %v549 = vunpack.c.h.b16 %v207
    %v550 = vunpack.c.l.b16 %v208
    %v551 = vunpack.c.h.b16 %v208
    %v552 = vunpack.c.l.b16 %v209
    %v553 = vunpack.c.h.b16 %v209
    %v554 = vunpack.c.l.b16 %v210
    %v555 = vunpack.c.h.b16 %v210
    %v556 = vunpack.c.l.b16 %v211
    %v557 = vunpack.c.h.b16 %v211
    %v558 = vunpack.c.l.b16 %v212
    %v559 = vunpack.c.h.b16 %v212
    %v560 = vunpack.c.l.b16 %v213
    %v561 = vunpack.c.h.b16 %v213
    %v562 = vunpack.c.l.b16 %v214
    %v563 = vunpack.c.h.b16 %v214
    %v564 = vunpack.c.l.b16 %v215
    %v565 = vunpack.c.h.b16 %v215
    %v566 = vunpack.c.l.b16 %v216
    %v567 = vunpack.c.h.b16 %v216
    %v568 = vunpack.c.l.b16 %v217
    %v569 = vunpack.c.h.b16 %v217
    %v570 = vunpack.c.l.b16 %v218
    %v571 = vunpack.c.h.b16 %v218
    %v572 = vunpack.c.l.b16 %v219
    %v573 = vunpack.c.h.b16 %v219
    %v574 = vunpack.c.l.b16 %v220
    %v575 = vunpack.c.h.b16 %v220
    %v576 = vunpack.c.l.b16 %v221
    %v577 = vunpack.c.h.b16 %v221
    %v578 = vunpack.c.l.b16 %v222
    %v579 = vunpack.c.h.b16 %v222
    %v580 = vunpack.c.l.b16 %v223
    %v581 = vunpack.c.h.b16 %v223
    %v582 = vunpack.c.l.b16 %v224
    %v583 = vunpack.c.h.b16 %v224
    %v584 = vunpack.c.l.b16 %v225
    %v585 = vunpack.c.h.b16 %v225
    %v586 = vunpack.c.l.b16 %v226
    %v587 = vunpack.c.h.b16 %v226
    %v588 = vunpack.c.l.b16 %v227
    %v589 = vunpack.c.h.b16 %v227
    %v590 = vunpack.c.l.b16 %v228
    %v591 = vunpack.c.h.b16 %v228
    %v592 = vunpack.c.l.b16 %v229
    %v593 = vunpack.c.h.b16 %v229
    %v594 = vunpack.c.l.b16 %v230
    %v595 = vunpack.c.h.b16 %v230
    %v596 = vunpack.c.l.b16 %v231
    %v597 = vunpack.c.h.b16 %v231
    %v598 = vunpack.c.l.b16 %v232
    %v599 = vunpack.c.h.b16 %v232
    %v600 = vunpack.c.l.b16 %v233
    %v601 = vunpack.c.h.b16 %v233
    %v602 = vunpack.c.l.b16 %v234
    %v603 = vunpack.c.h.b16 %v234
    %v604 = vunpack.c.l.b16 %v235
    %v605 = vunpack.c.h.b16 %v235
    %v606 = vunpack.c.l.b16 %v236
    %v607 = vunpack.c.h.b16 %v236
    %v608 = vunpack.c.l.b16 %v237
    %v609 = vunpack.c.h.b16 %v237
    %v610 = vunpack.c.l.b16 %v238
    %v611 = vunpack.c.h.b16 %v238
    %v612 = vunpack.c.l.b16 %v239
    %v613 = vunpack.c.h.b16 %v239
    %v614 = vunpack.c.l.b16 %v240
    %v615 = vunpack.c.h.b16 %v240
    %v616 = vunpack.c.l.b16 %v241
    %v617 = vunpack.c.h.b16 %v241
    %v618 = vunpack.c.l.b16 %v242
    %v619 = vunpack.c.h.b16 %v242
    %v620 = vunpack.c.l.b16 %v243
    %v621 = vunpack.c.h.b16 %v243
    %v622 = vunpack.c.l.b16 %v244
    %v623 = vunpack.c.h.b16 %v244
    %v624 = vunpack.c.l.b16 %v245
    %v625 = vunpack.c.h.b16 %v245
    %v626 = vunpack.c.l.b16 %v246
    %v627 = vunpack.c.h.b16 %v246
    %v628 = vunpack.c.l.b16 %v247
    %v629 = vunpack.c.h.b16 %v247
    %v630 = vunpack.c.l.b16 %v248
    %v631 = vunpack.c.h.b16 %v248
    %v632 = vunpack.c.l.b16 %v249
    %v633 = vunpack.c.h.b16 %v249
    %v634 = vpack.c.b16 %v382, %v378
    %v635 = vpack.c.b16 %v383, %v379
    %v636 = vpack.c.b16 %v384, %v380
    %v637 = vpack.c.b16 %v385, %v381
    %v638 = vpack.c.b16 %v390, %v386
    %v639 = vpack.c.b16 %v391, %v387
    %v640 = vpack.c.b16 %v392, %v388
    %v641 = vpack.c.b16 %v393, %v389
    %v642 = vpack.c.b16 %v398, %v394
    %v643 = vpack.c.b16 %v399, %v395
    %v644 = vpack.c.b16 %v400, %v396
    %v645 = vpack.c.b16 %v401, %v397
    %v646 = vpack.c.b16 %v406, %v402
    %v647 = vpack.c.b16 %v407, %v403
    %v648 = vpack.c.b16 %v408, %v404
    %v649 = vpack.c.b16 %v409, %v405
    %v650 = vpack.c.b16 %v414, %v410
    %v651 = vpack.c.b16 %v415, %v411
    %v652 = vpack.c.b16 %v416, %v412
    %v653 = vpack.c.b16 %v417, %v413
    %v654 = vpack.c.b16 %v422, %v418
    %v655 = vpack.c.b16 %v423, %v419
    %v656 = vpack.c.b16 %v424, %v420
    %v657 = vpack.c.b16 %v425, %v421
    %v658 = vpack.c.b16 %v430, %v426
    %v659 = vpack.c.b16 %v431, %v427
    %v660 = vpack.c.b16 %v432, %v428
    %v661 = vpack.c.b16 %v433, %v429
    %v662 = vpack.c.b16 %v438, %v434
    %v663 = vpack.c.b16 %v439, %v435
    %v664 = vpack.c.b16 %v440, %v436
    %v665 = vpack.c.b16 %v441, %v437
    %v666 = vpack.c.b16 %v446, %v442
    %v667 = vpack.c.b16 %v447, %v443
    %v668 = vpack.c.b16 %v448, %v444
    %v669 = vpack.c.b16 %v449, %v445
    %v670 = vpack.c.b16 %v454, %v450
    %v671 = vpack.c.b16 %v455, %v451
    %v672 = vpack.c.b16 %v456, %v452
    %v673 = vpack.c.b16 %v457, %v453
    %v674 = vpack.c.b16 %v462, %v458
    %v675 = vpack.c.b16 %v463, %v459
    %v676 = vpack.c.b16 %v464, %v460
    %v677 = vpack.c.b16 %v465, %v461
    %v678 = vpack.c.b16 %v470, %v466
    %v679 = vpack.c.b16 %v471, %v467
    %v680 = vpack.c.b16 %v472, %v468
    %v681 = vpack.c.b16 %v473, %v469
    %v682 = vpack.c.b16 %v478, %v474
    %v683 = vpack.c.b16 %v479, %v475
    %v684 = vpack.c.b16 %v480, %v476
    %v685 = vpack.c.b16 %v481, %v477
    %v686 = vpack.c.b16 %v486, %v482
    %v687 = vpack.c.b16 %v487, %v483
    %v688 = vpack.c.b16 %v488, %v484
    %v689 = vpack.c.b16 %v489, %v485
    %v690 = vpack.c.b16 %v494, %v490
    %v691 = vpack.c.b16 %v495, %v491
    %v692 = vpack.c.b16 %v496, %v492
    %v693 = vpack.c.b16 %v497, %v493
    %v694 = vpack.c.b16 %v502, %v498
    %v695 = vpack.c.b16 %v503, %v499
    %v696 = vpack.c.b16 %v504, %v500
    %v697 = vpack.c.b16 %v505, %v501
    %v698 = vpack.c.b16 %v510, %v506
    %v699 = vpack.c.b16 %v511, %v507
    %v700 = vpack.c.b16 %v512, %v508
    %v701 = vpack.c.b16 %v513, %v509
    %v702 = vpack.c.b16 %v518, %v514
    %v703 = vpack.c.b16 %v519, %v515
    %v704 = vpack.c.b16 %v520, %v516
    %v705 = vpack.c.b16 %v521, %v517
    %v706 = vpack.c.b16 %v526, %v522
    %v707 = vpack.c.b16 %v527, %v523
    %v708 = vpack.c.b16 %v528, %v524
    %v709 = vpack.c.b16 %v529, %v525
    %v710 = vpack.c.b16 %v534, %v530
    %v711 = vpack.c.b16 %v535, %v531
    %v712 = vpack.c.b16 %v536, %v532
    %v713 = vpack.c.b16 %v537, %v533
    %v714 = vpack.c.b16 %v542, %v538
    %v715 = vpack.c.b16 %v543, %v539
    %v716 = vpack.c.b16 %v544, %v540
    %v717 = vpack.c.b16 %v545, %v541
    %v718 = vpack.c.b16 %v550, %v546
    %v719 = vpack.c.b16 %v551, %v547
    %v720 = vpack.c.b16 %v552, %v548
    %v721 = vpack.c.b16 %v553, %v549
    %v722 = vpack.c.b16 %v558, %v554
    %v723 = vpack.c.b16 %v559, %v555
    %v724 = vpack.c.b16 %v560, %v556
    %v725 = vpack.c.b16 %v561, %v557
    %v726 = vpack.c.b16 %v566, %v562
    %v727 = vpack.c.b16 %v567, %v563
    %v728 = vpack.c.b16 %v568, %v564
    %v729 = vpack.c.b16 %v569, %v565
    %v730 = vpack.c.b16 %v574, %v570
    %v731 = vpack.c.b16 %v575, %v571
    %v732 = vpack.c.b16 %v576, %v572
    %v733 = vpack.c.b16 %v577, %v573
    %v734 = vpack.c.b16 %v582, %v578
    %v735 = vpack.c.b16 %v583, %v579
    %v736 = vpack.c.b16 %v584, %v580
    %v737 = vpack.c.b16 %v585, %v581
    %v738 = vpack.c.b16 %v590, %v586
    %v739 = vpack.c.b16 %v591, %v587
    %v740 = vpack.c.b16 %v592, %v588
    %v741 = vpack.c.b16 %v593, %v589
    %v742 = vpack.c.b16 %v598, %v594
    %v743 = vpack.c.b16 %v599, %v595
    %v744 = vpack.c.b16 %v600, %v596
    %v745 = vpack.c.b16 %v601, %v597
    %v746 = vpack.c.b16 %v606, %v602
    %v747 = vpack.c.b16 %v607, %v603
    %v748 = vpack.c.b16 %v608, %v604
    %v749 = vpack.c.b16 %v609, %v605
    %v750 = vpack.c.b16 %v614, %v610
    %v751 = vpack.c.b16 %v615, %v611
    %v752 = vpack.c.b16 %v616, %v612
    %v753 = vpack.c.b16 %v617, %v613
    %v754 = vpack.c.b16 %v622, %v618
    %v755 = vpack.c.b16 %v623, %v619
    %v756 = vpack.c.b16 %v624, %v620
    %v757 = vpack.c.b16 %v625, %v621
    %v758 = vpack.c.b16 %v630, %v626
    %v759 = vpack.c.b16 %v631, %v627
    %v760 = vpack.c.b16 %v632, %v628
    %v761 = vpack.c.b16 %v633, %v629
    %890 = vmatpush.bf16.msra.mxu0 %v662
    %891 = vmatpush.bf16.msra.mxu0 %v658
    %892 = vmatpush.bf16.msra.mxu0 %v654
    %893 = vmatpush.bf16.msra.mxu0 %v650
    %894 = vmatpush.bf16.msra.mxu0 %v646
    %895 = vmatpush.bf16.msra.mxu0 %v642
    %896 = vmatpush.bf16.msra.mxu0 %v638
    %897 = vmatpush.bf16.msra.mxu0 %v634
    %898 = vmatmul.bf16.gmra.mxu0 %v98
    %v899 = vpop.f32.mrf.mxu0
    %v900 = vadd.f32 0.0, %v899
    %v901 = vpop.f32.mrf.mxu0
    %902 = vdwg.mxu0
    %903 = vmatpush.bf16.msra.mxu0 %v694
    %904 = vmatpush.bf16.msra.mxu0 %v690
    %905 = vmatpush.bf16.msra.mxu0 %v686
    %906 = vmatpush.bf16.msra.mxu0 %v682
    %907 = vmatpush.bf16.msra.mxu0 %v678
    %908 = vmatpush.bf16.msra.mxu0 %v674
    %909 = vmatpush.bf16.msra.mxu0 %v670
    %910 = vmatpush.bf16.msra.mxu0 %v666
    %911 = vmatmul.bf16.gmra.mxu0 %v99
    %v912 = vpop.f32.mrf.mxu0
    %v913 = vadd.f32 %v900, %v912
    %v914 = vpop.f32.mrf.mxu0
    %915 = vdwg.mxu0
    %916 = vmatpush.bf16.msra.mxu0 %v726
    %917 = vmatpush.bf16.msra.mxu0 %v722
    %918 = vmatpush.bf16.msra.mxu0 %v718
    %919 = vmatpush.bf16.msra.mxu0 %v714
    %920 = vmatpush.bf16.msra.mxu0 %v710
    %921 = vmatpush.bf16.msra.mxu0 %v706
    %922 = vmatpush.bf16.msra.mxu0 %v702
    %923 = vmatpush.bf16.msra.mxu0 %v698
    %924 = vmatmul.bf16.gmra.mxu0 %v100
    %v925 = vpop.f32.mrf.mxu0
    %v926 = vadd.f32 %v913, %v925
    %v927 = vpop.f32.mrf.mxu0
    %928 = vdwg.mxu0
    %929 = vmatpush.bf16.msra.mxu0 %v758
    %930 = vmatpush.bf16.msra.mxu0 %v754
    %931 = vmatpush.bf16.msra.mxu0 %v750
    %932 = vmatpush.bf16.msra.mxu0 %v746
    %933 = vmatpush.bf16.msra.mxu0 %v742
    %934 = vmatpush.bf16.msra.mxu0 %v738
    %935 = vmatpush.bf16.msra.mxu0 %v734
    %936 = vmatpush.bf16.msra.mxu0 %v730
    %937 = vmatmul.bf16.gmra.mxu0 %v101
    %v938 = vpop.f32.mrf.mxu0
    %v939 = vadd.f32 %v926, %v938
    %v940 = vpop.f32.mrf.mxu0
    %941 = vdwg.mxu0
    %942 = vmatpush.bf16.msra.mxu0 %v663
    %943 = vmatpush.bf16.msra.mxu0 %v659
    %944 = vmatpush.bf16.msra.mxu0 %v655
    %945 = vmatpush.bf16.msra.mxu0 %v651
    %946 = vmatpush.bf16.msra.mxu0 %v647
    %947 = vmatpush.bf16.msra.mxu0 %v643
    %948 = vmatpush.bf16.msra.mxu0 %v639
    %949 = vmatpush.bf16.msra.mxu0 %v635
    %950 = vmatmul.bf16.gmra.mxu0 %v98
    %v951 = vpop.f32.mrf.mxu0
    %v952 = vadd.f32 0.0, %v951
    %v953 = vpop.f32.mrf.mxu0
    %954 = vdwg.mxu0
    %955 = vmatpush.bf16.msra.mxu0 %v695
    %956 = vmatpush.bf16.msra.mxu0 %v691
    %957 = vmatpush.bf16.msra.mxu0 %v687
    %958 = vmatpush.bf16.msra.mxu0 %v683
    %959 = vmatpush.bf16.msra.mxu0 %v679
    %960 = vmatpush.bf16.msra.mxu0 %v675
    %961 = vmatpush.bf16.msra.mxu0 %v671
    %962 = vmatpush.bf16.msra.mxu0 %v667
    %963 = vmatmul.bf16.gmra.mxu0 %v99
    %v964 = vpop.f32.mrf.mxu0
    %v965 = vadd.f32 %v952, %v964
    %v966 = vpop.f32.mrf.mxu0
    %967 = vdwg.mxu0
    %968 = vmatpush.bf16.msra.mxu0 %v727
    %969 = vmatpush.bf16.msra.mxu0 %v723
    %970 = vmatpush.bf16.msra.mxu0 %v719
    %971 = vmatpush.bf16.msra.mxu0 %v715
    %972 = vmatpush.bf16.msra.mxu0 %v711
    %973 = vmatpush.bf16.msra.mxu0 %v707
    %974 = vmatpush.bf16.msra.mxu0 %v703
    %975 = vmatpush.bf16.msra.mxu0 %v699
    %976 = vmatmul.bf16.gmra.mxu0 %v100
    %v977 = vpop.f32.mrf.mxu0
    %v978 = vadd.f32 %v965, %v977
    %v979 = vpop.f32.mrf.mxu0
    %980 = vdwg.mxu0
    %981 = vmatpush.bf16.msra.mxu0 %v759
    %982 = vmatpush.bf16.msra.mxu0 %v755
    %983 = vmatpush.bf16.msra.mxu0 %v751
    %984 = vmatpush.bf16.msra.mxu0 %v747
    %985 = vmatpush.bf16.msra.mxu0 %v743
    %986 = vmatpush.bf16.msra.mxu0 %v739
    %987 = vmatpush.bf16.msra.mxu0 %v735
    %988 = vmatpush.bf16.msra.mxu0 %v731
    %989 = vmatmul.bf16.gmra.mxu0 %v101
    %v990 = vpop.f32.mrf.mxu0
    %v991 = vadd.f32 %v978, %v990
    %v992 = vpop.f32.mrf.mxu0
    %993 = vdwg.mxu0
    %994 = vmatpush.bf16.msra.mxu0 %v664
    %995 = vmatpush.bf16.msra.mxu0 %v660
    %996 = vmatpush.bf16.msra.mxu0 %v656
    %997 = vmatpush.bf16.msra.mxu0 %v652
    %998 = vmatpush.bf16.msra.mxu0 %v648
    %999 = vmatpush.bf16.msra.mxu0 %v644
    %1000 = vmatpush.bf16.msra.mxu0 %v640
    %1001 = vmatpush.bf16.msra.mxu0 %v636
    %1002 = vmatmul.bf16.gmra.mxu0 %v98
    %v1003 = vpop.f32.mrf.mxu0
    %v1004 = vadd.f32 0.0, %v1003
    %v1005 = vpop.f32.mrf.mxu0
    %1006 = vdwg.mxu0
    %1007 = vmatpush.bf16.msra.mxu0 %v696
    %1008 = vmatpush.bf16.msra.mxu0 %v692
    %1009 = vmatpush.bf16.msra.mxu0 %v688
    %1010 = vmatpush.bf16.msra.mxu0 %v684
    %1011 = vmatpush.bf16.msra.mxu0 %v680
    %1012 = vmatpush.bf16.msra.mxu0 %v676
    %1013 = vmatpush.bf16.msra.mxu0 %v672
    %1014 = vmatpush.bf16.msra.mxu0 %v668
    %1015 = vmatmul.bf16.gmra.mxu0 %v99
    %v1016 = vpop.f32.mrf.mxu0
    %v1017 = vadd.f32 %v1004, %v1016
    %v1018 = vpop.f32.mrf.mxu0
    %1019 = vdwg.mxu0
    %1020 = vmatpush.bf16.msra.mxu0 %v728
    %1021 = vmatpush.bf16.msra.mxu0 %v724
    %1022 = vmatpush.bf16.msra.mxu0 %v720
    %1023 = vmatpush.bf16.msra.mxu0 %v716
    %1024 = vmatpush.bf16.msra.mxu0 %v712
    %1025 = vmatpush.bf16.msra.mxu0 %v708
    %1026 = vmatpush.bf16.msra.mxu0 %v704
    %1027 = vmatpush.bf16.msra.mxu0 %v700
    %1028 = vmatmul.bf16.gmra.mxu0 %v100
    %v1029 = vpop.f32.mrf.mxu0
    %v1030 = vadd.f32 %v1017, %v1029
    %v1031 = vpop.f32.mrf.mxu0
    %1032 = vdwg.mxu0
    %1033 = vmatpush.bf16.msra.mxu0 %v760
    %1034 = vmatpush.bf16.msra.mxu0 %v756
    %1035 = vmatpush.bf16.msra.mxu0 %v752
    %1036 = vmatpush.bf16.msra.mxu0 %v748
    %1037 = vmatpush.bf16.msra.mxu0 %v744
    %1038 = vmatpush.bf16.msra.mxu0 %v740
    %1039 = vmatpush.bf16.msra.mxu0 %v736
    %1040 = vmatpush.bf16.msra.mxu0 %v732
    %1041 = vmatmul.bf16.gmra.mxu0 %v101
    %v1042 = vpop.f32.mrf.mxu0
    %v1043 = vadd.f32 %v1030, %v1042
    %v1044 = vpop.f32.mrf.mxu0
    %1045 = vdwg.mxu0
    %1046 = vmatpush.bf16.msra.mxu0 %v665
    %1047 = vmatpush.bf16.msra.mxu0 %v661
    %1048 = vmatpush.bf16.msra.mxu0 %v657
    %1049 = vmatpush.bf16.msra.mxu0 %v653
    %1050 = vmatpush.bf16.msra.mxu0 %v649
    %1051 = vmatpush.bf16.msra.mxu0 %v645
    %1052 = vmatpush.bf16.msra.mxu0 %v641
    %1053 = vmatpush.bf16.msra.mxu0 %v637
    %1054 = vmatmul.bf16.gmra.mxu0 %v98
    %v1055 = vpop.f32.mrf.mxu0
    %v1056 = vadd.f32 0.0, %v1055
    %v1057 = vpop.f32.mrf.mxu0
    %1058 = vdwg.mxu0
    %1059 = vmatpush.bf16.msra.mxu0 %v697
    %1060 = vmatpush.bf16.msra.mxu0 %v693
    %1061 = vmatpush.bf16.msra.mxu0 %v689
    %1062 = vmatpush.bf16.msra.mxu0 %v685
    %1063 = vmatpush.bf16.msra.mxu0 %v681
    %1064 = vmatpush.bf16.msra.mxu0 %v677
    %1065 = vmatpush.bf16.msra.mxu0 %v673
    %1066 = vmatpush.bf16.msra.mxu0 %v669
    %1067 = vmatmul.bf16.gmra.mxu0 %v99
    %v1068 = vpop.f32.mrf.mxu0
    %v1069 = vadd.f32 %v1056, %v1068
    %v1070 = vpop.f32.mrf.mxu0
    %1071 = vdwg.mxu0
    %1072 = vmatpush.bf16.msra.mxu0 %v729
    %1073 = vmatpush.bf16.msra.mxu0 %v725
    %1074 = vmatpush.bf16.msra.mxu0 %v721
    %1075 = vmatpush.bf16.msra.mxu0 %v717
    %1076 = vmatpush.bf16.msra.mxu0 %v713
    %1077 = vmatpush.bf16.msra.mxu0 %v709
    %1078 = vmatpush.bf16.msra.mxu0 %v705
    %1079 = vmatpush.bf16.msra.mxu0 %v701
    %1080 = vmatmul.bf16.gmra.mxu0 %v100
    %v1081 = vpop.f32.mrf.mxu0
    %v1082 = vadd.f32 %v1069, %v1081
    %v1083 = vpop.f32.mrf.mxu0
    %1084 = vdwg.mxu0
    %1085 = vmatpush.bf16.msra.mxu0 %v761
    %1086 = vmatpush.bf16.msra.mxu0 %v757
    %1087 = vmatpush.bf16.msra.mxu0 %v753
    %1088 = vmatpush.bf16.msra.mxu0 %v749
    %1089 = vmatpush.bf16.msra.mxu0 %v745
    %1090 = vmatpush.bf16.msra.mxu0 %v741
    %1091 = vmatpush.bf16.msra.mxu0 %v737
    %1092 = vmatpush.bf16.msra.mxu0 %v733
    %1093 = vmatmul.bf16.gmra.mxu0 %v101
    %v1094 = vpop.f32.mrf.mxu0
    %v1095 = vadd.f32 %v1082, %v1094
    %v1096 = vpop.f32.mrf.mxu0
    %1097 = vdwg.mxu0
    %v1098 = vrot.slane %v939, 4
    %v1099 = vadd.f32 %v939, %v1098
    %v1100 = vrot.slane %v1099, 2
    %v1101 = vadd.f32 %v1099, %v1100
    %v1102 = vrot.slane %v1101, 1
    %v1103 = vadd.f32 %v1101, %v1102
    %v1104 = vrot.slane %v991, 4
    %v1105 = vadd.f32 %v991, %v1104
    %v1106 = vrot.slane %v1105, 2
    %v1107 = vadd.f32 %v1105, %v1106
    %v1108 = vrot.slane %v1107, 1
    %v1109 = vadd.f32 %v1107, %v1108
    %v1110 = vrot.slane %v1043, 4
    %v1111 = vadd.f32 %v1043, %v1110
    %v1112 = vrot.slane %v1111, 2
    %v1113 = vadd.f32 %v1111, %v1112
    %v1114 = vrot.slane %v1113, 1
    %v1115 = vadd.f32 %v1113, %v1114
    %v1116 = vrot.slane %v1095, 4
    %v1117 = vadd.f32 %v1095, %v1116
    %v1118 = vrot.slane %v1117, 2
    %v1119 = vadd.f32 %v1117, %v1118
    %v1120 = vrot.slane %v1119, 1
    %v1121 = vadd.f32 %v1119, %v1120
    %v1122 = vmul.f32 %v939, %v939
    %v1123 = vmul.f32 %v991, %v991
    %v1124 = vmul.f32 %v1043, %v1043
    %v1125 = vmul.f32 %v1095, %v1095
    %v1126 = vrot.slane %v1122, 4
    %v1127 = vadd.f32 %v1122, %v1126
    %v1128 = vrot.slane %v1127, 2
    %v1129 = vadd.f32 %v1127, %v1128
    %v1130 = vrot.slane %v1129, 1
    %v1131 = vadd.f32 %v1129, %v1130
    %v1132 = vrot.slane %v1123, 4
    %v1133 = vadd.f32 %v1123, %v1132
    %v1134 = vrot.slane %v1133, 2
    %v1135 = vadd.f32 %v1133, %v1134
    %v1136 = vrot.slane %v1135, 1
    %v1137 = vadd.f32 %v1135, %v1136
    %v1138 = vrot.slane %v1124, 4
    %v1139 = vadd.f32 %v1124, %v1138
    %v1140 = vrot.slane %v1139, 2
    %v1141 = vadd.f32 %v1139, %v1140
    %v1142 = vrot.slane %v1141, 1
    %v1143 = vadd.f32 %v1141, %v1142
    %v1144 = vrot.slane %v1125, 4
    %v1145 = vadd.f32 %v1125, %v1144
    %v1146 = vrot.slane %v1145, 2
    %v1147 = vadd.f32 %v1145, %v1146
    %v1148 = vrot.slane %v1147, 1
    %v1149 = vadd.f32 %v1147, %v1148
    %v1150 = vmul.f32 %v1103, 0.125
    %v1151 = vmul.f32 %v1109, 0.125
    %v1152 = vmul.f32 %v1115, 0.125
    %v1153 = vmul.f32 %v1121, 0.125
    %v1154 = vmul.f32 %v1131, 0.125
    %v1155 = vmul.f32 %v1137, 0.125
    %v1156 = vmul.f32 %v1143, 0.125
    %v1157 = vmul.f32 %v1149, 0.125
    %v1158 = vmul.f32 %v1150, %v1150
    %v1159 = vmul.f32 %v1151, %v1151
    %v1160 = vmul.f32 %v1152, %v1152
    %v1161 = vmul.f32 %v1153, %v1153
    %v1162 = vsub.f32 %v1154, %v1158
    %v1163 = vsub.f32 %v1155, %v1159
    %v1164 = vsub.f32 %v1156, %v1160
    %v1165 = vsub.f32 %v1157, %v1161
    %v1166 = vmax.f32 %v1162, 0.0
    %v1167 = vmax.f32 %v1163, 0.0
    %v1168 = vmax.f32 %v1164, 0.0
    %v1169 = vmax.f32 %v1165, 0.0
    %v1170 = vld [vmem:[#allocation7] sm:$0xf]
    %v1171 = vadd.f32 %v1166, 1e-05
    %v1172 = vadd.f32 %v1167, 1e-05
    %v1173 = vadd.f32 %v1168, 1e-05
    %v1174 = vadd.f32 %v1169, 1e-05
    %v1175 = vrsqrt.pop %v1171
    %v1176 = vmul.f32 %v1175, %v1171
    %v1177 = vmul.f32 %v1176, %v1175
    %v1178 = vmul.f32 0.5, %v1177
    %v1179 = vsub.f32 1.5, %v1178
    %v1180 = vmul.f32 %v1175, %v1179
    %vm1181 = vweird.f32 %v1171
    %vm1182 = vweird.f32 %v1175
    %vm1183 = vmor %vm1181, %vm1182
    %v1184 = vsel %vm1183, %v1175, %v1180
    %v1185 = vrsqrt.pop %v1172
    %v1186 = vmul.f32 %v1185, %v1172
    %v1187 = vmul.f32 %v1186, %v1185
    %v1188 = vmul.f32 0.5, %v1187
    %v1189 = vsub.f32 1.5, %v1188
    %v1190 = vmul.f32 %v1185, %v1189
    %vm1191 = vweird.f32 %v1172
    %vm1192 = vweird.f32 %v1185
    %vm1193 = vmor %vm1191, %vm1192
    %v1194 = vsel %vm1193, %v1185, %v1190
    %v1195 = vrsqrt.pop %v1173
    %v1196 = vmul.f32 %v1195, %v1173
    %v1197 = vmul.f32 %v1196, %v1195
    %v1198 = vmul.f32 0.5, %v1197
    %v1199 = vsub.f32 1.5, %v1198
    %v1200 = vmul.f32 %v1195, %v1199
    %vm1201 = vweird.f32 %v1173
    %vm1202 = vweird.f32 %v1195
    %vm1203 = vmor %vm1201, %vm1202
    %v1204 = vsel %vm1203, %v1195, %v1200
    %v1205 = vrsqrt.pop %v1174
    %v1206 = vmul.f32 %v1205, %v1174
    %v1207 = vmul.f32 %v1206, %v1205
    %v1208 = vmul.f32 0.5, %v1207
    %v1209 = vsub.f32 1.5, %v1208
    %v1210 = vmul.f32 %v1205, %v1209
    %vm1211 = vweird.f32 %v1174
    %vm1212 = vweird.f32 %v1205
    %vm1213 = vmor %vm1211, %vm1212
    %v1214 = vsel %vm1213, %v1205, %v1210
    %v1219 = vrot.slane %v1194, 7
    %v1220 = vrot.slane %v1204, 6
    %v1221 = vrot.slane %v1214, 5
    %vm1222 = vcmask 1040384
    %v1223 = vsel %vm1222, %v1184, %v1219
    %vm1224 = vcmask 1042434
    %v1225 = vsel %vm1224, %v1220, %v1221
    %vm1226 = vcmask 1041408
    %v1227 = vsel %vm1226, %v1223, %v1225
    %v1229 = vmul.f32 %v1170, %v1227
    %v1230 = vld [vmem:[#allocation9] sm:$0xf]
    %v1232 = vperm.slane %v1229, 0
    %v1233 = vperm.slane %v1229, 1
    %v1234 = vperm.slane %v1229, 2
    %v1235 = vperm.slane %v1229, 3
    %v1240 = vmul.f32 %v1150, %v1232
    %v1241 = vmul.f32 %v1151, %v1233
    %v1242 = vmul.f32 %v1152, %v1234
    %v1243 = vmul.f32 %v1153, %v1235
    %v1248 = vrot.slane %v1241, 7
    %v1249 = vrot.slane %v1242, 6
    %v1250 = vrot.slane %v1243, 5
    %v1251 = vsel %vm1222, %v1240, %v1248
    %v1252 = vsel %vm1224, %v1249, %v1250
    %v1253 = vsel %vm1226, %v1251, %v1252
    %v1255 = vsub.f32 %v1230, %v1253
    %v1256 = vmul.f32 %v939, %v1232
    %v1257 = vmul.f32 %v991, %v1233
    %v1258 = vmul.f32 %v1043, %v1234
    %v1259 = vmul.f32 %v1095, %v1235
    %v1261 = vperm.slane %v1255, 0
    %v1262 = vperm.slane %v1255, 1
    %v1263 = vperm.slane %v1255, 2
    %v1264 = vperm.slane %v1255, 3
    %v1269 = vadd.f32 %v1256, %v1261
    %v1270 = vadd.f32 %v1257, %v1262
    %v1271 = vadd.f32 %v1258, %v1263
    %v1272 = vadd.f32 %v1259, %v1264
    %v1273 = vmax.f32 %v1269, 0.0
    %v1274 = vmax.f32 %v1270, 0.0
    %v1275 = vmax.f32 %v1271, 0.0
    %v1276 = vmax.f32 %v1272, 0.0
    %v1277 = vpack.c.bf16 %v1273, %v1273
    %v1278 = vpack.c.bf16 %v1274, %v1274
    %v1279 = vpack.c.bf16 %v1275, %v1275
    %v1280 = vpack.c.bf16 %v1276, %v1276
    %s1281 = sshll.u32 %s103, 4
    %1282 = dma.done %s108, %s1281
    %s1283 = scalar_lea.hbm %s1, 2048
    // Predicated region
    $region46: #{tpu_custom_call.1} parent=1 // pred_check
      _
    $region47: #{tpu_custom_call.1} parent=1 // pred_check_branch
      %1285 = sbr.rel target = $region49
    $region48: #{tpu_custom_call.1} parent=1 // pred_region
      %1286 = sst [smem:[#allocation14]] [#allocation19]
      %1287 = sst [smem:[#allocation15]] [#allocation18]
    $region49: #{tpu_custom_call.1} parent=1 // pred_fallthru
      _
    %1289 = shalt.err (0)
    %s1291 = sshll.u32 %s1283, 4
    %s1292 = int_to_ptr.hbm [resolvable:$true] %s1291
    %s1293 = sshll.u32 [#allocation2], 4
    %s1294 = int_to_ptr.vmem [resolvable:$true] %s1293
    %1296 = dma.hbm_to_vmem [thread:$0]  %s1292, 16384, %s1294, [#allocation3]
    %v1297 = vld [vmem:[%s107] sm:$0xff]
    %v1298 = vld [vmem:[%s107 + $0x8] sm:$0xff]
    %v1299 = vld [vmem:[%s107 + $0x10] sm:$0xff]
    %v1300 = vld [vmem:[%s107 + $0x18] sm:$0xff]
    %v1301 = vld [vmem:[%s107 + $0x20] sm:$0xff]
    %v1302 = vld [vmem:[%s107 + $0x28] sm:$0xff]
    %v1303 = vld [vmem:[%s107 + $0x30] sm:$0xff]
    %v1304 = vld [vmem:[%s107 + $0x38] sm:$0xff]
    %v1305 = vld [vmem:[%s107 + $0x40] sm:$0xff]
    %v1306 = vld [vmem:[%s107 + $0x48] sm:$0xff]
    %v1307 = vld [vmem:[%s107 + $0x50] sm:$0xff]
    %v1308 = vld [vmem:[%s107 + $0x58] sm:$0xff]
    %v1309 = vld [vmem:[%s107 + $0x60] sm:$0xff]
    %v1310 = vld [vmem:[%s107 + $0x68] sm:$0xff]
    %v1311 = vld [vmem:[%s107 + $0x70] sm:$0xff]
    %v1312 = vld [vmem:[%s107 + $0x78] sm:$0xff]
    %v1313 = vld [vmem:[%s107 + $0x80] sm:$0xff]
    %v1314 = vld [vmem:[%s107 + $0x88] sm:$0xff]
    %v1315 = vld [vmem:[%s107 + $0x90] sm:$0xff]
    %v1316 = vld [vmem:[%s107 + $0x98] sm:$0xff]
    %v1317 = vld [vmem:[%s107 + $0xa0] sm:$0xff]
    %v1318 = vld [vmem:[%s107 + $0xa8] sm:$0xff]
    %v1319 = vld [vmem:[%s107 + $0xb0] sm:$0xff]
    %v1320 = vld [vmem:[%s107 + $0xb8] sm:$0xff]
    %v1321 = vld [vmem:[%s107 + $0xc0] sm:$0xff]
    %v1322 = vld [vmem:[%s107 + $0xc8] sm:$0xff]
    %v1323 = vld [vmem:[%s107 + $0xd0] sm:$0xff]
    %v1324 = vld [vmem:[%s107 + $0xd8] sm:$0xff]
    %v1325 = vld [vmem:[%s107 + $0xe0] sm:$0xff]
    %v1326 = vld [vmem:[%s107 + $0xe8] sm:$0xff]
    %v1327 = vld [vmem:[%s107 + $0xf0] sm:$0xff]
    %v1328 = vld [vmem:[%s107 + $0xf8] sm:$0xff]
    %v1329 = vld [vmem:[%s107 + $0x100] sm:$0xff]
    %v1330 = vld [vmem:[%s107 + $0x108] sm:$0xff]
    %v1331 = vld [vmem:[%s107 + $0x110] sm:$0xff]
    %v1332 = vld [vmem:[%s107 + $0x118] sm:$0xff]
    %v1333 = vld [vmem:[%s107 + $0x120] sm:$0xff]
    %v1334 = vld [vmem:[%s107 + $0x128] sm:$0xff]
    %v1335 = vld [vmem:[%s107 + $0x130] sm:$0xff]
    %v1336 = vld [vmem:[%s107 + $0x138] sm:$0xff]
    %v1337 = vld [vmem:[%s107 + $0x140] sm:$0xff]
    %v1338 = vld [vmem:[%s107 + $0x148] sm:$0xff]
    %v1339 = vld [vmem:[%s107 + $0x150] sm:$0xff]
    %v1340 = vld [vmem:[%s107 + $0x158] sm:$0xff]
    %v1341 = vld [vmem:[%s107 + $0x160] sm:$0xff]
    %v1342 = vld [vmem:[%s107 + $0x168] sm:$0xff]
    %v1343 = vld [vmem:[%s107 + $0x170] sm:$0xff]
    %v1344 = vld [vmem:[%s107 + $0x178] sm:$0xff]
    %v1345 = vld [vmem:[%s107 + $0x180] sm:$0xff]
    %v1346 = vld [vmem:[%s107 + $0x188] sm:$0xff]
    %v1347 = vld [vmem:[%s107 + $0x190] sm:$0xff]
    %v1348 = vld [vmem:[%s107 + $0x198] sm:$0xff]
    %v1349 = vld [vmem:[%s107 + $0x1a0] sm:$0xff]
    %v1350 = vld [vmem:[%s107 + $0x1a8] sm:$0xff]
    %v1351 = vld [vmem:[%s107 + $0x1b0] sm:$0xff]
    %v1352 = vld [vmem:[%s107 + $0x1b8] sm:$0xff]
    %v1353 = vld [vmem:[%s107 + $0x1c0] sm:$0xff]
    %v1354 = vld [vmem:[%s107 + $0x1c8] sm:$0xff]
    %v1355 = vld [vmem:[%s107 + $0x1d0] sm:$0xff]
    %v1356 = vld [vmem:[%s107 + $0x1d8] sm:$0xff]
    %v1357 = vld [vmem:[%s107 + $0x1e0] sm:$0xff]
    %v1358 = vld [vmem:[%s107 + $0x1e8] sm:$0xff]
    %v1359 = vld [vmem:[%s107 + $0x1f0] sm:$0xff]
    %v1360 = vld [vmem:[%s107 + $0x1f8] sm:$0xff]
    %v1361 = vld [vmem:[%s107 + $0x200] sm:$0xff]
    %v1362 = vld [vmem:[%s107 + $0x208] sm:$0xff]
    %v1363 = vld [vmem:[%s107 + $0x210] sm:$0xff]
    %v1364 = vld [vmem:[%s107 + $0x218] sm:$0xff]
    %v1365 = vld [vmem:[%s107 + $0x220] sm:$0xff]
    %v1366 = vld [vmem:[%s107 + $0x228] sm:$0xff]
    %v1367 = vld [vmem:[%s107 + $0x230] sm:$0xff]
    %v1368 = vld [vmem:[%s107 + $0x238] sm:$0xff]
    %v1369 = vld [vmem:[%s107 + $0x240] sm:$0xff]
    %v1370 = vld [vmem:[%s107 + $0x248] sm:$0xff]
    %v1371 = vld [vmem:[%s107 + $0x250] sm:$0xff]
    %v1372 = vld [vmem:[%s107 + $0x258] sm:$0xff]
    %v1373 = vld [vmem:[%s107 + $0x260] sm:$0xff]
    %v1374 = vld [vmem:[%s107 + $0x268] sm:$0xff]
    %v1375 = vld [vmem:[%s107 + $0x270] sm:$0xff]
    %v1376 = vld [vmem:[%s107 + $0x278] sm:$0xff]
    %v1377 = vld [vmem:[%s107 + $0x280] sm:$0xff]
    %v1378 = vld [vmem:[%s107 + $0x288] sm:$0xff]
    %v1379 = vld [vmem:[%s107 + $0x290] sm:$0xff]
    %v1380 = vld [vmem:[%s107 + $0x298] sm:$0xff]
    %v1381 = vld [vmem:[%s107 + $0x2a0] sm:$0xff]
    %v1382 = vld [vmem:[%s107 + $0x2a8] sm:$0xff]
    %v1383 = vld [vmem:[%s107 + $0x2b0] sm:$0xff]
    %v1384 = vld [vmem:[%s107 + $0x2b8] sm:$0xff]
    %v1385 = vld [vmem:[%s107 + $0x2c0] sm:$0xff]
    %v1386 = vld [vmem:[%s107 + $0x2c8] sm:$0xff]
    %v1387 = vld [vmem:[%s107 + $0x2d0] sm:$0xff]
    %v1388 = vld [vmem:[%s107 + $0x2d8] sm:$0xff]
    %v1389 = vld [vmem:[%s107 + $0x2e0] sm:$0xff]
    %v1390 = vld [vmem:[%s107 + $0x2e8] sm:$0xff]
    %v1391 = vld [vmem:[%s107 + $0x2f0] sm:$0xff]
    %v1392 = vld [vmem:[%s107 + $0x2f8] sm:$0xff]
    %v1393 = vld [vmem:[%s107 + $0x300] sm:$0xff]
    %v1394 = vld [vmem:[%s107 + $0x308] sm:$0xff]
    %v1395 = vld [vmem:[%s107 + $0x310] sm:$0xff]
    %v1396 = vld [vmem:[%s107 + $0x318] sm:$0xff]
    %v1397 = vld [vmem:[%s107 + $0x320] sm:$0xff]
    %v1398 = vld [vmem:[%s107 + $0x328] sm:$0xff]
    %v1399 = vld [vmem:[%s107 + $0x330] sm:$0xff]
    %v1400 = vld [vmem:[%s107 + $0x338] sm:$0xff]
    %v1401 = vld [vmem:[%s107 + $0x340] sm:$0xff]
    %v1402 = vld [vmem:[%s107 + $0x348] sm:$0xff]
    %v1403 = vld [vmem:[%s107 + $0x350] sm:$0xff]
    %v1404 = vld [vmem:[%s107 + $0x358] sm:$0xff]
    %v1405 = vld [vmem:[%s107 + $0x360] sm:$0xff]
    %v1406 = vld [vmem:[%s107 + $0x368] sm:$0xff]
    %v1407 = vld [vmem:[%s107 + $0x370] sm:$0xff]
    %v1408 = vld [vmem:[%s107 + $0x378] sm:$0xff]
    %v1409 = vld [vmem:[%s107 + $0x380] sm:$0xff]
    %v1410 = vld [vmem:[%s107 + $0x388] sm:$0xff]
    %v1411 = vld [vmem:[%s107 + $0x390] sm:$0xff]
    %v1412 = vld [vmem:[%s107 + $0x398] sm:$0xff]
    %v1413 = vld [vmem:[%s107 + $0x3a0] sm:$0xff]
    %v1414 = vld [vmem:[%s107 + $0x3a8] sm:$0xff]
    %v1415 = vld [vmem:[%s107 + $0x3b0] sm:$0xff]
    %v1416 = vld [vmem:[%s107 + $0x3b8] sm:$0xff]
    %v1417 = vld [vmem:[%s107 + $0x3c0] sm:$0xff]
    %v1418 = vld [vmem:[%s107 + $0x3c8] sm:$0xff]
    %v1419 = vld [vmem:[%s107 + $0x3d0] sm:$0xff]
    %v1420 = vld [vmem:[%s107 + $0x3d8] sm:$0xff]
    %v1421 = vld [vmem:[%s107 + $0x3e0] sm:$0xff]
    %v1422 = vld [vmem:[%s107 + $0x3e8] sm:$0xff]
    %v1423 = vld [vmem:[%s107 + $0x3f0] sm:$0xff]
    %v1424 = vld [vmem:[%s107 + $0x3f8] sm:$0xff]
    %v1553 = vunpack.c.l.b16 %v1297
    %v1554 = vunpack.c.h.b16 %v1297
    %v1555 = vunpack.c.l.b16 %v1298
    %v1556 = vunpack.c.h.b16 %v1298
    %v1557 = vunpack.c.l.b16 %v1299
    %v1558 = vunpack.c.h.b16 %v1299
    %v1559 = vunpack.c.l.b16 %v1300
    %v1560 = vunpack.c.h.b16 %v1300
    %v1561 = vunpack.c.l.b16 %v1301
    %v1562 = vunpack.c.h.b16 %v1301
    %v1563 = vunpack.c.l.b16 %v1302
    %v1564 = vunpack.c.h.b16 %v1302
    %v1565 = vunpack.c.l.b16 %v1303
    %v1566 = vunpack.c.h.b16 %v1303
    %v1567 = vunpack.c.l.b16 %v1304
    %v1568 = vunpack.c.h.b16 %v1304
    %v1569 = vunpack.c.l.b16 %v1305
    %v1570 = vunpack.c.h.b16 %v1305
    %v1571 = vunpack.c.l.b16 %v1306
    %v1572 = vunpack.c.h.b16 %v1306
    %v1573 = vunpack.c.l.b16 %v1307
    %v1574 = vunpack.c.h.b16 %v1307
    %v1575 = vunpack.c.l.b16 %v1308
    %v1576 = vunpack.c.h.b16 %v1308
    %v1577 = vunpack.c.l.b16 %v1309
    %v1578 = vunpack.c.h.b16 %v1309
    %v1579 = vunpack.c.l.b16 %v1310
    %v1580 = vunpack.c.h.b16 %v1310
    %v1581 = vunpack.c.l.b16 %v1311
    %v1582 = vunpack.c.h.b16 %v1311
    %v1583 = vunpack.c.l.b16 %v1312
    %v1584 = vunpack.c.h.b16 %v1312
    %v1585 = vunpack.c.l.b16 %v1313
    %v1586 = vunpack.c.h.b16 %v1313
    %v1587 = vunpack.c.l.b16 %v1314
    %v1588 = vunpack.c.h.b16 %v1314
    %v1589 = vunpack.c.l.b16 %v1315
    %v1590 = vunpack.c.h.b16 %v1315
    %v1591 = vunpack.c.l.b16 %v1316
    %v1592 = vunpack.c.h.b16 %v1316
    %v1593 = vunpack.c.l.b16 %v1317
    %v1594 = vunpack.c.h.b16 %v1317
    %v1595 = vunpack.c.l.b16 %v1318
    %v1596 = vunpack.c.h.b16 %v1318
    %v1597 = vunpack.c.l.b16 %v1319
    %v1598 = vunpack.c.h.b16 %v1319
    %v1599 = vunpack.c.l.b16 %v1320
    %v1600 = vunpack.c.h.b16 %v1320
    %v1601 = vunpack.c.l.b16 %v1321
    %v1602 = vunpack.c.h.b16 %v1321
    %v1603 = vunpack.c.l.b16 %v1322
    %v1604 = vunpack.c.h.b16 %v1322
    %v1605 = vunpack.c.l.b16 %v1323
    %v1606 = vunpack.c.h.b16 %v1323
    %v1607 = vunpack.c.l.b16 %v1324
    %v1608 = vunpack.c.h.b16 %v1324
    %v1609 = vunpack.c.l.b16 %v1325
    %v1610 = vunpack.c.h.b16 %v1325
    %v1611 = vunpack.c.l.b16 %v1326
    %v1612 = vunpack.c.h.b16 %v1326
    %v1613 = vunpack.c.l.b16 %v1327
    %v1614 = vunpack.c.h.b16 %v1327
    %v1615 = vunpack.c.l.b16 %v1328
    %v1616 = vunpack.c.h.b16 %v1328
    %v1617 = vunpack.c.l.b16 %v1329
    %v1618 = vunpack.c.h.b16 %v1329
    %v1619 = vunpack.c.l.b16 %v1330
    %v1620 = vunpack.c.h.b16 %v1330
    %v1621 = vunpack.c.l.b16 %v1331
    %v1622 = vunpack.c.h.b16 %v1331
    %v1623 = vunpack.c.l.b16 %v1332
    %v1624 = vunpack.c.h.b16 %v1332
    %v1625 = vunpack.c.l.b16 %v1333
    %v1626 = vunpack.c.h.b16 %v1333
    %v1627 = vunpack.c.l.b16 %v1334
    %v1628 = vunpack.c.h.b16 %v1334
    %v1629 = vunpack.c.l.b16 %v1335
    %v1630 = vunpack.c.h.b16 %v1335
    %v1631 = vunpack.c.l.b16 %v1336
    %v1632 = vunpack.c.h.b16 %v1336
    %v1633 = vunpack.c.l.b16 %v1337
    %v1634 = vunpack.c.h.b16 %v1337
    %v1635 = vunpack.c.l.b16 %v1338
    %v1636 = vunpack.c.h.b16 %v1338
    %v1637 = vunpack.c.l.b16 %v1339
    %v1638 = vunpack.c.h.b16 %v1339
    %v1639 = vunpack.c.l.b16 %v1340
    %v1640 = vunpack.c.h.b16 %v1340
    %v1641 = vunpack.c.l.b16 %v1341
    %v1642 = vunpack.c.h.b16 %v1341
    %v1643 = vunpack.c.l.b16 %v1342
    %v1644 = vunpack.c.h.b16 %v1342
    %v1645 = vunpack.c.l.b16 %v1343
    %v1646 = vunpack.c.h.b16 %v1343
    %v1647 = vunpack.c.l.b16 %v1344
    %v1648 = vunpack.c.h.b16 %v1344
    %v1649 = vunpack.c.l.b16 %v1345
    %v1650 = vunpack.c.h.b16 %v1345
    %v1651 = vunpack.c.l.b16 %v1346
    %v1652 = vunpack.c.h.b16 %v1346
    %v1653 = vunpack.c.l.b16 %v1347
    %v1654 = vunpack.c.h.b16 %v1347
    %v1655 = vunpack.c.l.b16 %v1348
    %v1656 = vunpack.c.h.b16 %v1348
    %v1657 = vunpack.c.l.b16 %v1349
    %v1658 = vunpack.c.h.b16 %v1349
    %v1659 = vunpack.c.l.b16 %v1350
    %v1660 = vunpack.c.h.b16 %v1350
    %v1661 = vunpack.c.l.b16 %v1351
    %v1662 = vunpack.c.h.b16 %v1351
    %v1663 = vunpack.c.l.b16 %v1352
    %v1664 = vunpack.c.h.b16 %v1352
    %v1665 = vunpack.c.l.b16 %v1353
    %v1666 = vunpack.c.h.b16 %v1353
    %v1667 = vunpack.c.l.b16 %v1354
    %v1668 = vunpack.c.h.b16 %v1354
    %v1669 = vunpack.c.l.b16 %v1355
    %v1670 = vunpack.c.h.b16 %v1355
    %v1671 = vunpack.c.l.b16 %v1356
    %v1672 = vunpack.c.h.b16 %v1356
    %v1673 = vunpack.c.l.b16 %v1357
    %v1674 = vunpack.c.h.b16 %v1357
    %v1675 = vunpack.c.l.b16 %v1358
    %v1676 = vunpack.c.h.b16 %v1358
    %v1677 = vunpack.c.l.b16 %v1359
    %v1678 = vunpack.c.h.b16 %v1359
    %v1679 = vunpack.c.l.b16 %v1360
    %v1680 = vunpack.c.h.b16 %v1360
    %v1681 = vunpack.c.l.b16 %v1361
    %v1682 = vunpack.c.h.b16 %v1361
    %v1683 = vunpack.c.l.b16 %v1362
    %v1684 = vunpack.c.h.b16 %v1362
    %v1685 = vunpack.c.l.b16 %v1363
    %v1686 = vunpack.c.h.b16 %v1363
    %v1687 = vunpack.c.l.b16 %v1364
    %v1688 = vunpack.c.h.b16 %v1364
    %v1689 = vunpack.c.l.b16 %v1365
    %v1690 = vunpack.c.h.b16 %v1365
    %v1691 = vunpack.c.l.b16 %v1366
    %v1692 = vunpack.c.h.b16 %v1366
    %v1693 = vunpack.c.l.b16 %v1367
    %v1694 = vunpack.c.h.b16 %v1367
    %v1695 = vunpack.c.l.b16 %v1368
    %v1696 = vunpack.c.h.b16 %v1368
    %v1697 = vunpack.c.l.b16 %v1369
    %v1698 = vunpack.c.h.b16 %v1369
    %v1699 = vunpack.c.l.b16 %v1370
    %v1700 = vunpack.c.h.b16 %v1370
    %v1701 = vunpack.c.l.b16 %v1371
    %v1702 = vunpack.c.h.b16 %v1371
    %v1703 = vunpack.c.l.b16 %v1372
    %v1704 = vunpack.c.h.b16 %v1372
    %v1705 = vunpack.c.l.b16 %v1373
    %v1706 = vunpack.c.h.b16 %v1373
    %v1707 = vunpack.c.l.b16 %v1374
    %v1708 = vunpack.c.h.b16 %v1374
    %v1709 = vunpack.c.l.b16 %v1375
    %v1710 = vunpack.c.h.b16 %v1375
    %v1711 = vunpack.c.l.b16 %v1376
    %v1712 = vunpack.c.h.b16 %v1376
    %v1713 = vunpack.c.l.b16 %v1377
    %v1714 = vunpack.c.h.b16 %v1377
    %v1715 = vunpack.c.l.b16 %v1378
    %v1716 = vunpack.c.h.b16 %v1378
    %v1717 = vunpack.c.l.b16 %v1379
    %v1718 = vunpack.c.h.b16 %v1379
    %v1719 = vunpack.c.l.b16 %v1380
    %v1720 = vunpack.c.h.b16 %v1380
    %v1721 = vunpack.c.l.b16 %v1381
    %v1722 = vunpack.c.h.b16 %v1381
    %v1723 = vunpack.c.l.b16 %v1382
    %v1724 = vunpack.c.h.b16 %v1382
    %v1725 = vunpack.c.l.b16 %v1383
    %v1726 = vunpack.c.h.b16 %v1383
    %v1727 = vunpack.c.l.b16 %v1384
    %v1728 = vunpack.c.h.b16 %v1384
    %v1729 = vunpack.c.l.b16 %v1385
    %v1730 = vunpack.c.h.b16 %v1385
    %v1731 = vunpack.c.l.b16 %v1386
    %v1732 = vunpack.c.h.b16 %v1386
    %v1733 = vunpack.c.l.b16 %v1387
    %v1734 = vunpack.c.h.b16 %v1387
    %v1735 = vunpack.c.l.b16 %v1388
    %v1736 = vunpack.c.h.b16 %v1388
    %v1737 = vunpack.c.l.b16 %v1389
    %v1738 = vunpack.c.h.b16 %v1389
    %v1739 = vunpack.c.l.b16 %v1390
    %v1740 = vunpack.c.h.b16 %v1390
    %v1741 = vunpack.c.l.b16 %v1391
    %v1742 = vunpack.c.h.b16 %v1391
    %v1743 = vunpack.c.l.b16 %v1392
    %v1744 = vunpack.c.h.b16 %v1392
    %v1745 = vunpack.c.l.b16 %v1393
    %v1746 = vunpack.c.h.b16 %v1393
    %v1747 = vunpack.c.l.b16 %v1394
    %v1748 = vunpack.c.h.b16 %v1394
    %v1749 = vunpack.c.l.b16 %v1395
    %v1750 = vunpack.c.h.b16 %v1395
    %v1751 = vunpack.c.l.b16 %v1396
    %v1752 = vunpack.c.h.b16 %v1396
    %v1753 = vunpack.c.l.b16 %v1397
    %v1754 = vunpack.c.h.b16 %v1397
    %v1755 = vunpack.c.l.b16 %v1398
    %v1756 = vunpack.c.h.b16 %v1398
    %v1757 = vunpack.c.l.b16 %v1399
    %v1758 = vunpack.c.h.b16 %v1399
    %v1759 = vunpack.c.l.b16 %v1400
    %v1760 = vunpack.c.h.b16 %v1400
    %v1761 = vunpack.c.l.b16 %v1401
    %v1762 = vunpack.c.h.b16 %v1401
    %v1763 = vunpack.c.l.b16 %v1402
    %v1764 = vunpack.c.h.b16 %v1402
    %v1765 = vunpack.c.l.b16 %v1403
    %v1766 = vunpack.c.h.b16 %v1403
    %v1767 = vunpack.c.l.b16 %v1404
    %v1768 = vunpack.c.h.b16 %v1404
    %v1769 = vunpack.c.l.b16 %v1405
    %v1770 = vunpack.c.h.b16 %v1405
    %v1771 = vunpack.c.l.b16 %v1406
    %v1772 = vunpack.c.h.b16 %v1406
    %v1773 = vunpack.c.l.b16 %v1407
    %v1774 = vunpack.c.h.b16 %v1407
    %v1775 = vunpack.c.l.b16 %v1408
    %v1776 = vunpack.c.h.b16 %v1408
    %v1777 = vunpack.c.l.b16 %v1409
    %v1778 = vunpack.c.h.b16 %v1409
    %v1779 = vunpack.c.l.b16 %v1410
    %v1780 = vunpack.c.h.b16 %v1410
    %v1781 = vunpack.c.l.b16 %v1411
    %v1782 = vunpack.c.h.b16 %v1411
    %v1783 = vunpack.c.l.b16 %v1412
    %v1784 = vunpack.c.h.b16 %v1412
    %v1785 = vunpack.c.l.b16 %v1413
    %v1786 = vunpack.c.h.b16 %v1413
    %v1787 = vunpack.c.l.b16 %v1414
    %v1788 = vunpack.c.h.b16 %v1414
    %v1789 = vunpack.c.l.b16 %v1415
    %v1790 = vunpack.c.h.b16 %v1415
    %v1791 = vunpack.c.l.b16 %v1416
    %v1792 = vunpack.c.h.b16 %v1416
    %v1793 = vunpack.c.l.b16 %v1417
    %v1794 = vunpack.c.h.b16 %v1417
    %v1795 = vunpack.c.l.b16 %v1418
    %v1796 = vunpack.c.h.b16 %v1418
    %v1797 = vunpack.c.l.b16 %v1419
    %v1798 = vunpack.c.h.b16 %v1419
    %v1799 = vunpack.c.l.b16 %v1420
    %v1800 = vunpack.c.h.b16 %v1420
    %v1801 = vunpack.c.l.b16 %v1421
    %v1802 = vunpack.c.h.b16 %v1421
    %v1803 = vunpack.c.l.b16 %v1422
    %v1804 = vunpack.c.h.b16 %v1422
    %v1805 = vunpack.c.l.b16 %v1423
    %v1806 = vunpack.c.h.b16 %v1423
    %v1807 = vunpack.c.l.b16 %v1424
    %v1808 = vunpack.c.h.b16 %v1424
    %v1809 = vpack.c.b16 %v1557, %v1553
    %v1810 = vpack.c.b16 %v1558, %v1554
    %v1811 = vpack.c.b16 %v1559, %v1555
    %v1812 = vpack.c.b16 %v1560, %v1556
    %v1813 = vpack.c.b16 %v1565, %v1561
    %v1814 = vpack.c.b16 %v1566, %v1562
    %v1815 = vpack.c.b16 %v1567, %v1563
    %v1816 = vpack.c.b16 %v1568, %v1564
    %v1817 = vpack.c.b16 %v1573, %v1569
    %v1818 = vpack.c.b16 %v1574, %v1570
    %v1819 = vpack.c.b16 %v1575, %v1571
    %v1820 = vpack.c.b16 %v1576, %v1572
    %v1821 = vpack.c.b16 %v1581, %v1577
    %v1822 = vpack.c.b16 %v1582, %v1578
    %v1823 = vpack.c.b16 %v1583, %v1579
    %v1824 = vpack.c.b16 %v1584, %v1580
    %v1825 = vpack.c.b16 %v1589, %v1585
    %v1826 = vpack.c.b16 %v1590, %v1586
    %v1827 = vpack.c.b16 %v1591, %v1587
    %v1828 = vpack.c.b16 %v1592, %v1588
    %v1829 = vpack.c.b16 %v1597, %v1593
    %v1830 = vpack.c.b16 %v1598, %v1594
    %v1831 = vpack.c.b16 %v1599, %v1595
    %v1832 = vpack.c.b16 %v1600, %v1596
    %v1833 = vpack.c.b16 %v1605, %v1601
    %v1834 = vpack.c.b16 %v1606, %v1602
    %v1835 = vpack.c.b16 %v1607, %v1603
    %v1836 = vpack.c.b16 %v1608, %v1604
    %v1837 = vpack.c.b16 %v1613, %v1609
    %v1838 = vpack.c.b16 %v1614, %v1610
    %v1839 = vpack.c.b16 %v1615, %v1611
    %v1840 = vpack.c.b16 %v1616, %v1612
    %v1841 = vpack.c.b16 %v1621, %v1617
    %v1842 = vpack.c.b16 %v1622, %v1618
    %v1843 = vpack.c.b16 %v1623, %v1619
    %v1844 = vpack.c.b16 %v1624, %v1620
    %v1845 = vpack.c.b16 %v1629, %v1625
    %v1846 = vpack.c.b16 %v1630, %v1626
    %v1847 = vpack.c.b16 %v1631, %v1627
    %v1848 = vpack.c.b16 %v1632, %v1628
    %v1849 = vpack.c.b16 %v1637, %v1633
    %v1850 = vpack.c.b16 %v1638, %v1634
    %v1851 = vpack.c.b16 %v1639, %v1635
    %v1852 = vpack.c.b16 %v1640, %v1636
    %v1853 = vpack.c.b16 %v1645, %v1641
    %v1854 = vpack.c.b16 %v1646, %v1642
    %v1855 = vpack.c.b16 %v1647, %v1643
    %v1856 = vpack.c.b16 %v1648, %v1644
    %v1857 = vpack.c.b16 %v1653, %v1649
    %v1858 = vpack.c.b16 %v1654, %v1650
    %v1859 = vpack.c.b16 %v1655, %v1651
    %v1860 = vpack.c.b16 %v1656, %v1652
    %v1861 = vpack.c.b16 %v1661, %v1657
    %v1862 = vpack.c.b16 %v1662, %v1658
    %v1863 = vpack.c.b16 %v1663, %v1659
    %v1864 = vpack.c.b16 %v1664, %v1660
    %v1865 = vpack.c.b16 %v1669, %v1665
    %v1866 = vpack.c.b16 %v1670, %v1666
    %v1867 = vpack.c.b16 %v1671, %v1667
    %v1868 = vpack.c.b16 %v1672, %v1668
    %v1869 = vpack.c.b16 %v1677, %v1673
    %v1870 = vpack.c.b16 %v1678, %v1674
    %v1871 = vpack.c.b16 %v1679, %v1675
    %v1872 = vpack.c.b16 %v1680, %v1676
    %v1873 = vpack.c.b16 %v1685, %v1681
    %v1874 = vpack.c.b16 %v1686, %v1682
    %v1875 = vpack.c.b16 %v1687, %v1683
    %v1876 = vpack.c.b16 %v1688, %v1684
    %v1877 = vpack.c.b16 %v1693, %v1689
    %v1878 = vpack.c.b16 %v1694, %v1690
    %v1879 = vpack.c.b16 %v1695, %v1691
    %v1880 = vpack.c.b16 %v1696, %v1692
    %v1881 = vpack.c.b16 %v1701, %v1697
    %v1882 = vpack.c.b16 %v1702, %v1698
    %v1883 = vpack.c.b16 %v1703, %v1699
    %v1884 = vpack.c.b16 %v1704, %v1700
    %v1885 = vpack.c.b16 %v1709, %v1705
    %v1886 = vpack.c.b16 %v1710, %v1706
    %v1887 = vpack.c.b16 %v1711, %v1707
    %v1888 = vpack.c.b16 %v1712, %v1708
    %v1889 = vpack.c.b16 %v1717, %v1713
    %v1890 = vpack.c.b16 %v1718, %v1714
    %v1891 = vpack.c.b16 %v1719, %v1715
    %v1892 = vpack.c.b16 %v1720, %v1716
    %v1893 = vpack.c.b16 %v1725, %v1721
    %v1894 = vpack.c.b16 %v1726, %v1722
    %v1895 = vpack.c.b16 %v1727, %v1723
    %v1896 = vpack.c.b16 %v1728, %v1724
    %v1897 = vpack.c.b16 %v1733, %v1729
    %v1898 = vpack.c.b16 %v1734, %v1730
    %v1899 = vpack.c.b16 %v1735, %v1731
    %v1900 = vpack.c.b16 %v1736, %v1732
    %v1901 = vpack.c.b16 %v1741, %v1737
    %v1902 = vpack.c.b16 %v1742, %v1738
    %v1903 = vpack.c.b16 %v1743, %v1739
    %v1904 = vpack.c.b16 %v1744, %v1740
    %v1905 = vpack.c.b16 %v1749, %v1745
    %v1906 = vpack.c.b16 %v1750, %v1746
    %v1907 = vpack.c.b16 %v1751, %v1747
    %v1908 = vpack.c.b16 %v1752, %v1748
    %v1909 = vpack.c.b16 %v1757, %v1753
    %v1910 = vpack.c.b16 %v1758, %v1754
    %v1911 = vpack.c.b16 %v1759, %v1755
    %v1912 = vpack.c.b16 %v1760, %v1756
    %v1913 = vpack.c.b16 %v1765, %v1761
    %v1914 = vpack.c.b16 %v1766, %v1762
    %v1915 = vpack.c.b16 %v1767, %v1763
    %v1916 = vpack.c.b16 %v1768, %v1764
    %v1917 = vpack.c.b16 %v1773, %v1769
    %v1918 = vpack.c.b16 %v1774, %v1770
    %v1919 = vpack.c.b16 %v1775, %v1771
    %v1920 = vpack.c.b16 %v1776, %v1772
    %v1921 = vpack.c.b16 %v1781, %v1777
    %v1922 = vpack.c.b16 %v1782, %v1778
    %v1923 = vpack.c.b16 %v1783, %v1779
    %v1924 = vpack.c.b16 %v1784, %v1780
    %v1925 = vpack.c.b16 %v1789, %v1785
    %v1926 = vpack.c.b16 %v1790, %v1786
    %v1927 = vpack.c.b16 %v1791, %v1787
    %v1928 = vpack.c.b16 %v1792, %v1788
    %v1929 = vpack.c.b16 %v1797, %v1793
    %v1930 = vpack.c.b16 %v1798, %v1794
    %v1931 = vpack.c.b16 %v1799, %v1795
    %v1932 = vpack.c.b16 %v1800, %v1796
    %v1933 = vpack.c.b16 %v1805, %v1801
    %v1934 = vpack.c.b16 %v1806, %v1802
    %v1935 = vpack.c.b16 %v1807, %v1803
    %v1936 = vpack.c.b16 %v1808, %v1804
    %2065 = vmatpush.bf16.msra.mxu0 %v1837
    %2066 = vmatpush.bf16.msra.mxu0 %v1833
    %2067 = vmatpush.bf16.msra.mxu0 %v1829
    %2068 = vmatpush.bf16.msra.mxu0 %v1825
    %2069 = vmatpush.bf16.msra.mxu0 %v1821
    %2070 = vmatpush.bf16.msra.mxu0 %v1817
    %2071 = vmatpush.bf16.msra.mxu0 %v1813
    %2072 = vmatpush.bf16.msra.mxu0 %v1809
    %2073 = vmatmul.bf16.gmra.mxu0 %v1277
    %v2074 = vpop.f32.mrf.mxu0
    %v2075 = vadd.f32 0.0, %v2074
    %v2076 = vpop.f32.mrf.mxu0
    %2077 = vdwg.mxu0
    %2078 = vmatpush.bf16.msra.mxu0 %v1869
    %2079 = vmatpush.bf16.msra.mxu0 %v1865
    %2080 = vmatpush.bf16.msra.mxu0 %v1861
    %2081 = vmatpush.bf16.msra.mxu0 %v1857
    %2082 = vmatpush.bf16.msra.mxu0 %v1853
    %2083 = vmatpush.bf16.msra.mxu0 %v1849
    %2084 = vmatpush.bf16.msra.mxu0 %v1845
    %2085 = vmatpush.bf16.msra.mxu0 %v1841
    %2086 = vmatmul.bf16.gmra.mxu0 %v1278
    %v2087 = vpop.f32.mrf.mxu0
    %v2088 = vadd.f32 %v2075, %v2087
    %v2089 = vpop.f32.mrf.mxu0
    %2090 = vdwg.mxu0
    %2091 = vmatpush.bf16.msra.mxu0 %v1901
    %2092 = vmatpush.bf16.msra.mxu0 %v1897
    %2093 = vmatpush.bf16.msra.mxu0 %v1893
    %2094 = vmatpush.bf16.msra.mxu0 %v1889
    %2095 = vmatpush.bf16.msra.mxu0 %v1885
    %2096 = vmatpush.bf16.msra.mxu0 %v1881
    %2097 = vmatpush.bf16.msra.mxu0 %v1877
    %2098 = vmatpush.bf16.msra.mxu0 %v1873
    %2099 = vmatmul.bf16.gmra.mxu0 %v1279
    %v2100 = vpop.f32.mrf.mxu0
    %v2101 = vadd.f32 %v2088, %v2100
    %v2102 = vpop.f32.mrf.mxu0
    %2103 = vdwg.mxu0
    %2104 = vmatpush.bf16.msra.mxu0 %v1933
    %2105 = vmatpush.bf16.msra.mxu0 %v1929
    %2106 = vmatpush.bf16.msra.mxu0 %v1925
    %2107 = vmatpush.bf16.msra.mxu0 %v1921
    %2108 = vmatpush.bf16.msra.mxu0 %v1917
    %2109 = vmatpush.bf16.msra.mxu0 %v1913
    %2110 = vmatpush.bf16.msra.mxu0 %v1909
    %2111 = vmatpush.bf16.msra.mxu0 %v1905
    %2112 = vmatmul.bf16.gmra.mxu0 %v1280
    %v2113 = vpop.f32.mrf.mxu0
    %v2114 = vadd.f32 %v2101, %v2113
    %v2115 = vpop.f32.mrf.mxu0
    %2116 = vdwg.mxu0
    %2117 = vmatpush.bf16.msra.mxu0 %v1838
    %2118 = vmatpush.bf16.msra.mxu0 %v1834
    %2119 = vmatpush.bf16.msra.mxu0 %v1830
    %2120 = vmatpush.bf16.msra.mxu0 %v1826
    %2121 = vmatpush.bf16.msra.mxu0 %v1822
    %2122 = vmatpush.bf16.msra.mxu0 %v1818
    %2123 = vmatpush.bf16.msra.mxu0 %v1814
    %2124 = vmatpush.bf16.msra.mxu0 %v1810
    %2125 = vmatmul.bf16.gmra.mxu0 %v1277
    %v2126 = vpop.f32.mrf.mxu0
    %v2127 = vadd.f32 0.0, %v2126
    %v2128 = vpop.f32.mrf.mxu0
    %2129 = vdwg.mxu0
    %2130 = vmatpush.bf16.msra.mxu0 %v1870
    %2131 = vmatpush.bf16.msra.mxu0 %v1866
    %2132 = vmatpush.bf16.msra.mxu0 %v1862
    %2133 = vmatpush.bf16.msra.mxu0 %v1858
    %2134 = vmatpush.bf16.msra.mxu0 %v1854
    %2135 = vmatpush.bf16.msra.mxu0 %v1850
    %2136 = vmatpush.bf16.msra.mxu0 %v1846
    %2137 = vmatpush.bf16.msra.mxu0 %v1842
    %2138 = vmatmul.bf16.gmra.mxu0 %v1278
    %v2139 = vpop.f32.mrf.mxu0
    %v2140 = vadd.f32 %v2127, %v2139
    %v2141 = vpop.f32.mrf.mxu0
    %2142 = vdwg.mxu0
    %2143 = vmatpush.bf16.msra.mxu0 %v1902
    %2144 = vmatpush.bf16.msra.mxu0 %v1898
    %2145 = vmatpush.bf16.msra.mxu0 %v1894
    %2146 = vmatpush.bf16.msra.mxu0 %v1890
    %2147 = vmatpush.bf16.msra.mxu0 %v1886
    %2148 = vmatpush.bf16.msra.mxu0 %v1882
    %2149 = vmatpush.bf16.msra.mxu0 %v1878
    %2150 = vmatpush.bf16.msra.mxu0 %v1874
    %2151 = vmatmul.bf16.gmra.mxu0 %v1279
    %v2152 = vpop.f32.mrf.mxu0
    %v2153 = vadd.f32 %v2140, %v2152
    %v2154 = vpop.f32.mrf.mxu0
    %2155 = vdwg.mxu0
    %2156 = vmatpush.bf16.msra.mxu0 %v1934
    %2157 = vmatpush.bf16.msra.mxu0 %v1930
    %2158 = vmatpush.bf16.msra.mxu0 %v1926
    %2159 = vmatpush.bf16.msra.mxu0 %v1922
    %2160 = vmatpush.bf16.msra.mxu0 %v1918
    %2161 = vmatpush.bf16.msra.mxu0 %v1914
    %2162 = vmatpush.bf16.msra.mxu0 %v1910
    %2163 = vmatpush.bf16.msra.mxu0 %v1906
    %2164 = vmatmul.bf16.gmra.mxu0 %v1280
    %v2165 = vpop.f32.mrf.mxu0
    %v2166 = vadd.f32 %v2153, %v2165
    %v2167 = vpop.f32.mrf.mxu0
    %2168 = vdwg.mxu0
    %2169 = vmatpush.bf16.msra.mxu0 %v1839
    %2170 = vmatpush.bf16.msra.mxu0 %v1835
    %2171 = vmatpush.bf16.msra.mxu0 %v1831
    %2172 = vmatpush.bf16.msra.mxu0 %v1827
    %2173 = vmatpush.bf16.msra.mxu0 %v1823
    %2174 = vmatpush.bf16.msra.mxu0 %v1819
    %2175 = vmatpush.bf16.msra.mxu0 %v1815
    %2176 = vmatpush.bf16.msra.mxu0 %v1811
    %2177 = vmatmul.bf16.gmra.mxu0 %v1277
    %v2178 = vpop.f32.mrf.mxu0
    %v2179 = vadd.f32 0.0, %v2178
    %v2180 = vpop.f32.mrf.mxu0
    %2181 = vdwg.mxu0
    %2182 = vmatpush.bf16.msra.mxu0 %v1871
    %2183 = vmatpush.bf16.msra.mxu0 %v1867
    %2184 = vmatpush.bf16.msra.mxu0 %v1863
    %2185 = vmatpush.bf16.msra.mxu0 %v1859
    %2186 = vmatpush.bf16.msra.mxu0 %v1855
    %2187 = vmatpush.bf16.msra.mxu0 %v1851
    %2188 = vmatpush.bf16.msra.mxu0 %v1847
    %2189 = vmatpush.bf16.msra.mxu0 %v1843
    %2190 = vmatmul.bf16.gmra.mxu0 %v1278
    %v2191 = vpop.f32.mrf.mxu0
    %v2192 = vadd.f32 %v2179, %v2191
    %v2193 = vpop.f32.mrf.mxu0
    %2194 = vdwg.mxu0
    %2195 = vmatpush.bf16.msra.mxu0 %v1903
    %2196 = vmatpush.bf16.msra.mxu0 %v1899
    %2197 = vmatpush.bf16.msra.mxu0 %v1895
    %2198 = vmatpush.bf16.msra.mxu0 %v1891
    %2199 = vmatpush.bf16.msra.mxu0 %v1887
    %2200 = vmatpush.bf16.msra.mxu0 %v1883
    %2201 = vmatpush.bf16.msra.mxu0 %v1879
    %2202 = vmatpush.bf16.msra.mxu0 %v1875
    %2203 = vmatmul.bf16.gmra.mxu0 %v1279
    %v2204 = vpop.f32.mrf.mxu0
    %v2205 = vadd.f32 %v2192, %v2204
    %v2206 = vpop.f32.mrf.mxu0
    %2207 = vdwg.mxu0
    %2208 = vmatpush.bf16.msra.mxu0 %v1935
    %2209 = vmatpush.bf16.msra.mxu0 %v1931
    %2210 = vmatpush.bf16.msra.mxu0 %v1927
    %2211 = vmatpush.bf16.msra.mxu0 %v1923
    %2212 = vmatpush.bf16.msra.mxu0 %v1919
    %2213 = vmatpush.bf16.msra.mxu0 %v1915
    %2214 = vmatpush.bf16.msra.mxu0 %v1911
    %2215 = vmatpush.bf16.msra.mxu0 %v1907
    %2216 = vmatmul.bf16.gmra.mxu0 %v1280
    %v2217 = vpop.f32.mrf.mxu0
    %v2218 = vadd.f32 %v2205, %v2217
    %v2219 = vpop.f32.mrf.mxu0
    %2220 = vdwg.mxu0
    %2221 = vmatpush.bf16.msra.mxu0 %v1840
    %2222 = vmatpush.bf16.msra.mxu0 %v1836
    %2223 = vmatpush.bf16.msra.mxu0 %v1832
    %2224 = vmatpush.bf16.msra.mxu0 %v1828
    %2225 = vmatpush.bf16.msra.mxu0 %v1824
    %2226 = vmatpush.bf16.msra.mxu0 %v1820
    %2227 = vmatpush.bf16.msra.mxu0 %v1816
    %2228 = vmatpush.bf16.msra.mxu0 %v1812
    %2229 = vmatmul.bf16.gmra.mxu0 %v1277
    %v2230 = vpop.f32.mrf.mxu0
    %v2231 = vadd.f32 0.0, %v2230
    %v2232 = vpop.f32.mrf.mxu0
    %2233 = vdwg.mxu0
    %2234 = vmatpush.bf16.msra.mxu0 %v1872
    %2235 = vmatpush.bf16.msra.mxu0 %v1868
    %2236 = vmatpush.bf16.msra.mxu0 %v1864
    %2237 = vmatpush.bf16.msra.mxu0 %v1860
    %2238 = vmatpush.bf16.msra.mxu0 %v1856
    %2239 = vmatpush.bf16.msra.mxu0 %v1852
    %2240 = vmatpush.bf16.msra.mxu0 %v1848
    %2241 = vmatpush.bf16.msra.mxu0 %v1844
    %2242 = vmatmul.bf16.gmra.mxu0 %v1278
    %v2243 = vpop.f32.mrf.mxu0
    %v2244 = vadd.f32 %v2231, %v2243
    %v2245 = vpop.f32.mrf.mxu0
    %2246 = vdwg.mxu0
    %2247 = vmatpush.bf16.msra.mxu0 %v1904
    %2248 = vmatpush.bf16.msra.mxu0 %v1900
    %2249 = vmatpush.bf16.msra.mxu0 %v1896
    %2250 = vmatpush.bf16.msra.mxu0 %v1892
    %2251 = vmatpush.bf16.msra.mxu0 %v1888
    %2252 = vmatpush.bf16.msra.mxu0 %v1884
    %2253 = vmatpush.bf16.msra.mxu0 %v1880
    %2254 = vmatpush.bf16.msra.mxu0 %v1876
    %2255 = vmatmul.bf16.gmra.mxu0 %v1279
    %v2256 = vpop.f32.mrf.mxu0
    %v2257 = vadd.f32 %v2244, %v2256
    %v2258 = vpop.f32.mrf.mxu0
    %2259 = vdwg.mxu0
    %2260 = vmatpush.bf16.msra.mxu0 %v1936
    %2261 = vmatpush.bf16.msra.mxu0 %v1932
    %2262 = vmatpush.bf16.msra.mxu0 %v1928
    %2263 = vmatpush.bf16.msra.mxu0 %v1924
    %2264 = vmatpush.bf16.msra.mxu0 %v1920
    %2265 = vmatpush.bf16.msra.mxu0 %v1916
    %2266 = vmatpush.bf16.msra.mxu0 %v1912
    %2267 = vmatpush.bf16.msra.mxu0 %v1908
    %2268 = vmatmul.bf16.gmra.mxu0 %v1280
    %v2269 = vpop.f32.mrf.mxu0
    %v2270 = vadd.f32 %v2257, %v2269
    %v2271 = vpop.f32.mrf.mxu0
    %2272 = vdwg.mxu0
    %v2273 = vrot.slane %v2114, 4
    %v2274 = vadd.f32 %v2114, %v2273
    %v2275 = vrot.slane %v2274, 2
    %v2276 = vadd.f32 %v2274, %v2275
    %v2277 = vrot.slane %v2276, 1
    %v2278 = vadd.f32 %v2276, %v2277
    %v2279 = vrot.slane %v2166, 4
    %v2280 = vadd.f32 %v2166, %v2279
    %v2281 = vrot.slane %v2280, 2
    %v2282 = vadd.f32 %v2280, %v2281
    %v2283 = vrot.slane %v2282, 1
    %v2284 = vadd.f32 %v2282, %v2283
    %v2285 = vrot.slane %v2218, 4
    %v2286 = vadd.f32 %v2218, %v2285
    %v2287 = vrot.slane %v2286, 2
    %v2288 = vadd.f32 %v2286, %v2287
    %v2289 = vrot.slane %v2288, 1
    %v2290 = vadd.f32 %v2288, %v2289
    %v2291 = vrot.slane %v2270, 4
    %v2292 = vadd.f32 %v2270, %v2291
    %v2293 = vrot.slane %v2292, 2
    %v2294 = vadd.f32 %v2292, %v2293
    %v2295 = vrot.slane %v2294, 1
    %v2296 = vadd.f32 %v2294, %v2295
    %v2297 = vmul.f32 %v2114, %v2114
    %v2298 = vmul.f32 %v2166, %v2166
    %v2299 = vmul.f32 %v2218, %v2218
    %v2300 = vmul.f32 %v2270, %v2270
    %v2301 = vrot.slane %v2297, 4
    %v2302 = vadd.f32 %v2297, %v2301
    %v2303 = vrot.slane %v2302, 2
    %v2304 = vadd.f32 %v2302, %v2303
    %v2305 = vrot.slane %v2304, 1
    %v2306 = vadd.f32 %v2304, %v2305
    %v2307 = vrot.slane %v2298, 4
    %v2308 = vadd.f32 %v2298, %v2307
    %v2309 = vrot.slane %v2308, 2
    %v2310 = vadd.f32 %v2308, %v2309
    %v2311 = vrot.slane %v2310, 1
    %v2312 = vadd.f32 %v2310, %v2311
    %v2313 = vrot.slane %v2299, 4
    %v2314 = vadd.f32 %v2299, %v2313
    %v2315 = vrot.slane %v2314, 2
    %v2316 = vadd.f32 %v2314, %v2315
    %v2317 = vrot.slane %v2316, 1
    %v2318 = vadd.f32 %v2316, %v2317
    %v2319 = vrot.slane %v2300, 4
    %v2320 = vadd.f32 %v2300, %v2319
    %v2321 = vrot.slane %v2320, 2
    %v2322 = vadd.f32 %v2320, %v2321
    %v2323 = vrot.slane %v2322, 1
    %v2324 = vadd.f32 %v2322, %v2323
    %v2325 = vmul.f32 %v2278, 0.125
    %v2326 = vmul.f32 %v2284, 0.125
    %v2327 = vmul.f32 %v2290, 0.125
    %v2328 = vmul.f32 %v2296, 0.125
    %v2329 = vmul.f32 %v2306, 0.125
    %v2330 = vmul.f32 %v2312, 0.125
    %v2331 = vmul.f32 %v2318, 0.125
    %v2332 = vmul.f32 %v2324, 0.125
    %v2333 = vmul.f32 %v2325, %v2325
    %v2334 = vmul.f32 %v2326, %v2326
    %v2335 = vmul.f32 %v2327, %v2327
    %v2336 = vmul.f32 %v2328, %v2328
    %v2337 = vsub.f32 %v2329, %v2333
    %v2338 = vsub.f32 %v2330, %v2334
    %v2339 = vsub.f32 %v2331, %v2335
    %v2340 = vsub.f32 %v2332, %v2336
    %v2341 = vmax.f32 %v2337, 0.0
    %v2342 = vmax.f32 %v2338, 0.0
    %v2343 = vmax.f32 %v2339, 0.0
    %v2344 = vmax.f32 %v2340, 0.0
    %s2345 = scalar_lea.vmem [#allocation7], 4
    %v2346 = vld [vmem:[%s2345] sm:$0xf]
    %v2347 = vadd.f32 %v2341, 1e-05
    %v2348 = vadd.f32 %v2342, 1e-05
    %v2349 = vadd.f32 %v2343, 1e-05
    %v2350 = vadd.f32 %v2344, 1e-05
    %v2351 = vrsqrt.pop %v2347
    %v2352 = vmul.f32 %v2351, %v2347
    %v2353 = vmul.f32 %v2352, %v2351
    %v2354 = vmul.f32 0.5, %v2353
    %v2355 = vsub.f32 1.5, %v2354
    %v2356 = vmul.f32 %v2351, %v2355
    %vm2357 = vweird.f32 %v2347
    %vm2358 = vweird.f32 %v2351
    %vm2359 = vmor %vm2357, %vm2358
    %v2360 = vsel %vm2359, %v2351, %v2356
    %v2361 = vrsqrt.pop %v2348
    %v2362 = vmul.f32 %v2361, %v2348
    %v2363 = vmul.f32 %v2362, %v2361
    %v2364 = vmul.f32 0.5, %v2363
    %v2365 = vsub.f32 1.5, %v2364
    %v2366 = vmul.f32 %v2361, %v2365
    %vm2367 = vweird.f32 %v2348
    %vm2368 = vweird.f32 %v2361
    %vm2369 = vmor %vm2367, %vm2368
    %v2370 = vsel %vm2369, %v2361, %v2366
    %v2371 = vrsqrt.pop %v2349
    %v2372 = vmul.f32 %v2371, %v2349
    %v2373 = vmul.f32 %v2372, %v2371
    %v2374 = vmul.f32 0.5, %v2373
    %v2375 = vsub.f32 1.5, %v2374
    %v2376 = vmul.f32 %v2371, %v2375
    %vm2377 = vweird.f32 %v2349
    %vm2378 = vweird.f32 %v2371
    %vm2379 = vmor %vm2377, %vm2378
    %v2380 = vsel %vm2379, %v2371, %v2376
    %v2381 = vrsqrt.pop %v2350
    %v2382 = vmul.f32 %v2381, %v2350
    %v2383 = vmul.f32 %v2382, %v2381
    %v2384 = vmul.f32 0.5, %v2383
    %v2385 = vsub.f32 1.5, %v2384
    %v2386 = vmul.f32 %v2381, %v2385
    %vm2387 = vweird.f32 %v2350
    %vm2388 = vweird.f32 %v2381
    %vm2389 = vmor %vm2387, %vm2388
    %v2390 = vsel %vm2389, %v2381, %v2386
    %v2395 = vrot.slane %v2370, 7
    %v2396 = vrot.slane %v2380, 6
    %v2397 = vrot.slane %v2390, 5
    %v2398 = vsel %vm1222, %v2360, %v2395
    %v2399 = vsel %vm1224, %v2396, %v2397
    %v2400 = vsel %vm1226, %v2398, %v2399
    %v2402 = vmul.f32 %v2346, %v2400
    %s2403 = scalar_lea.vmem [#allocation9], 4
    %v2404 = vld [vmem:[%s2403] sm:$0xf]
    %v2406 = vperm.slane %v2402, 0
    %v2407 = vperm.slane %v2402, 1
    %v2408 = vperm.slane %v2402, 2
    %v2409 = vperm.slane %v2402, 3
    %v2414 = vmul.f32 %v2325, %v2406
    %v2415 = vmul.f32 %v2326, %v2407
    %v2416 = vmul.f32 %v2327, %v2408
    %v2417 = vmul.f32 %v2328, %v2409
    %v2422 = vrot.slane %v2415, 7
    %v2423 = vrot.slane %v2416, 6
    %v2424 = vrot.slane %v2417, 5
    %v2425 = vsel %vm1222, %v2414, %v2422
    %v2426 = vsel %vm1224, %v2423, %v2424
    %v2427 = vsel %vm1226, %v2425, %v2426
    %v2429 = vsub.f32 %v2404, %v2427
    %v2430 = vmul.f32 %v2114, %v2406
    %v2431 = vmul.f32 %v2166, %v2407
    %v2432 = vmul.f32 %v2218, %v2408
    %v2433 = vmul.f32 %v2270, %v2409
    %v2435 = vperm.slane %v2429, 0
    %v2436 = vperm.slane %v2429, 1
    %v2437 = vperm.slane %v2429, 2
    %v2438 = vperm.slane %v2429, 3
    %v2443 = vadd.f32 %v2430, %v2435
    %v2444 = vadd.f32 %v2431, %v2436
    %v2445 = vadd.f32 %v2432, %v2437
    %v2446 = vadd.f32 %v2433, %v2438
    %v2447 = vmax.f32 %v2443, 0.0
    %v2448 = vmax.f32 %v2444, 0.0
    %v2449 = vmax.f32 %v2445, 0.0
    %v2450 = vmax.f32 %v2446, 0.0
    %v2451 = vpack.c.bf16 %v2447, %v2447
    %v2452 = vpack.c.bf16 %v2448, %v2448
    %v2453 = vpack.c.bf16 %v2449, %v2449
    %v2454 = vpack.c.bf16 %v2450, %v2450
    %s2455 = sshll.u32 %s103, 4
    %2456 = dma.done [#allocation3], %s2455
    %s2457 = scalar_lea.hbm %s1, 3072
    // Predicated region
    $region50: #{tpu_custom_call.1} parent=1 // pred_check
      _
    $region51: #{tpu_custom_call.1} parent=1 // pred_check_branch
      %2459 = sbr.rel target = $region53
    $region52: #{tpu_custom_call.1} parent=1 // pred_region
      %2460 = sst [smem:[#allocation14]] [#allocation21]
      %2461 = sst [smem:[#allocation15]] [#allocation20]
    $region53: #{tpu_custom_call.1} parent=1 // pred_fallthru
      _
    %2463 = shalt.err (0)
    %s2465 = sshll.u32 %s2457, 4
    %s2466 = int_to_ptr.hbm [resolvable:$true] %s2465
    %s2467 = sshll.u32 %s107, 4
    %s2468 = int_to_ptr.vmem [resolvable:$true] %s2467
    %2470 = dma.hbm_to_vmem [thread:$0]  %s2466, 16384, %s2468, %s108
    %v2471 = vld [vmem:[#allocation2] sm:$0xff]
    %v2472 = vld [vmem:[#allocation2 + $0x8] sm:$0xff]
    %v2473 = vld [vmem:[#allocation2 + $0x10] sm:$0xff]
    %v2474 = vld [vmem:[#allocation2 + $0x18] sm:$0xff]
    %v2475 = vld [vmem:[#allocation2 + $0x20] sm:$0xff]
    %v2476 = vld [vmem:[#allocation2 + $0x28] sm:$0xff]
    %v2477 = vld [vmem:[#allocation2 + $0x30] sm:$0xff]
    %v2478 = vld [vmem:[#allocation2 + $0x38] sm:$0xff]
    %v2479 = vld [vmem:[#allocation2 + $0x40] sm:$0xff]
    %v2480 = vld [vmem:[#allocation2 + $0x48] sm:$0xff]
    %v2481 = vld [vmem:[#allocation2 + $0x50] sm:$0xff]
    %v2482 = vld [vmem:[#allocation2 + $0x58] sm:$0xff]
    %v2483 = vld [vmem:[#allocation2 + $0x60] sm:$0xff]
    %v2484 = vld [vmem:[#allocation2 + $0x68] sm:$0xff]
    %v2485 = vld [vmem:[#allocation2 + $0x70] sm:$0xff]
    %v2486 = vld [vmem:[#allocation2 + $0x78] sm:$0xff]
    %v2487 = vld [vmem:[#allocation2 + $0x80] sm:$0xff]
    %v2488 = vld [vmem:[#allocation2 + $0x88] sm:$0xff]
    %v2489 = vld [vmem:[#allocation2 + $0x90] sm:$0xff]
    %v2490 = vld [vmem:[#allocation2 + $0x98] sm:$0xff]
    %v2491 = vld [vmem:[#allocation2 + $0xa0] sm:$0xff]
    %v2492 = vld [vmem:[#allocation2 + $0xa8] sm:$0xff]
    %v2493 = vld [vmem:[#allocation2 + $0xb0] sm:$0xff]
    %v2494 = vld [vmem:[#allocation2 + $0xb8] sm:$0xff]
    %v2495 = vld [vmem:[#allocation2 + $0xc0] sm:$0xff]
    %v2496 = vld [vmem:[#allocation2 + $0xc8] sm:$0xff]
    %v2497 = vld [vmem:[#allocation2 + $0xd0] sm:$0xff]
    %v2498 = vld [vmem:[#allocation2 + $0xd8] sm:$0xff]
    %v2499 = vld [vmem:[#allocation2 + $0xe0] sm:$0xff]
    %v2500 = vld [vmem:[#allocation2 + $0xe8] sm:$0xff]
    %v2501 = vld [vmem:[#allocation2 + $0xf0] sm:$0xff]
    %v2502 = vld [vmem:[#allocation2 + $0xf8] sm:$0xff]
    %v2503 = vld [vmem:[#allocation2 + $0x100] sm:$0xff]
    %v2504 = vld [vmem:[#allocation2 + $0x108] sm:$0xff]
    %v2505 = vld [vmem:[#allocation2 + $0x110] sm:$0xff]
    %v2506 = vld [vmem:[#allocation2 + $0x118] sm:$0xff]
    %v2507 = vld [vmem:[#allocation2 + $0x120] sm:$0xff]
    %v2508 = vld [vmem:[#allocation2 + $0x128] sm:$0xff]
    %v2509 = vld [vmem:[#allocation2 + $0x130] sm:$0xff]
    %v2510 = vld [vmem:[#allocation2 + $0x138] sm:$0xff]
    %v2511 = vld [vmem:[#allocation2 + $0x140] sm:$0xff]
    %v2512 = vld [vmem:[#allocation2 + $0x148] sm:$0xff]
    %v2513 = vld [vmem:[#allocation2 + $0x150] sm:$0xff]
    %v2514 = vld [vmem:[#allocation2 + $0x158] sm:$0xff]
    %v2515 = vld [vmem:[#allocation2 + $0x160] sm:$0xff]
    %v2516 = vld [vmem:[#allocation2 + $0x168] sm:$0xff]
    %v2517 = vld [vmem:[#allocation2 + $0x170] sm:$0xff]
    %v2518 = vld [vmem:[#allocation2 + $0x178] sm:$0xff]
    %v2519 = vld [vmem:[#allocation2 + $0x180] sm:$0xff]
    %v2520 = vld [vmem:[#allocation2 + $0x188] sm:$0xff]
    %v2521 = vld [vmem:[#allocation2 + $0x190] sm:$0xff]
    %v2522 = vld [vmem:[#allocation2 + $0x198] sm:$0xff]
    %v2523 = vld [vmem:[#allocation2 + $0x1a0] sm:$0xff]
    %v2524 = vld [vmem:[#allocation2 + $0x1a8] sm:$0xff]
    %v2525 = vld [vmem:[#allocation2 + $0x1b0] sm:$0xff]
    %v2526 = vld [vmem:[#allocation2 + $0x1b8] sm:$0xff]
    %v2527 = vld [vmem:[#allocation2 + $0x1c0] sm:$0xff]
    %v2528 = vld [vmem:[#allocation2 + $0x1c8] sm:$0xff]
    %v2529 = vld [vmem:[#allocation2 + $0x1d0] sm:$0xff]
    %v2530 = vld [vmem:[#allocation2 + $0x1d8] sm:$0xff]
    %v2531 = vld [vmem:[#allocation2 + $0x1e0] sm:$0xff]
    %v2532 = vld [vmem:[#allocation2 + $0x1e8] sm:$0xff]
    %v2533 = vld [vmem:[#allocation2 + $0x1f0] sm:$0xff]
    %v2534 = vld [vmem:[#allocation2 + $0x1f8] sm:$0xff]
    %v2535 = vld [vmem:[#allocation2 + $0x200] sm:$0xff]
    %v2536 = vld [vmem:[#allocation2 + $0x208] sm:$0xff]
    %v2537 = vld [vmem:[#allocation2 + $0x210] sm:$0xff]
    %v2538 = vld [vmem:[#allocation2 + $0x218] sm:$0xff]
    %v2539 = vld [vmem:[#allocation2 + $0x220] sm:$0xff]
    %v2540 = vld [vmem:[#allocation2 + $0x228] sm:$0xff]
    %v2541 = vld [vmem:[#allocation2 + $0x230] sm:$0xff]
    %v2542 = vld [vmem:[#allocation2 + $0x238] sm:$0xff]
    %v2543 = vld [vmem:[#allocation2 + $0x240] sm:$0xff]
    %v2544 = vld [vmem:[#allocation2 + $0x248] sm:$0xff]
    %v2545 = vld [vmem:[#allocation2 + $0x250] sm:$0xff]
    %v2546 = vld [vmem:[#allocation2 + $0x258] sm:$0xff]
    %v2547 = vld [vmem:[#allocation2 + $0x260] sm:$0xff]
    %v2548 = vld [vmem:[#allocation2 + $0x268] sm:$0xff]
    %v2549 = vld [vmem:[#allocation2 + $0x270] sm:$0xff]
    %v2550 = vld [vmem:[#allocation2 + $0x278] sm:$0xff]
    %v2551 = vld [vmem:[#allocation2 + $0x280] sm:$0xff]
    %v2552 = vld [vmem:[#allocation2 + $0x288] sm:$0xff]
    %v2553 = vld [vmem:[#allocation2 + $0x290] sm:$0xff]
    %v2554 = vld [vmem:[#allocation2 + $0x298] sm:$0xff]
    %v2555 = vld [vmem:[#allocation2 + $0x2a0] sm:$0xff]
    %v2556 = vld [vmem:[#allocation2 + $0x2a8] sm:$0xff]
    %v2557 = vld [vmem:[#allocation2 + $0x2b0] sm:$0xff]
    %v2558 = vld [vmem:[#allocation2 + $0x2b8] sm:$0xff]
    %v2559 = vld [vmem:[#allocation2 + $0x2c0] sm:$0xff]
    %v2560 = vld [vmem:[#allocation2 + $0x2c8] sm:$0xff]
    %v2561 = vld [vmem:[#allocation2 + $0x2d0] sm:$0xff]
    %v2562 = vld [vmem:[#allocation2 + $0x2d8] sm:$0xff]
    %v2563 = vld [vmem:[#allocation2 + $0x2e0] sm:$0xff]
    %v2564 = vld [vmem:[#allocation2 + $0x2e8] sm:$0xff]
    %v2565 = vld [vmem:[#allocation2 + $0x2f0] sm:$0xff]
    %v2566 = vld [vmem:[#allocation2 + $0x2f8] sm:$0xff]
    %v2567 = vld [vmem:[#allocation2 + $0x300] sm:$0xff]
    %v2568 = vld [vmem:[#allocation2 + $0x308] sm:$0xff]
    %v2569 = vld [vmem:[#allocation2 + $0x310] sm:$0xff]
    %v2570 = vld [vmem:[#allocation2 + $0x318] sm:$0xff]
    %v2571 = vld [vmem:[#allocation2 + $0x320] sm:$0xff]
    %v2572 = vld [vmem:[#allocation2 + $0x328] sm:$0xff]
    %v2573 = vld [vmem:[#allocation2 + $0x330] sm:$0xff]
    %v2574 = vld [vmem:[#allocation2 + $0x338] sm:$0xff]
    %v2575 = vld [vmem:[#allocation2 + $0x340] sm:$0xff]
    %v2576 = vld [vmem:[#allocation2 + $0x348] sm:$0xff]
    %v2577 = vld [vmem:[#allocation2 + $0x350] sm:$0xff]
    %v2578 = vld [vmem:[#allocation2 + $0x358] sm:$0xff]
    %v2579 = vld [vmem:[#allocation2 + $0x360] sm:$0xff]
    %v2580 = vld [vmem:[#allocation2 + $0x368] sm:$0xff]
    %v2581 = vld [vmem:[#allocation2 + $0x370] sm:$0xff]
    %v2582 = vld [vmem:[#allocation2 + $0x378] sm:$0xff]
    %v2583 = vld [vmem:[#allocation2 + $0x380] sm:$0xff]
    %v2584 = vld [vmem:[#allocation2 + $0x388] sm:$0xff]
    %v2585 = vld [vmem:[#allocation2 + $0x390] sm:$0xff]
    %v2586 = vld [vmem:[#allocation2 + $0x398] sm:$0xff]
    %v2587 = vld [vmem:[#allocation2 + $0x3a0] sm:$0xff]
    %v2588 = vld [vmem:[#allocation2 + $0x3a8] sm:$0xff]
    %v2589 = vld [vmem:[#allocation2 + $0x3b0] sm:$0xff]
    %v2590 = vld [vmem:[#allocation2 + $0x3b8] sm:$0xff]
    %v2591 = vld [vmem:[#allocation2 + $0x3c0] sm:$0xff]
    %v2592 = vld [vmem:[#allocation2 + $0x3c8] sm:$0xff]
    %v2593 = vld [vmem:[#allocation2 + $0x3d0] sm:$0xff]
    %v2594 = vld [vmem:[#allocation2 + $0x3d8] sm:$0xff]
    %v2595 = vld [vmem:[#allocation2 + $0x3e0] sm:$0xff]
    %v2596 = vld [vmem:[#allocation2 + $0x3e8] sm:$0xff]
    %v2597 = vld [vmem:[#allocation2 + $0x3f0] sm:$0xff]
    %v2598 = vld [vmem:[#allocation2 + $0x3f8] sm:$0xff]
    %v2727 = vunpack.c.l.b16 %v2471
    %v2728 = vunpack.c.h.b16 %v2471
    %v2729 = vunpack.c.l.b16 %v2472
    %v2730 = vunpack.c.h.b16 %v2472
    %v2731 = vunpack.c.l.b16 %v2473
    %v2732 = vunpack.c.h.b16 %v2473
    %v2733 = vunpack.c.l.b16 %v2474
    %v2734 = vunpack.c.h.b16 %v2474
    %v2735 = vunpack.c.l.b16 %v2475
    %v2736 = vunpack.c.h.b16 %v2475
    %v2737 = vunpack.c.l.b16 %v2476
    %v2738 = vunpack.c.h.b16 %v2476
    %v2739 = vunpack.c.l.b16 %v2477
    %v2740 = vunpack.c.h.b16 %v2477
    %v2741 = vunpack.c.l.b16 %v2478
    %v2742 = vunpack.c.h.b16 %v2478
    %v2743 = vunpack.c.l.b16 %v2479
    %v2744 = vunpack.c.h.b16 %v2479
    %v2745 = vunpack.c.l.b16 %v2480
    %v2746 = vunpack.c.h.b16 %v2480
    %v2747 = vunpack.c.l.b16 %v2481
    %v2748 = vunpack.c.h.b16 %v2481
    %v2749 = vunpack.c.l.b16 %v2482
    %v2750 = vunpack.c.h.b16 %v2482
    %v2751 = vunpack.c.l.b16 %v2483
    %v2752 = vunpack.c.h.b16 %v2483
    %v2753 = vunpack.c.l.b16 %v2484
    %v2754 = vunpack.c.h.b16 %v2484
    %v2755 = vunpack.c.l.b16 %v2485
    %v2756 = vunpack.c.h.b16 %v2485
    %v2757 = vunpack.c.l.b16 %v2486
    %v2758 = vunpack.c.h.b16 %v2486
    %v2759 = vunpack.c.l.b16 %v2487
    %v2760 = vunpack.c.h.b16 %v2487
    %v2761 = vunpack.c.l.b16 %v2488
    %v2762 = vunpack.c.h.b16 %v2488
    %v2763 = vunpack.c.l.b16 %v2489
    %v2764 = vunpack.c.h.b16 %v2489
    %v2765 = vunpack.c.l.b16 %v2490
    %v2766 = vunpack.c.h.b16 %v2490
    %v2767 = vunpack.c.l.b16 %v2491
    %v2768 = vunpack.c.h.b16 %v2491
    %v2769 = vunpack.c.l.b16 %v2492
    %v2770 = vunpack.c.h.b16 %v2492
    %v2771 = vunpack.c.l.b16 %v2493
    %v2772 = vunpack.c.h.b16 %v2493
    %v2773 = vunpack.c.l.b16 %v2494
    %v2774 = vunpack.c.h.b16 %v2494
    %v2775 = vunpack.c.l.b16 %v2495
    %v2776 = vunpack.c.h.b16 %v2495
    %v2777 = vunpack.c.l.b16 %v2496
    %v2778 = vunpack.c.h.b16 %v2496
    %v2779 = vunpack.c.l.b16 %v2497
    %v2780 = vunpack.c.h.b16 %v2497
    %v2781 = vunpack.c.l.b16 %v2498
    %v2782 = vunpack.c.h.b16 %v2498
    %v2783 = vunpack.c.l.b16 %v2499
    %v2784 = vunpack.c.h.b16 %v2499
    %v2785 = vunpack.c.l.b16 %v2500
    %v2786 = vunpack.c.h.b16 %v2500
    %v2787 = vunpack.c.l.b16 %v2501
    %v2788 = vunpack.c.h.b16 %v2501
    %v2789 = vunpack.c.l.b16 %v2502
    %v2790 = vunpack.c.h.b16 %v2502
    %v2791 = vunpack.c.l.b16 %v2503
    %v2792 = vunpack.c.h.b16 %v2503
    %v2793 = vunpack.c.l.b16 %v2504
    %v2794 = vunpack.c.h.b16 %v2504
    %v2795 = vunpack.c.l.b16 %v2505
    %v2796 = vunpack.c.h.b16 %v2505
    %v2797 = vunpack.c.l.b16 %v2506
    %v2798 = vunpack.c.h.b16 %v2506
    %v2799 = vunpack.c.l.b16 %v2507
    %v2800 = vunpack.c.h.b16 %v2507
    %v2801 = vunpack.c.l.b16 %v2508
    %v2802 = vunpack.c.h.b16 %v2508
    %v2803 = vunpack.c.l.b16 %v2509
    %v2804 = vunpack.c.h.b16 %v2509
    %v2805 = vunpack.c.l.b16 %v2510
    %v2806 = vunpack.c.h.b16 %v2510
    %v2807 = vunpack.c.l.b16 %v2511
    %v2808 = vunpack.c.h.b16 %v2511
    %v2809 = vunpack.c.l.b16 %v2512
    %v2810 = vunpack.c.h.b16 %v2512
    %v2811 = vunpack.c.l.b16 %v2513
    %v2812 = vunpack.c.h.b16 %v2513
    %v2813 = vunpack.c.l.b16 %v2514
    %v2814 = vunpack.c.h.b16 %v2514
    %v2815 = vunpack.c.l.b16 %v2515
    %v2816 = vunpack.c.h.b16 %v2515
    %v2817 = vunpack.c.l.b16 %v2516
    %v2818 = vunpack.c.h.b16 %v2516
    %v2819 = vunpack.c.l.b16 %v2517
    %v2820 = vunpack.c.h.b16 %v2517
    %v2821 = vunpack.c.l.b16 %v2518
    %v2822 = vunpack.c.h.b16 %v2518
    %v2823 = vunpack.c.l.b16 %v2519
    %v2824 = vunpack.c.h.b16 %v2519
    %v2825 = vunpack.c.l.b16 %v2520
    %v2826 = vunpack.c.h.b16 %v2520
    %v2827 = vunpack.c.l.b16 %v2521
    %v2828 = vunpack.c.h.b16 %v2521
    %v2829 = vunpack.c.l.b16 %v2522
    %v2830 = vunpack.c.h.b16 %v2522
    %v2831 = vunpack.c.l.b16 %v2523
    %v2832 = vunpack.c.h.b16 %v2523
    %v2833 = vunpack.c.l.b16 %v2524
    %v2834 = vunpack.c.h.b16 %v2524
    %v2835 = vunpack.c.l.b16 %v2525
    %v2836 = vunpack.c.h.b16 %v2525
    %v2837 = vunpack.c.l.b16 %v2526
    %v2838 = vunpack.c.h.b16 %v2526
    %v2839 = vunpack.c.l.b16 %v2527
    %v2840 = vunpack.c.h.b16 %v2527
    %v2841 = vunpack.c.l.b16 %v2528
    %v2842 = vunpack.c.h.b16 %v2528
    %v2843 = vunpack.c.l.b16 %v2529
    %v2844 = vunpack.c.h.b16 %v2529
    %v2845 = vunpack.c.l.b16 %v2530
    %v2846 = vunpack.c.h.b16 %v2530
    %v2847 = vunpack.c.l.b16 %v2531
    %v2848 = vunpack.c.h.b16 %v2531
    %v2849 = vunpack.c.l.b16 %v2532
    %v2850 = vunpack.c.h.b16 %v2532
    %v2851 = vunpack.c.l.b16 %v2533
    %v2852 = vunpack.c.h.b16 %v2533
    %v2853 = vunpack.c.l.b16 %v2534
    %v2854 = vunpack.c.h.b16 %v2534
    %v2855 = vunpack.c.l.b16 %v2535
    %v2856 = vunpack.c.h.b16 %v2535
    %v2857 = vunpack.c.l.b16 %v2536
    %v2858 = vunpack.c.h.b16 %v2536
    %v2859 = vunpack.c.l.b16 %v2537
    %v2860 = vunpack.c.h.b16 %v2537
    %v2861 = vunpack.c.l.b16 %v2538
    %v2862 = vunpack.c.h.b16 %v2538
    %v2863 = vunpack.c.l.b16 %v2539
    %v2864 = vunpack.c.h.b16 %v2539
    %v2865 = vunpack.c.l.b16 %v2540
    %v2866 = vunpack.c.h.b16 %v2540
    %v2867 = vunpack.c.l.b16 %v2541
    %v2868 = vunpack.c.h.b16 %v2541
    %v2869 = vunpack.c.l.b16 %v2542
    %v2870 = vunpack.c.h.b16 %v2542
    %v2871 = vunpack.c.l.b16 %v2543
    %v2872 = vunpack.c.h.b16 %v2543
    %v2873 = vunpack.c.l.b16 %v2544
    %v2874 = vunpack.c.h.b16 %v2544
    %v2875 = vunpack.c.l.b16 %v2545
    %v2876 = vunpack.c.h.b16 %v2545
    %v2877 = vunpack.c.l.b16 %v2546
    %v2878 = vunpack.c.h.b16 %v2546
    %v2879 = vunpack.c.l.b16 %v2547
    %v2880 = vunpack.c.h.b16 %v2547
    %v2881 = vunpack.c.l.b16 %v2548
    %v2882 = vunpack.c.h.b16 %v2548
    %v2883 = vunpack.c.l.b16 %v2549
    %v2884 = vunpack.c.h.b16 %v2549
    %v2885 = vunpack.c.l.b16 %v2550
    %v2886 = vunpack.c.h.b16 %v2550
    %v2887 = vunpack.c.l.b16 %v2551
    %v2888 = vunpack.c.h.b16 %v2551
    %v2889 = vunpack.c.l.b16 %v2552
    %v2890 = vunpack.c.h.b16 %v2552
    %v2891 = vunpack.c.l.b16 %v2553
    %v2892 = vunpack.c.h.b16 %v2553
    %v2893 = vunpack.c.l.b16 %v2554
    %v2894 = vunpack.c.h.b16 %v2554
    %v2895 = vunpack.c.l.b16 %v2555
    %v2896 = vunpack.c.h.b16 %v2555
    %v2897 = vunpack.c.l.b16 %v2556
    %v2898 = vunpack.c.h.b16 %v2556
    %v2899 = vunpack.c.l.b16 %v2557
    %v2900 = vunpack.c.h.b16 %v2557
    %v2901 = vunpack.c.l.b16 %v2558
    %v2902 = vunpack.c.h.b16 %v2558
    %v2903 = vunpack.c.l.b16 %v2559
    %v2904 = vunpack.c.h.b16 %v2559
    %v2905 = vunpack.c.l.b16 %v2560
    %v2906 = vunpack.c.h.b16 %v2560
    %v2907 = vunpack.c.l.b16 %v2561
    %v2908 = vunpack.c.h.b16 %v2561
    %v2909 = vunpack.c.l.b16 %v2562
    %v2910 = vunpack.c.h.b16 %v2562
    %v2911 = vunpack.c.l.b16 %v2563
    %v2912 = vunpack.c.h.b16 %v2563
    %v2913 = vunpack.c.l.b16 %v2564
    %v2914 = vunpack.c.h.b16 %v2564
    %v2915 = vunpack.c.l.b16 %v2565
    %v2916 = vunpack.c.h.b16 %v2565
    %v2917 = vunpack.c.l.b16 %v2566
    %v2918 = vunpack.c.h.b16 %v2566
    %v2919 = vunpack.c.l.b16 %v2567
    %v2920 = vunpack.c.h.b16 %v2567
    %v2921 = vunpack.c.l.b16 %v2568
    %v2922 = vunpack.c.h.b16 %v2568
    %v2923 = vunpack.c.l.b16 %v2569
    %v2924 = vunpack.c.h.b16 %v2569
    %v2925 = vunpack.c.l.b16 %v2570
    %v2926 = vunpack.c.h.b16 %v2570
    %v2927 = vunpack.c.l.b16 %v2571
    %v2928 = vunpack.c.h.b16 %v2571
    %v2929 = vunpack.c.l.b16 %v2572
    %v2930 = vunpack.c.h.b16 %v2572
    %v2931 = vunpack.c.l.b16 %v2573
    %v2932 = vunpack.c.h.b16 %v2573
    %v2933 = vunpack.c.l.b16 %v2574
    %v2934 = vunpack.c.h.b16 %v2574
    %v2935 = vunpack.c.l.b16 %v2575
    %v2936 = vunpack.c.h.b16 %v2575
    %v2937 = vunpack.c.l.b16 %v2576
    %v2938 = vunpack.c.h.b16 %v2576
    %v2939 = vunpack.c.l.b16 %v2577
    %v2940 = vunpack.c.h.b16 %v2577
    %v2941 = vunpack.c.l.b16 %v2578
    %v2942 = vunpack.c.h.b16 %v2578
    %v2943 = vunpack.c.l.b16 %v2579
    %v2944 = vunpack.c.h.b16 %v2579
    %v2945 = vunpack.c.l.b16 %v2580
    %v2946 = vunpack.c.h.b16 %v2580
    %v2947 = vunpack.c.l.b16 %v2581
    %v2948 = vunpack.c.h.b16 %v2581
    %v2949 = vunpack.c.l.b16 %v2582
    %v2950 = vunpack.c.h.b16 %v2582
    %v2951 = vunpack.c.l.b16 %v2583
    %v2952 = vunpack.c.h.b16 %v2583
    %v2953 = vunpack.c.l.b16 %v2584
    %v2954 = vunpack.c.h.b16 %v2584
    %v2955 = vunpack.c.l.b16 %v2585
    %v2956 = vunpack.c.h.b16 %v2585
    %v2957 = vunpack.c.l.b16 %v2586
    %v2958 = vunpack.c.h.b16 %v2586
    %v2959 = vunpack.c.l.b16 %v2587
    %v2960 = vunpack.c.h.b16 %v2587
    %v2961 = vunpack.c.l.b16 %v2588
    %v2962 = vunpack.c.h.b16 %v2588
    %v2963 = vunpack.c.l.b16 %v2589
    %v2964 = vunpack.c.h.b16 %v2589
    %v2965 = vunpack.c.l.b16 %v2590
    %v2966 = vunpack.c.h.b16 %v2590
    %v2967 = vunpack.c.l.b16 %v2591
    %v2968 = vunpack.c.h.b16 %v2591
    %v2969 = vunpack.c.l.b16 %v2592
    %v2970 = vunpack.c.h.b16 %v2592
    %v2971 = vunpack.c.l.b16 %v2593
    %v2972 = vunpack.c.h.b16 %v2593
    %v2973 = vunpack.c.l.b16 %v2594
    %v2974 = vunpack.c.h.b16 %v2594
    %v2975 = vunpack.c.l.b16 %v2595
    %v2976 = vunpack.c.h.b16 %v2595
    %v2977 = vunpack.c.l.b16 %v2596
    %v2978 = vunpack.c.h.b16 %v2596
    %v2979 = vunpack.c.l.b16 %v2597
    %v2980 = vunpack.c.h.b16 %v2597
    %v2981 = vunpack.c.l.b16 %v2598
    %v2982 = vunpack.c.h.b16 %v2598
    %v2983 = vpack.c.b16 %v2731, %v2727
    %v2984 = vpack.c.b16 %v2732, %v2728
    %v2985 = vpack.c.b16 %v2733, %v2729
    %v2986 = vpack.c.b16 %v2734, %v2730
    %v2987 = vpack.c.b16 %v2739, %v2735
    %v2988 = vpack.c.b16 %v2740, %v2736
    %v2989 = vpack.c.b16 %v2741, %v2737
    %v2990 = vpack.c.b16 %v2742, %v2738
    %v2991 = vpack.c.b16 %v2747, %v2743
    %v2992 = vpack.c.b16 %v2748, %v2744
    %v2993 = vpack.c.b16 %v2749, %v2745
    %v2994 = vpack.c.b16 %v2750, %v2746
    %v2995 = vpack.c.b16 %v2755, %v2751
    %v2996 = vpack.c.b16 %v2756, %v2752
    %v2997 = vpack.c.b16 %v2757, %v2753
    %v2998 = vpack.c.b16 %v2758, %v2754
    %v2999 = vpack.c.b16 %v2763, %v2759
    %v3000 = vpack.c.b16 %v2764, %v2760
    %v3001 = vpack.c.b16 %v2765, %v2761
    %v3002 = vpack.c.b16 %v2766, %v2762
    %v3003 = vpack.c.b16 %v2771, %v2767
    %v3004 = vpack.c.b16 %v2772, %v2768
    %v3005 = vpack.c.b16 %v2773, %v2769
    %v3006 = vpack.c.b16 %v2774, %v2770
    %v3007 = vpack.c.b16 %v2779, %v2775
    %v3008 = vpack.c.b16 %v2780, %v2776
    %v3009 = vpack.c.b16 %v2781, %v2777
    %v3010 = vpack.c.b16 %v2782, %v2778
    %v3011 = vpack.c.b16 %v2787, %v2783
    %v3012 = vpack.c.b16 %v2788, %v2784
    %v3013 = vpack.c.b16 %v2789, %v2785
    %v3014 = vpack.c.b16 %v2790, %v2786
    %v3015 = vpack.c.b16 %v2795, %v2791
    %v3016 = vpack.c.b16 %v2796, %v2792
    %v3017 = vpack.c.b16 %v2797, %v2793
    %v3018 = vpack.c.b16 %v2798, %v2794
    %v3019 = vpack.c.b16 %v2803, %v2799
    %v3020 = vpack.c.b16 %v2804, %v2800
    %v3021 = vpack.c.b16 %v2805, %v2801
    %v3022 = vpack.c.b16 %v2806, %v2802
    %v3023 = vpack.c.b16 %v2811, %v2807
    %v3024 = vpack.c.b16 %v2812, %v2808
    %v3025 = vpack.c.b16 %v2813, %v2809
    %v3026 = vpack.c.b16 %v2814, %v2810
    %v3027 = vpack.c.b16 %v2819, %v2815
    %v3028 = vpack.c.b16 %v2820, %v2816
    %v3029 = vpack.c.b16 %v2821, %v2817
    %v3030 = vpack.c.b16 %v2822, %v2818
    %v3031 = vpack.c.b16 %v2827, %v2823
    %v3032 = vpack.c.b16 %v2828, %v2824
    %v3033 = vpack.c.b16 %v2829, %v2825
    %v3034 = vpack.c.b16 %v2830, %v2826
    %v3035 = vpack.c.b16 %v2835, %v2831
    %v3036 = vpack.c.b16 %v2836, %v2832
    %v3037 = vpack.c.b16 %v2837, %v2833
    %v3038 = vpack.c.b16 %v2838, %v2834
    %v3039 = vpack.c.b16 %v2843, %v2839
    %v3040 = vpack.c.b16 %v2844, %v2840
    %v3041 = vpack.c.b16 %v2845, %v2841
    %v3042 = vpack.c.b16 %v2846, %v2842
    %v3043 = vpack.c.b16 %v2851, %v2847
    %v3044 = vpack.c.b16 %v2852, %v2848
    %v3045 = vpack.c.b16 %v2853, %v2849
    %v3046 = vpack.c.b16 %v2854, %v2850
    %v3047 = vpack.c.b16 %v2859, %v2855
    %v3048 = vpack.c.b16 %v2860, %v2856
    %v3049 = vpack.c.b16 %v2861, %v2857
    %v3050 = vpack.c.b16 %v2862, %v2858
    %v3051 = vpack.c.b16 %v2867, %v2863
    %v3052 = vpack.c.b16 %v2868, %v2864
    %v3053 = vpack.c.b16 %v2869, %v2865
    %v3054 = vpack.c.b16 %v2870, %v2866
    %v3055 = vpack.c.b16 %v2875, %v2871
    %v3056 = vpack.c.b16 %v2876, %v2872
    %v3057 = vpack.c.b16 %v2877, %v2873
    %v3058 = vpack.c.b16 %v2878, %v2874
    %v3059 = vpack.c.b16 %v2883, %v2879
    %v3060 = vpack.c.b16 %v2884, %v2880
    %v3061 = vpack.c.b16 %v2885, %v2881
    %v3062 = vpack.c.b16 %v2886, %v2882
    %v3063 = vpack.c.b16 %v2891, %v2887
    %v3064 = vpack.c.b16 %v2892, %v2888
    %v3065 = vpack.c.b16 %v2893, %v2889
    %v3066 = vpack.c.b16 %v2894, %v2890
    %v3067 = vpack.c.b16 %v2899, %v2895
    %v3068 = vpack.c.b16 %v2900, %v2896
    %v3069 = vpack.c.b16 %v2901, %v2897
    %v3070 = vpack.c.b16 %v2902, %v2898
    %v3071 = vpack.c.b16 %v2907, %v2903
    %v3072 = vpack.c.b16 %v2908, %v2904
    %v3073 = vpack.c.b16 %v2909, %v2905
    %v3074 = vpack.c.b16 %v2910, %v2906
    %v3075 = vpack.c.b16 %v2915, %v2911
    %v3076 = vpack.c.b16 %v2916, %v2912
    %v3077 = vpack.c.b16 %v2917, %v2913
    %v3078 = vpack.c.b16 %v2918, %v2914
    %v3079 = vpack.c.b16 %v2923, %v2919
    %v3080 = vpack.c.b16 %v2924, %v2920
    %v3081 = vpack.c.b16 %v2925, %v2921
    %v3082 = vpack.c.b16 %v2926, %v2922
    %v3083 = vpack.c.b16 %v2931, %v2927
    %v3084 = vpack.c.b16 %v2932, %v2928
    %v3085 = vpack.c.b16 %v2933, %v2929
    %v3086 = vpack.c.b16 %v2934, %v2930
    %v3087 = vpack.c.b16 %v2939, %v2935
    %v3088 = vpack.c.b16 %v2940, %v2936
    %v3089 = vpack.c.b16 %v2941, %v2937
    %v3090 = vpack.c.b16 %v2942, %v2938
    %v3091 = vpack.c.b16 %v2947, %v2943
    %v3092 = vpack.c.b16 %v2948, %v2944
    %v3093 = vpack.c.b16 %v2949, %v2945
    %v3094 = vpack.c.b16 %v2950, %v2946
    %v3095 = vpack.c.b16 %v2955, %v2951
    %v3096 = vpack.c.b16 %v2956, %v2952
    %v3097 = vpack.c.b16 %v2957, %v2953
    %v3098 = vpack.c.b16 %v2958, %v2954
    %v3099 = vpack.c.b16 %v2963, %v2959
    %v3100 = vpack.c.b16 %v2964, %v2960
    %v3101 = vpack.c.b16 %v2965, %v2961
    %v3102 = vpack.c.b16 %v2966, %v2962
    %v3103 = vpack.c.b16 %v2971, %v2967
    %v3104 = vpack.c.b16 %v2972, %v2968
    %v3105 = vpack.c.b16 %v2973, %v2969
    %v3106 = vpack.c.b16 %v2974, %v2970
    %v3107 = vpack.c.b16 %v2979, %v2975
    %v3108 = vpack.c.b16 %v2980, %v2976
    %v3109 = vpack.c.b16 %v2981, %v2977
    %v3110 = vpack.c.b16 %v2982, %v2978
    %3239 = vmatpush.bf16.msra.mxu0 %v3011
    %3240 = vmatpush.bf16.msra.mxu0 %v3007
    %3241 = vmatpush.bf16.msra.mxu0 %v3003
    %3242 = vmatpush.bf16.msra.mxu0 %v2999
    %3243 = vmatpush.bf16.msra.mxu0 %v2995
    %3244 = vmatpush.bf16.msra.mxu0 %v2991
    %3245 = vmatpush.bf16.msra.mxu0 %v2987
    %3246 = vmatpush.bf16.msra.mxu0 %v2983
    %3247 = vmatmul.bf16.gmra.mxu0 %v2451
    %v3248 = vpop.f32.mrf.mxu0
    %v3249 = vadd.f32 0.0, %v3248
    %v3250 = vpop.f32.mrf.mxu0
    %3251 = vdwg.mxu0
    %3252 = vmatpush.bf16.msra.mxu0 %v3043
    %3253 = vmatpush.bf16.msra.mxu0 %v3039
    %3254 = vmatpush.bf16.msra.mxu0 %v3035
    %3255 = vmatpush.bf16.msra.mxu0 %v3031
    %3256 = vmatpush.bf16.msra.mxu0 %v3027
    %3257 = vmatpush.bf16.msra.mxu0 %v3023
    %3258 = vmatpush.bf16.msra.mxu0 %v3019
    %3259 = vmatpush.bf16.msra.mxu0 %v3015
    %3260 = vmatmul.bf16.gmra.mxu0 %v2452
    %v3261 = vpop.f32.mrf.mxu0
    %v3262 = vadd.f32 %v3249, %v3261
    %v3263 = vpop.f32.mrf.mxu0
    %3264 = vdwg.mxu0
    %3265 = vmatpush.bf16.msra.mxu0 %v3075
    %3266 = vmatpush.bf16.msra.mxu0 %v3071
    %3267 = vmatpush.bf16.msra.mxu0 %v3067
    %3268 = vmatpush.bf16.msra.mxu0 %v3063
    %3269 = vmatpush.bf16.msra.mxu0 %v3059
    %3270 = vmatpush.bf16.msra.mxu0 %v3055
    %3271 = vmatpush.bf16.msra.mxu0 %v3051
    %3272 = vmatpush.bf16.msra.mxu0 %v3047
    %3273 = vmatmul.bf16.gmra.mxu0 %v2453
    %v3274 = vpop.f32.mrf.mxu0
    %v3275 = vadd.f32 %v3262, %v3274
    %v3276 = vpop.f32.mrf.mxu0
    %3277 = vdwg.mxu0
    %3278 = vmatpush.bf16.msra.mxu0 %v3107
    %3279 = vmatpush.bf16.msra.mxu0 %v3103
    %3280 = vmatpush.bf16.msra.mxu0 %v3099
    %3281 = vmatpush.bf16.msra.mxu0 %v3095
    %3282 = vmatpush.bf16.msra.mxu0 %v3091
    %3283 = vmatpush.bf16.msra.mxu0 %v3087
    %3284 = vmatpush.bf16.msra.mxu0 %v3083
    %3285 = vmatpush.bf16.msra.mxu0 %v3079
    %3286 = vmatmul.bf16.gmra.mxu0 %v2454
    %v3287 = vpop.f32.mrf.mxu0
    %v3288 = vadd.f32 %v3275, %v3287
    %v3289 = vpop.f32.mrf.mxu0
    %3290 = vdwg.mxu0
    %3291 = vmatpush.bf16.msra.mxu0 %v3012
    %3292 = vmatpush.bf16.msra.mxu0 %v3008
    %3293 = vmatpush.bf16.msra.mxu0 %v3004
    %3294 = vmatpush.bf16.msra.mxu0 %v3000
    %3295 = vmatpush.bf16.msra.mxu0 %v2996
    %3296 = vmatpush.bf16.msra.mxu0 %v2992
    %3297 = vmatpush.bf16.msra.mxu0 %v2988
    %3298 = vmatpush.bf16.msra.mxu0 %v2984
    %3299 = vmatmul.bf16.gmra.mxu0 %v2451
    %v3300 = vpop.f32.mrf.mxu0
    %v3301 = vadd.f32 0.0, %v3300
    %v3302 = vpop.f32.mrf.mxu0
    %3303 = vdwg.mxu0
    %3304 = vmatpush.bf16.msra.mxu0 %v3044
    %3305 = vmatpush.bf16.msra.mxu0 %v3040
    %3306 = vmatpush.bf16.msra.mxu0 %v3036
    %3307 = vmatpush.bf16.msra.mxu0 %v3032
    %3308 = vmatpush.bf16.msra.mxu0 %v3028
    %3309 = vmatpush.bf16.msra.mxu0 %v3024
    %3310 = vmatpush.bf16.msra.mxu0 %v3020
    %3311 = vmatpush.bf16.msra.mxu0 %v3016
    %3312 = vmatmul.bf16.gmra.mxu0 %v2452
    %v3313 = vpop.f32.mrf.mxu0
    %v3314 = vadd.f32 %v3301, %v3313
    %v3315 = vpop.f32.mrf.mxu0
    %3316 = vdwg.mxu0
    %3317 = vmatpush.bf16.msra.mxu0 %v3076
    %3318 = vmatpush.bf16.msra.mxu0 %v3072
    %3319 = vmatpush.bf16.msra.mxu0 %v3068
    %3320 = vmatpush.bf16.msra.mxu0 %v3064
    %3321 = vmatpush.bf16.msra.mxu0 %v3060
    %3322 = vmatpush.bf16.msra.mxu0 %v3056
    %3323 = vmatpush.bf16.msra.mxu0 %v3052
    %3324 = vmatpush.bf16.msra.mxu0 %v3048
    %3325 = vmatmul.bf16.gmra.mxu0 %v2453
    %v3326 = vpop.f32.mrf.mxu0
    %v3327 = vadd.f32 %v3314, %v3326
    %v3328 = vpop.f32.mrf.mxu0
    %3329 = vdwg.mxu0
    %3330 = vmatpush.bf16.msra.mxu0 %v3108
    %3331 = vmatpush.bf16.msra.mxu0 %v3104
    %3332 = vmatpush.bf16.msra.mxu0 %v3100
    %3333 = vmatpush.bf16.msra.mxu0 %v3096
    %3334 = vmatpush.bf16.msra.mxu0 %v3092
    %3335 = vmatpush.bf16.msra.mxu0 %v3088
    %3336 = vmatpush.bf16.msra.mxu0 %v3084
    %3337 = vmatpush.bf16.msra.mxu0 %v3080
    %3338 = vmatmul.bf16.gmra.mxu0 %v2454
    %v3339 = vpop.f32.mrf.mxu0
    %v3340 = vadd.f32 %v3327, %v3339
    %v3341 = vpop.f32.mrf.mxu0
    %3342 = vdwg.mxu0
    %3343 = vmatpush.bf16.msra.mxu0 %v3013
    %3344 = vmatpush.bf16.msra.mxu0 %v3009
    %3345 = vmatpush.bf16.msra.mxu0 %v3005
    %3346 = vmatpush.bf16.msra.mxu0 %v3001
    %3347 = vmatpush.bf16.msra.mxu0 %v2997
    %3348 = vmatpush.bf16.msra.mxu0 %v2993
    %3349 = vmatpush.bf16.msra.mxu0 %v2989
    %3350 = vmatpush.bf16.msra.mxu0 %v2985
    %3351 = vmatmul.bf16.gmra.mxu0 %v2451
    %v3352 = vpop.f32.mrf.mxu0
    %v3353 = vadd.f32 0.0, %v3352
    %v3354 = vpop.f32.mrf.mxu0
    %3355 = vdwg.mxu0
    %3356 = vmatpush.bf16.msra.mxu0 %v3045
    %3357 = vmatpush.bf16.msra.mxu0 %v3041
    %3358 = vmatpush.bf16.msra.mxu0 %v3037
    %3359 = vmatpush.bf16.msra.mxu0 %v3033
    %3360 = vmatpush.bf16.msra.mxu0 %v3029
    %3361 = vmatpush.bf16.msra.mxu0 %v3025
    %3362 = vmatpush.bf16.msra.mxu0 %v3021
    %3363 = vmatpush.bf16.msra.mxu0 %v3017
    %3364 = vmatmul.bf16.gmra.mxu0 %v2452
    %v3365 = vpop.f32.mrf.mxu0
    %v3366 = vadd.f32 %v3353, %v3365
    %v3367 = vpop.f32.mrf.mxu0
    %3368 = vdwg.mxu0
    %3369 = vmatpush.bf16.msra.mxu0 %v3077
    %3370 = vmatpush.bf16.msra.mxu0 %v3073
    %3371 = vmatpush.bf16.msra.mxu0 %v3069
    %3372 = vmatpush.bf16.msra.mxu0 %v3065
    %3373 = vmatpush.bf16.msra.mxu0 %v3061
    %3374 = vmatpush.bf16.msra.mxu0 %v3057
    %3375 = vmatpush.bf16.msra.mxu0 %v3053
    %3376 = vmatpush.bf16.msra.mxu0 %v3049
    %3377 = vmatmul.bf16.gmra.mxu0 %v2453
    %v3378 = vpop.f32.mrf.mxu0
    %v3379 = vadd.f32 %v3366, %v3378
    %v3380 = vpop.f32.mrf.mxu0
    %3381 = vdwg.mxu0
    %3382 = vmatpush.bf16.msra.mxu0 %v3109
    %3383 = vmatpush.bf16.msra.mxu0 %v3105
    %3384 = vmatpush.bf16.msra.mxu0 %v3101
    %3385 = vmatpush.bf16.msra.mxu0 %v3097
    %3386 = vmatpush.bf16.msra.mxu0 %v3093
    %3387 = vmatpush.bf16.msra.mxu0 %v3089
    %3388 = vmatpush.bf16.msra.mxu0 %v3085
    %3389 = vmatpush.bf16.msra.mxu0 %v3081
    %3390 = vmatmul.bf16.gmra.mxu0 %v2454
    %v3391 = vpop.f32.mrf.mxu0
    %v3392 = vadd.f32 %v3379, %v3391
    %v3393 = vpop.f32.mrf.mxu0
    %3394 = vdwg.mxu0
    %3395 = vmatpush.bf16.msra.mxu0 %v3014
    %3396 = vmatpush.bf16.msra.mxu0 %v3010
    %3397 = vmatpush.bf16.msra.mxu0 %v3006
    %3398 = vmatpush.bf16.msra.mxu0 %v3002
    %3399 = vmatpush.bf16.msra.mxu0 %v2998
    %3400 = vmatpush.bf16.msra.mxu0 %v2994
    %3401 = vmatpush.bf16.msra.mxu0 %v2990
    %3402 = vmatpush.bf16.msra.mxu0 %v2986
    %3403 = vmatmul.bf16.gmra.mxu0 %v2451
    %v3404 = vpop.f32.mrf.mxu0
    %v3405 = vadd.f32 0.0, %v3404
    %v3406 = vpop.f32.mrf.mxu0
    %3407 = vdwg.mxu0
    %3408 = vmatpush.bf16.msra.mxu0 %v3046
    %3409 = vmatpush.bf16.msra.mxu0 %v3042
    %3410 = vmatpush.bf16.msra.mxu0 %v3038
    %3411 = vmatpush.bf16.msra.mxu0 %v3034
    %3412 = vmatpush.bf16.msra.mxu0 %v3030
    %3413 = vmatpush.bf16.msra.mxu0 %v3026
    %3414 = vmatpush.bf16.msra.mxu0 %v3022
    %3415 = vmatpush.bf16.msra.mxu0 %v3018
    %3416 = vmatmul.bf16.gmra.mxu0 %v2452
    %v3417 = vpop.f32.mrf.mxu0
    %v3418 = vadd.f32 %v3405, %v3417
    %v3419 = vpop.f32.mrf.mxu0
    %3420 = vdwg.mxu0
    %3421 = vmatpush.bf16.msra.mxu0 %v3078
    %3422 = vmatpush.bf16.msra.mxu0 %v3074
    %3423 = vmatpush.bf16.msra.mxu0 %v3070
    %3424 = vmatpush.bf16.msra.mxu0 %v3066
    %3425 = vmatpush.bf16.msra.mxu0 %v3062
    %3426 = vmatpush.bf16.msra.mxu0 %v3058
    %3427 = vmatpush.bf16.msra.mxu0 %v3054
    %3428 = vmatpush.bf16.msra.mxu0 %v3050
    %3429 = vmatmul.bf16.gmra.mxu0 %v2453
    %v3430 = vpop.f32.mrf.mxu0
    %v3431 = vadd.f32 %v3418, %v3430
    %v3432 = vpop.f32.mrf.mxu0
    %3433 = vdwg.mxu0
    %3434 = vmatpush.bf16.msra.mxu0 %v3110
    %3435 = vmatpush.bf16.msra.mxu0 %v3106
    %3436 = vmatpush.bf16.msra.mxu0 %v3102
    %3437 = vmatpush.bf16.msra.mxu0 %v3098
    %3438 = vmatpush.bf16.msra.mxu0 %v3094
    %3439 = vmatpush.bf16.msra.mxu0 %v3090
    %3440 = vmatpush.bf16.msra.mxu0 %v3086
    %3441 = vmatpush.bf16.msra.mxu0 %v3082
    %3442 = vmatmul.bf16.gmra.mxu0 %v2454
    %v3443 = vpop.f32.mrf.mxu0
    %v3444 = vadd.f32 %v3431, %v3443
    %v3445 = vpop.f32.mrf.mxu0
    %3446 = vdwg.mxu0
    %v3447 = vrot.slane %v3288, 4
    %v3448 = vadd.f32 %v3288, %v3447
    %v3449 = vrot.slane %v3448, 2
    %v3450 = vadd.f32 %v3448, %v3449
    %v3451 = vrot.slane %v3450, 1
    %v3452 = vadd.f32 %v3450, %v3451
    %v3453 = vrot.slane %v3340, 4
    %v3454 = vadd.f32 %v3340, %v3453
    %v3455 = vrot.slane %v3454, 2
    %v3456 = vadd.f32 %v3454, %v3455
    %v3457 = vrot.slane %v3456, 1
    %v3458 = vadd.f32 %v3456, %v3457
    %v3459 = vrot.slane %v3392, 4
    %v3460 = vadd.f32 %v3392, %v3459
    %v3461 = vrot.slane %v3460, 2
    %v3462 = vadd.f32 %v3460, %v3461
    %v3463 = vrot.slane %v3462, 1
    %v3464 = vadd.f32 %v3462, %v3463
    %v3465 = vrot.slane %v3444, 4
    %v3466 = vadd.f32 %v3444, %v3465
    %v3467 = vrot.slane %v3466, 2
    %v3468 = vadd.f32 %v3466, %v3467
    %v3469 = vrot.slane %v3468, 1
    %v3470 = vadd.f32 %v3468, %v3469
    %v3471 = vmul.f32 %v3288, %v3288
    %v3472 = vmul.f32 %v3340, %v3340
    %v3473 = vmul.f32 %v3392, %v3392
    %v3474 = vmul.f32 %v3444, %v3444
    %v3475 = vrot.slane %v3471, 4
    %v3476 = vadd.f32 %v3471, %v3475
    %v3477 = vrot.slane %v3476, 2
    %v3478 = vadd.f32 %v3476, %v3477
    %v3479 = vrot.slane %v3478, 1
    %v3480 = vadd.f32 %v3478, %v3479
    %v3481 = vrot.slane %v3472, 4
    %v3482 = vadd.f32 %v3472, %v3481
    %v3483 = vrot.slane %v3482, 2
    %v3484 = vadd.f32 %v3482, %v3483
    %v3485 = vrot.slane %v3484, 1
    %v3486 = vadd.f32 %v3484, %v3485
    %v3487 = vrot.slane %v3473, 4
    %v3488 = vadd.f32 %v3473, %v3487
    %v3489 = vrot.slane %v3488, 2
    %v3490 = vadd.f32 %v3488, %v3489
    %v3491 = vrot.slane %v3490, 1
    %v3492 = vadd.f32 %v3490, %v3491
    %v3493 = vrot.slane %v3474, 4
    %v3494 = vadd.f32 %v3474, %v3493
    %v3495 = vrot.slane %v3494, 2
    %v3496 = vadd.f32 %v3494, %v3495
    %v3497 = vrot.slane %v3496, 1
    %v3498 = vadd.f32 %v3496, %v3497
    %v3499 = vmul.f32 %v3452, 0.125
    %v3500 = vmul.f32 %v3458, 0.125
    %v3501 = vmul.f32 %v3464, 0.125
    %v3502 = vmul.f32 %v3470, 0.125
    %v3503 = vmul.f32 %v3480, 0.125
    %v3504 = vmul.f32 %v3486, 0.125
    %v3505 = vmul.f32 %v3492, 0.125
    %v3506 = vmul.f32 %v3498, 0.125
    %v3507 = vmul.f32 %v3499, %v3499
    %v3508 = vmul.f32 %v3500, %v3500
    %v3509 = vmul.f32 %v3501, %v3501
    %v3510 = vmul.f32 %v3502, %v3502
    %v3511 = vsub.f32 %v3503, %v3507
    %v3512 = vsub.f32 %v3504, %v3508
    %v3513 = vsub.f32 %v3505, %v3509
    %v3514 = vsub.f32 %v3506, %v3510
    %v3515 = vmax.f32 %v3511, 0.0
    %v3516 = vmax.f32 %v3512, 0.0
    %v3517 = vmax.f32 %v3513, 0.0
    %v3518 = vmax.f32 %v3514, 0.0
    %s3519 = scalar_lea.vmem [#allocation7], 8
    %v3520 = vld [vmem:[%s3519] sm:$0xf]
    %v3521 = vadd.f32 %v3515, 1e-05
    %v3522 = vadd.f32 %v3516, 1e-05
    %v3523 = vadd.f32 %v3517, 1e-05
    %v3524 = vadd.f32 %v3518, 1e-05
    %v3525 = vrsqrt.pop %v3521
    %v3526 = vmul.f32 %v3525, %v3521
    %v3527 = vmul.f32 %v3526, %v3525
    %v3528 = vmul.f32 0.5, %v3527
    %v3529 = vsub.f32 1.5, %v3528
    %v3530 = vmul.f32 %v3525, %v3529
    %vm3531 = vweird.f32 %v3521
    %vm3532 = vweird.f32 %v3525
    %vm3533 = vmor %vm3531, %vm3532
    %v3534 = vsel %vm3533, %v3525, %v3530
    %v3535 = vrsqrt.pop %v3522
    %v3536 = vmul.f32 %v3535, %v3522
    %v3537 = vmul.f32 %v3536, %v3535
    %v3538 = vmul.f32 0.5, %v3537
    %v3539 = vsub.f32 1.5, %v3538
    %v3540 = vmul.f32 %v3535, %v3539
    %vm3541 = vweird.f32 %v3522
    %vm3542 = vweird.f32 %v3535
    %vm3543 = vmor %vm3541, %vm3542
    %v3544 = vsel %vm3543, %v3535, %v3540
    %v3545 = vrsqrt.pop %v3523
    %v3546 = vmul.f32 %v3545, %v3523
    %v3547 = vmul.f32 %v3546, %v3545
    %v3548 = vmul.f32 0.5, %v3547
    %v3549 = vsub.f32 1.5, %v3548
    %v3550 = vmul.f32 %v3545, %v3549
    %vm3551 = vweird.f32 %v3523
    %vm3552 = vweird.f32 %v3545
    %vm3553 = vmor %vm3551, %vm3552
    %v3554 = vsel %vm3553, %v3545, %v3550
    %v3555 = vrsqrt.pop %v3524
    %v3556 = vmul.f32 %v3555, %v3524
    %v3557 = vmul.f32 %v3556, %v3555
    %v3558 = vmul.f32 0.5, %v3557
    %v3559 = vsub.f32 1.5, %v3558
    %v3560 = vmul.f32 %v3555, %v3559
    %vm3561 = vweird.f32 %v3524
    %vm3562 = vweird.f32 %v3555
    %vm3563 = vmor %vm3561, %vm3562
    %v3564 = vsel %vm3563, %v3555, %v3560
    %v3569 = vrot.slane %v3544, 7
    %v3570 = vrot.slane %v3554, 6
    %v3571 = vrot.slane %v3564, 5
    %v3572 = vsel %vm1222, %v3534, %v3569
    %v3573 = vsel %vm1224, %v3570, %v3571
    %v3574 = vsel %vm1226, %v3572, %v3573
    %v3576 = vmul.f32 %v3520, %v3574
    %s3577 = scalar_lea.vmem [#allocation9], 8
    %v3578 = vld [vmem:[%s3577] sm:$0xf]
    %v3580 = vperm.slane %v3576, 0
    %v3581 = vperm.slane %v3576, 1
    %v3582 = vperm.slane %v3576, 2
    %v3583 = vperm.slane %v3576, 3
    %v3588 = vmul.f32 %v3499, %v3580
    %v3589 = vmul.f32 %v3500, %v3581
    %v3590 = vmul.f32 %v3501, %v3582
    %v3591 = vmul.f32 %v3502, %v3583
    %v3596 = vrot.slane %v3589, 7
    %v3597 = vrot.slane %v3590, 6
    %v3598 = vrot.slane %v3591, 5
    %v3599 = vsel %vm1222, %v3588, %v3596
    %v3600 = vsel %vm1224, %v3597, %v3598
    %v3601 = vsel %vm1226, %v3599, %v3600
    %v3603 = vsub.f32 %v3578, %v3601
    %v3604 = vmul.f32 %v3288, %v3580
    %v3605 = vmul.f32 %v3340, %v3581
    %v3606 = vmul.f32 %v3392, %v3582
    %v3607 = vmul.f32 %v3444, %v3583
    %v3609 = vperm.slane %v3603, 0
    %v3610 = vperm.slane %v3603, 1
    %v3611 = vperm.slane %v3603, 2
    %v3612 = vperm.slane %v3603, 3
    %v3617 = vadd.f32 %v3604, %v3609
    %v3618 = vadd.f32 %v3605, %v3610
    %v3619 = vadd.f32 %v3606, %v3611
    %v3620 = vadd.f32 %v3607, %v3612
    %v3621 = vmax.f32 %v3617, 0.0
    %v3622 = vmax.f32 %v3618, 0.0
    %v3623 = vmax.f32 %v3619, 0.0
    %v3624 = vmax.f32 %v3620, 0.0
    %v3625 = vpack.c.bf16 %v3621, %v3621
    %v3626 = vpack.c.bf16 %v3622, %v3622
    %v3627 = vpack.c.bf16 %v3623, %v3623
    %v3628 = vpack.c.bf16 %v3624, %v3624
    %s3629 = sshll.u32 %s103, 4
    %3630 = dma.done %s108, %s3629
    %v3631 = vld [vmem:[%s107] sm:$0xff]
    %v3632 = vld [vmem:[%s107 + $0x8] sm:$0xff]
    %v3633 = vld [vmem:[%s107 + $0x10] sm:$0xff]
    %v3634 = vld [vmem:[%s107 + $0x18] sm:$0xff]
    %v3635 = vld [vmem:[%s107 + $0x20] sm:$0xff]
    %v3636 = vld [vmem:[%s107 + $0x28] sm:$0xff]
    %v3637 = vld [vmem:[%s107 + $0x30] sm:$0xff]
    %v3638 = vld [vmem:[%s107 + $0x38] sm:$0xff]
    %v3639 = vld [vmem:[%s107 + $0x40] sm:$0xff]
    %v3640 = vld [vmem:[%s107 + $0x48] sm:$0xff]
    %v3641 = vld [vmem:[%s107 + $0x50] sm:$0xff]
    %v3642 = vld [vmem:[%s107 + $0x58] sm:$0xff]
    %v3643 = vld [vmem:[%s107 + $0x60] sm:$0xff]
    %v3644 = vld [vmem:[%s107 + $0x68] sm:$0xff]
    %v3645 = vld [vmem:[%s107 + $0x70] sm:$0xff]
    %v3646 = vld [vmem:[%s107 + $0x78] sm:$0xff]
    %v3647 = vld [vmem:[%s107 + $0x80] sm:$0xff]
    %v3648 = vld [vmem:[%s107 + $0x88] sm:$0xff]
    %v3649 = vld [vmem:[%s107 + $0x90] sm:$0xff]
    %v3650 = vld [vmem:[%s107 + $0x98] sm:$0xff]
    %v3651 = vld [vmem:[%s107 + $0xa0] sm:$0xff]
    %v3652 = vld [vmem:[%s107 + $0xa8] sm:$0xff]
    %v3653 = vld [vmem:[%s107 + $0xb0] sm:$0xff]
    %v3654 = vld [vmem:[%s107 + $0xb8] sm:$0xff]
    %v3655 = vld [vmem:[%s107 + $0xc0] sm:$0xff]
    %v3656 = vld [vmem:[%s107 + $0xc8] sm:$0xff]
    %v3657 = vld [vmem:[%s107 + $0xd0] sm:$0xff]
    %v3658 = vld [vmem:[%s107 + $0xd8] sm:$0xff]
    %v3659 = vld [vmem:[%s107 + $0xe0] sm:$0xff]
    %v3660 = vld [vmem:[%s107 + $0xe8] sm:$0xff]
    %v3661 = vld [vmem:[%s107 + $0xf0] sm:$0xff]
    %v3662 = vld [vmem:[%s107 + $0xf8] sm:$0xff]
    %v3663 = vld [vmem:[%s107 + $0x100] sm:$0xff]
    %v3664 = vld [vmem:[%s107 + $0x108] sm:$0xff]
    %v3665 = vld [vmem:[%s107 + $0x110] sm:$0xff]
    %v3666 = vld [vmem:[%s107 + $0x118] sm:$0xff]
    %v3667 = vld [vmem:[%s107 + $0x120] sm:$0xff]
    %v3668 = vld [vmem:[%s107 + $0x128] sm:$0xff]
    %v3669 = vld [vmem:[%s107 + $0x130] sm:$0xff]
    %v3670 = vld [vmem:[%s107 + $0x138] sm:$0xff]
    %v3671 = vld [vmem:[%s107 + $0x140] sm:$0xff]
    %v3672 = vld [vmem:[%s107 + $0x148] sm:$0xff]
    %v3673 = vld [vmem:[%s107 + $0x150] sm:$0xff]
    %v3674 = vld [vmem:[%s107 + $0x158] sm:$0xff]
    %v3675 = vld [vmem:[%s107 + $0x160] sm:$0xff]
    %v3676 = vld [vmem:[%s107 + $0x168] sm:$0xff]
    %v3677 = vld [vmem:[%s107 + $0x170] sm:$0xff]
    %v3678 = vld [vmem:[%s107 + $0x178] sm:$0xff]
    %v3679 = vld [vmem:[%s107 + $0x180] sm:$0xff]
    %v3680 = vld [vmem:[%s107 + $0x188] sm:$0xff]
    %v3681 = vld [vmem:[%s107 + $0x190] sm:$0xff]
    %v3682 = vld [vmem:[%s107 + $0x198] sm:$0xff]
    %v3683 = vld [vmem:[%s107 + $0x1a0] sm:$0xff]
    %v3684 = vld [vmem:[%s107 + $0x1a8] sm:$0xff]
    %v3685 = vld [vmem:[%s107 + $0x1b0] sm:$0xff]
    %v3686 = vld [vmem:[%s107 + $0x1b8] sm:$0xff]
    %v3687 = vld [vmem:[%s107 + $0x1c0] sm:$0xff]
    %v3688 = vld [vmem:[%s107 + $0x1c8] sm:$0xff]
    %v3689 = vld [vmem:[%s107 + $0x1d0] sm:$0xff]
    %v3690 = vld [vmem:[%s107 + $0x1d8] sm:$0xff]
    %v3691 = vld [vmem:[%s107 + $0x1e0] sm:$0xff]
    %v3692 = vld [vmem:[%s107 + $0x1e8] sm:$0xff]
    %v3693 = vld [vmem:[%s107 + $0x1f0] sm:$0xff]
    %v3694 = vld [vmem:[%s107 + $0x1f8] sm:$0xff]
    %v3695 = vld [vmem:[%s107 + $0x200] sm:$0xff]
    %v3696 = vld [vmem:[%s107 + $0x208] sm:$0xff]
    %v3697 = vld [vmem:[%s107 + $0x210] sm:$0xff]
    %v3698 = vld [vmem:[%s107 + $0x218] sm:$0xff]
    %v3699 = vld [vmem:[%s107 + $0x220] sm:$0xff]
    %v3700 = vld [vmem:[%s107 + $0x228] sm:$0xff]
    %v3701 = vld [vmem:[%s107 + $0x230] sm:$0xff]
    %v3702 = vld [vmem:[%s107 + $0x238] sm:$0xff]
    %v3703 = vld [vmem:[%s107 + $0x240] sm:$0xff]
    %v3704 = vld [vmem:[%s107 + $0x248] sm:$0xff]
    %v3705 = vld [vmem:[%s107 + $0x250] sm:$0xff]
    %v3706 = vld [vmem:[%s107 + $0x258] sm:$0xff]
    %v3707 = vld [vmem:[%s107 + $0x260] sm:$0xff]
    %v3708 = vld [vmem:[%s107 + $0x268] sm:$0xff]
    %v3709 = vld [vmem:[%s107 + $0x270] sm:$0xff]
    %v3710 = vld [vmem:[%s107 + $0x278] sm:$0xff]
    %v3711 = vld [vmem:[%s107 + $0x280] sm:$0xff]
    %v3712 = vld [vmem:[%s107 + $0x288] sm:$0xff]
    %v3713 = vld [vmem:[%s107 + $0x290] sm:$0xff]
    %v3714 = vld [vmem:[%s107 + $0x298] sm:$0xff]
    %v3715 = vld [vmem:[%s107 + $0x2a0] sm:$0xff]
    %v3716 = vld [vmem:[%s107 + $0x2a8] sm:$0xff]
    %v3717 = vld [vmem:[%s107 + $0x2b0] sm:$0xff]
    %v3718 = vld [vmem:[%s107 + $0x2b8] sm:$0xff]
    %v3719 = vld [vmem:[%s107 + $0x2c0] sm:$0xff]
    %v3720 = vld [vmem:[%s107 + $0x2c8] sm:$0xff]
    %v3721 = vld [vmem:[%s107 + $0x2d0] sm:$0xff]
    %v3722 = vld [vmem:[%s107 + $0x2d8] sm:$0xff]
    %v3723 = vld [vmem:[%s107 + $0x2e0] sm:$0xff]
    %v3724 = vld [vmem:[%s107 + $0x2e8] sm:$0xff]
    %v3725 = vld [vmem:[%s107 + $0x2f0] sm:$0xff]
    %v3726 = vld [vmem:[%s107 + $0x2f8] sm:$0xff]
    %v3727 = vld [vmem:[%s107 + $0x300] sm:$0xff]
    %v3728 = vld [vmem:[%s107 + $0x308] sm:$0xff]
    %v3729 = vld [vmem:[%s107 + $0x310] sm:$0xff]
    %v3730 = vld [vmem:[%s107 + $0x318] sm:$0xff]
    %v3731 = vld [vmem:[%s107 + $0x320] sm:$0xff]
    %v3732 = vld [vmem:[%s107 + $0x328] sm:$0xff]
    %v3733 = vld [vmem:[%s107 + $0x330] sm:$0xff]
    %v3734 = vld [vmem:[%s107 + $0x338] sm:$0xff]
    %v3735 = vld [vmem:[%s107 + $0x340] sm:$0xff]
    %v3736 = vld [vmem:[%s107 + $0x348] sm:$0xff]
    %v3737 = vld [vmem:[%s107 + $0x350] sm:$0xff]
    %v3738 = vld [vmem:[%s107 + $0x358] sm:$0xff]
    %v3739 = vld [vmem:[%s107 + $0x360] sm:$0xff]
    %v3740 = vld [vmem:[%s107 + $0x368] sm:$0xff]
    %v3741 = vld [vmem:[%s107 + $0x370] sm:$0xff]
    %v3742 = vld [vmem:[%s107 + $0x378] sm:$0xff]
    %v3743 = vld [vmem:[%s107 + $0x380] sm:$0xff]
    %v3744 = vld [vmem:[%s107 + $0x388] sm:$0xff]
    %v3745 = vld [vmem:[%s107 + $0x390] sm:$0xff]
    %v3746 = vld [vmem:[%s107 + $0x398] sm:$0xff]
    %v3747 = vld [vmem:[%s107 + $0x3a0] sm:$0xff]
    %v3748 = vld [vmem:[%s107 + $0x3a8] sm:$0xff]
    %v3749 = vld [vmem:[%s107 + $0x3b0] sm:$0xff]
    %v3750 = vld [vmem:[%s107 + $0x3b8] sm:$0xff]
    %v3751 = vld [vmem:[%s107 + $0x3c0] sm:$0xff]
    %v3752 = vld [vmem:[%s107 + $0x3c8] sm:$0xff]
    %v3753 = vld [vmem:[%s107 + $0x3d0] sm:$0xff]
    %v3754 = vld [vmem:[%s107 + $0x3d8] sm:$0xff]
    %v3755 = vld [vmem:[%s107 + $0x3e0] sm:$0xff]
    %v3756 = vld [vmem:[%s107 + $0x3e8] sm:$0xff]
    %v3757 = vld [vmem:[%s107 + $0x3f0] sm:$0xff]
    %v3758 = vld [vmem:[%s107 + $0x3f8] sm:$0xff]
    %v3887 = vunpack.c.l.b16 %v3631
    %v3888 = vunpack.c.h.b16 %v3631
    %v3889 = vunpack.c.l.b16 %v3632
    %v3890 = vunpack.c.h.b16 %v3632
    %v3891 = vunpack.c.l.b16 %v3633
    %v3892 = vunpack.c.h.b16 %v3633
    %v3893 = vunpack.c.l.b16 %v3634
    %v3894 = vunpack.c.h.b16 %v3634
    %v3895 = vunpack.c.l.b16 %v3635
    %v3896 = vunpack.c.h.b16 %v3635
    %v3897 = vunpack.c.l.b16 %v3636
    %v3898 = vunpack.c.h.b16 %v3636
    %v3899 = vunpack.c.l.b16 %v3637
    %v3900 = vunpack.c.h.b16 %v3637
    %v3901 = vunpack.c.l.b16 %v3638
    %v3902 = vunpack.c.h.b16 %v3638
    %v3903 = vunpack.c.l.b16 %v3639
    %v3904 = vunpack.c.h.b16 %v3639
    %v3905 = vunpack.c.l.b16 %v3640
    %v3906 = vunpack.c.h.b16 %v3640
    %v3907 = vunpack.c.l.b16 %v3641
    %v3908 = vunpack.c.h.b16 %v3641
    %v3909 = vunpack.c.l.b16 %v3642
    %v3910 = vunpack.c.h.b16 %v3642
    %v3911 = vunpack.c.l.b16 %v3643
    %v3912 = vunpack.c.h.b16 %v3643
    %v3913 = vunpack.c.l.b16 %v3644
    %v3914 = vunpack.c.h.b16 %v3644
    %v3915 = vunpack.c.l.b16 %v3645
    %v3916 = vunpack.c.h.b16 %v3645
    %v3917 = vunpack.c.l.b16 %v3646
    %v3918 = vunpack.c.h.b16 %v3646
    %v3919 = vunpack.c.l.b16 %v3647
    %v3920 = vunpack.c.h.b16 %v3647
    %v3921 = vunpack.c.l.b16 %v3648
    %v3922 = vunpack.c.h.b16 %v3648
    %v3923 = vunpack.c.l.b16 %v3649
    %v3924 = vunpack.c.h.b16 %v3649
    %v3925 = vunpack.c.l.b16 %v3650
    %v3926 = vunpack.c.h.b16 %v3650
    %v3927 = vunpack.c.l.b16 %v3651
    %v3928 = vunpack.c.h.b16 %v3651
    %v3929 = vunpack.c.l.b16 %v3652
    %v3930 = vunpack.c.h.b16 %v3652
    %v3931 = vunpack.c.l.b16 %v3653
    %v3932 = vunpack.c.h.b16 %v3653
    %v3933 = vunpack.c.l.b16 %v3654
    %v3934 = vunpack.c.h.b16 %v3654
    %v3935 = vunpack.c.l.b16 %v3655
    %v3936 = vunpack.c.h.b16 %v3655
    %v3937 = vunpack.c.l.b16 %v3656
    %v3938 = vunpack.c.h.b16 %v3656
    %v3939 = vunpack.c.l.b16 %v3657
    %v3940 = vunpack.c.h.b16 %v3657
    %v3941 = vunpack.c.l.b16 %v3658
    %v3942 = vunpack.c.h.b16 %v3658
    %v3943 = vunpack.c.l.b16 %v3659
    %v3944 = vunpack.c.h.b16 %v3659
    %v3945 = vunpack.c.l.b16 %v3660
    %v3946 = vunpack.c.h.b16 %v3660
    %v3947 = vunpack.c.l.b16 %v3661
    %v3948 = vunpack.c.h.b16 %v3661
    %v3949 = vunpack.c.l.b16 %v3662
    %v3950 = vunpack.c.h.b16 %v3662
    %v3951 = vunpack.c.l.b16 %v3663
    %v3952 = vunpack.c.h.b16 %v3663
    %v3953 = vunpack.c.l.b16 %v3664
    %v3954 = vunpack.c.h.b16 %v3664
    %v3955 = vunpack.c.l.b16 %v3665
    %v3956 = vunpack.c.h.b16 %v3665
    %v3957 = vunpack.c.l.b16 %v3666
    %v3958 = vunpack.c.h.b16 %v3666
    %v3959 = vunpack.c.l.b16 %v3667
    %v3960 = vunpack.c.h.b16 %v3667
    %v3961 = vunpack.c.l.b16 %v3668
    %v3962 = vunpack.c.h.b16 %v3668
    %v3963 = vunpack.c.l.b16 %v3669
    %v3964 = vunpack.c.h.b16 %v3669
    %v3965 = vunpack.c.l.b16 %v3670
    %v3966 = vunpack.c.h.b16 %v3670
    %v3967 = vunpack.c.l.b16 %v3671
    %v3968 = vunpack.c.h.b16 %v3671
    %v3969 = vunpack.c.l.b16 %v3672
    %v3970 = vunpack.c.h.b16 %v3672
    %v3971 = vunpack.c.l.b16 %v3673
    %v3972 = vunpack.c.h.b16 %v3673
    %v3973 = vunpack.c.l.b16 %v3674
    %v3974 = vunpack.c.h.b16 %v3674
    %v3975 = vunpack.c.l.b16 %v3675
    %v3976 = vunpack.c.h.b16 %v3675
    %v3977 = vunpack.c.l.b16 %v3676
    %v3978 = vunpack.c.h.b16 %v3676
    %v3979 = vunpack.c.l.b16 %v3677
    %v3980 = vunpack.c.h.b16 %v3677
    %v3981 = vunpack.c.l.b16 %v3678
    %v3982 = vunpack.c.h.b16 %v3678
    %v3983 = vunpack.c.l.b16 %v3679
    %v3984 = vunpack.c.h.b16 %v3679
    %v3985 = vunpack.c.l.b16 %v3680
    %v3986 = vunpack.c.h.b16 %v3680
    %v3987 = vunpack.c.l.b16 %v3681
    %v3988 = vunpack.c.h.b16 %v3681
    %v3989 = vunpack.c.l.b16 %v3682
    %v3990 = vunpack.c.h.b16 %v3682
    %v3991 = vunpack.c.l.b16 %v3683
    %v3992 = vunpack.c.h.b16 %v3683
    %v3993 = vunpack.c.l.b16 %v3684
    %v3994 = vunpack.c.h.b16 %v3684
    %v3995 = vunpack.c.l.b16 %v3685
    %v3996 = vunpack.c.h.b16 %v3685
    %v3997 = vunpack.c.l.b16 %v3686
    %v3998 = vunpack.c.h.b16 %v3686
    %v3999 = vunpack.c.l.b16 %v3687
    %v4000 = vunpack.c.h.b16 %v3687
    %v4001 = vunpack.c.l.b16 %v3688
    %v4002 = vunpack.c.h.b16 %v3688
    %v4003 = vunpack.c.l.b16 %v3689
    %v4004 = vunpack.c.h.b16 %v3689
    %v4005 = vunpack.c.l.b16 %v3690
    %v4006 = vunpack.c.h.b16 %v3690
    %v4007 = vunpack.c.l.b16 %v3691
    %v4008 = vunpack.c.h.b16 %v3691
    %v4009 = vunpack.c.l.b16 %v3692
    %v4010 = vunpack.c.h.b16 %v3692
    %v4011 = vunpack.c.l.b16 %v3693
    %v4012 = vunpack.c.h.b16 %v3693
    %v4013 = vunpack.c.l.b16 %v3694
    %v4014 = vunpack.c.h.b16 %v3694
    %v4015 = vunpack.c.l.b16 %v3695
    %v4016 = vunpack.c.h.b16 %v3695
    %v4017 = vunpack.c.l.b16 %v3696
    %v4018 = vunpack.c.h.b16 %v3696
    %v4019 = vunpack.c.l.b16 %v3697
    %v4020 = vunpack.c.h.b16 %v3697
    %v4021 = vunpack.c.l.b16 %v3698
    %v4022 = vunpack.c.h.b16 %v3698
    %v4023 = vunpack.c.l.b16 %v3699
    %v4024 = vunpack.c.h.b16 %v3699
    %v4025 = vunpack.c.l.b16 %v3700
    %v4026 = vunpack.c.h.b16 %v3700
    %v4027 = vunpack.c.l.b16 %v3701
    %v4028 = vunpack.c.h.b16 %v3701
    %v4029 = vunpack.c.l.b16 %v3702
    %v4030 = vunpack.c.h.b16 %v3702
    %v4031 = vunpack.c.l.b16 %v3703
    %v4032 = vunpack.c.h.b16 %v3703
    %v4033 = vunpack.c.l.b16 %v3704
    %v4034 = vunpack.c.h.b16 %v3704
    %v4035 = vunpack.c.l.b16 %v3705
    %v4036 = vunpack.c.h.b16 %v3705
    %v4037 = vunpack.c.l.b16 %v3706
    %v4038 = vunpack.c.h.b16 %v3706
    %v4039 = vunpack.c.l.b16 %v3707
    %v4040 = vunpack.c.h.b16 %v3707
    %v4041 = vunpack.c.l.b16 %v3708
    %v4042 = vunpack.c.h.b16 %v3708
    %v4043 = vunpack.c.l.b16 %v3709
    %v4044 = vunpack.c.h.b16 %v3709
    %v4045 = vunpack.c.l.b16 %v3710
    %v4046 = vunpack.c.h.b16 %v3710
    %v4047 = vunpack.c.l.b16 %v3711
    %v4048 = vunpack.c.h.b16 %v3711
    %v4049 = vunpack.c.l.b16 %v3712
    %v4050 = vunpack.c.h.b16 %v3712
    %v4051 = vunpack.c.l.b16 %v3713
    %v4052 = vunpack.c.h.b16 %v3713
    %v4053 = vunpack.c.l.b16 %v3714
    %v4054 = vunpack.c.h.b16 %v3714
    %v4055 = vunpack.c.l.b16 %v3715
    %v4056 = vunpack.c.h.b16 %v3715
    %v4057 = vunpack.c.l.b16 %v3716
    %v4058 = vunpack.c.h.b16 %v3716
    %v4059 = vunpack.c.l.b16 %v3717
    %v4060 = vunpack.c.h.b16 %v3717
    %v4061 = vunpack.c.l.b16 %v3718
    %v4062 = vunpack.c.h.b16 %v3718
    %v4063 = vunpack.c.l.b16 %v3719
    %v4064 = vunpack.c.h.b16 %v3719
    %v4065 = vunpack.c.l.b16 %v3720
    %v4066 = vunpack.c.h.b16 %v3720
    %v4067 = vunpack.c.l.b16 %v3721
    %v4068 = vunpack.c.h.b16 %v3721
    %v4069 = vunpack.c.l.b16 %v3722
    %v4070 = vunpack.c.h.b16 %v3722
    %v4071 = vunpack.c.l.b16 %v3723
    %v4072 = vunpack.c.h.b16 %v3723
    %v4073 = vunpack.c.l.b16 %v3724
    %v4074 = vunpack.c.h.b16 %v3724
    %v4075 = vunpack.c.l.b16 %v3725
    %v4076 = vunpack.c.h.b16 %v3725
    %v4077 = vunpack.c.l.b16 %v3726
    %v4078 = vunpack.c.h.b16 %v3726
    %v4079 = vunpack.c.l.b16 %v3727
    %v4080 = vunpack.c.h.b16 %v3727
    %v4081 = vunpack.c.l.b16 %v3728
    %v4082 = vunpack.c.h.b16 %v3728
    %v4083 = vunpack.c.l.b16 %v3729
    %v4084 = vunpack.c.h.b16 %v3729
    %v4085 = vunpack.c.l.b16 %v3730
    %v4086 = vunpack.c.h.b16 %v3730
    %v4087 = vunpack.c.l.b16 %v3731
    %v4088 = vunpack.c.h.b16 %v3731
    %v4089 = vunpack.c.l.b16 %v3732
    %v4090 = vunpack.c.h.b16 %v3732
    %v4091 = vunpack.c.l.b16 %v3733
    %v4092 = vunpack.c.h.b16 %v3733
    %v4093 = vunpack.c.l.b16 %v3734
    %v4094 = vunpack.c.h.b16 %v3734
    %v4095 = vunpack.c.l.b16 %v3735
    %v4096 = vunpack.c.h.b16 %v3735
    %v4097 = vunpack.c.l.b16 %v3736
    %v4098 = vunpack.c.h.b16 %v3736
    %v4099 = vunpack.c.l.b16 %v3737
    %v4100 = vunpack.c.h.b16 %v3737
    %v4101 = vunpack.c.l.b16 %v3738
    %v4102 = vunpack.c.h.b16 %v3738
    %v4103 = vunpack.c.l.b16 %v3739
    %v4104 = vunpack.c.h.b16 %v3739
    %v4105 = vunpack.c.l.b16 %v3740
    %v4106 = vunpack.c.h.b16 %v3740
    %v4107 = vunpack.c.l.b16 %v3741
    %v4108 = vunpack.c.h.b16 %v3741
    %v4109 = vunpack.c.l.b16 %v3742
    %v4110 = vunpack.c.h.b16 %v3742
    %v4111 = vunpack.c.l.b16 %v3743
    %v4112 = vunpack.c.h.b16 %v3743
    %v4113 = vunpack.c.l.b16 %v3744
    %v4114 = vunpack.c.h.b16 %v3744
    %v4115 = vunpack.c.l.b16 %v3745
    %v4116 = vunpack.c.h.b16 %v3745
    %v4117 = vunpack.c.l.b16 %v3746
    %v4118 = vunpack.c.h.b16 %v3746
    %v4119 = vunpack.c.l.b16 %v3747
    %v4120 = vunpack.c.h.b16 %v3747
    %v4121 = vunpack.c.l.b16 %v3748
    %v4122 = vunpack.c.h.b16 %v3748
    %v4123 = vunpack.c.l.b16 %v3749
    %v4124 = vunpack.c.h.b16 %v3749
    %v4125 = vunpack.c.l.b16 %v3750
    %v4126 = vunpack.c.h.b16 %v3750
    %v4127 = vunpack.c.l.b16 %v3751
    %v4128 = vunpack.c.h.b16 %v3751
    %v4129 = vunpack.c.l.b16 %v3752
    %v4130 = vunpack.c.h.b16 %v3752
    %v4131 = vunpack.c.l.b16 %v3753
    %v4132 = vunpack.c.h.b16 %v3753
    %v4133 = vunpack.c.l.b16 %v3754
    %v4134 = vunpack.c.h.b16 %v3754
    %v4135 = vunpack.c.l.b16 %v3755
    %v4136 = vunpack.c.h.b16 %v3755
    %v4137 = vunpack.c.l.b16 %v3756
    %v4138 = vunpack.c.h.b16 %v3756
    %v4139 = vunpack.c.l.b16 %v3757
    %v4140 = vunpack.c.h.b16 %v3757
    %v4141 = vunpack.c.l.b16 %v3758
    %v4142 = vunpack.c.h.b16 %v3758
    %v4143 = vpack.c.b16 %v3891, %v3887
    %v4144 = vpack.c.b16 %v3892, %v3888
    %v4145 = vpack.c.b16 %v3893, %v3889
    %v4146 = vpack.c.b16 %v3894, %v3890
    %v4147 = vpack.c.b16 %v3899, %v3895
    %v4148 = vpack.c.b16 %v3900, %v3896
    %v4149 = vpack.c.b16 %v3901, %v3897
    %v4150 = vpack.c.b16 %v3902, %v3898
    %v4151 = vpack.c.b16 %v3907, %v3903
    %v4152 = vpack.c.b16 %v3908, %v3904
    %v4153 = vpack.c.b16 %v3909, %v3905
    %v4154 = vpack.c.b16 %v3910, %v3906
    %v4155 = vpack.c.b16 %v3915, %v3911
    %v4156 = vpack.c.b16 %v3916, %v3912
    %v4157 = vpack.c.b16 %v3917, %v3913
    %v4158 = vpack.c.b16 %v3918, %v3914
    %v4159 = vpack.c.b16 %v3923, %v3919
    %v4160 = vpack.c.b16 %v3924, %v3920
    %v4161 = vpack.c.b16 %v3925, %v3921
    %v4162 = vpack.c.b16 %v3926, %v3922
    %v4163 = vpack.c.b16 %v3931, %v3927
    %v4164 = vpack.c.b16 %v3932, %v3928
    %v4165 = vpack.c.b16 %v3933, %v3929
    %v4166 = vpack.c.b16 %v3934, %v3930
    %v4167 = vpack.c.b16 %v3939, %v3935
    %v4168 = vpack.c.b16 %v3940, %v3936
    %v4169 = vpack.c.b16 %v3941, %v3937
    %v4170 = vpack.c.b16 %v3942, %v3938
    %v4171 = vpack.c.b16 %v3947, %v3943
    %v4172 = vpack.c.b16 %v3948, %v3944
    %v4173 = vpack.c.b16 %v3949, %v3945
    %v4174 = vpack.c.b16 %v3950, %v3946
    %v4175 = vpack.c.b16 %v3955, %v3951
    %v4176 = vpack.c.b16 %v3956, %v3952
    %v4177 = vpack.c.b16 %v3957, %v3953
    %v4178 = vpack.c.b16 %v3958, %v3954
    %v4179 = vpack.c.b16 %v3963, %v3959
    %v4180 = vpack.c.b16 %v3964, %v3960
    %v4181 = vpack.c.b16 %v3965, %v3961
    %v4182 = vpack.c.b16 %v3966, %v3962
    %v4183 = vpack.c.b16 %v3971, %v3967
    %v4184 = vpack.c.b16 %v3972, %v3968
    %v4185 = vpack.c.b16 %v3973, %v3969
    %v4186 = vpack.c.b16 %v3974, %v3970
    %v4187 = vpack.c.b16 %v3979, %v3975
    %v4188 = vpack.c.b16 %v3980, %v3976
    %v4189 = vpack.c.b16 %v3981, %v3977
    %v4190 = vpack.c.b16 %v3982, %v3978
    %v4191 = vpack.c.b16 %v3987, %v3983
    %v4192 = vpack.c.b16 %v3988, %v3984
    %v4193 = vpack.c.b16 %v3989, %v3985
    %v4194 = vpack.c.b16 %v3990, %v3986
    %v4195 = vpack.c.b16 %v3995, %v3991
    %v4196 = vpack.c.b16 %v3996, %v3992
    %v4197 = vpack.c.b16 %v3997, %v3993
    %v4198 = vpack.c.b16 %v3998, %v3994
    %v4199 = vpack.c.b16 %v4003, %v3999
    %v4200 = vpack.c.b16 %v4004, %v4000
    %v4201 = vpack.c.b16 %v4005, %v4001
    %v4202 = vpack.c.b16 %v4006, %v4002
    %v4203 = vpack.c.b16 %v4011, %v4007
    %v4204 = vpack.c.b16 %v4012, %v4008
    %v4205 = vpack.c.b16 %v4013, %v4009
    %v4206 = vpack.c.b16 %v4014, %v4010
    %v4207 = vpack.c.b16 %v4019, %v4015
    %v4208 = vpack.c.b16 %v4020, %v4016
    %v4209 = vpack.c.b16 %v4021, %v4017
    %v4210 = vpack.c.b16 %v4022, %v4018
    %v4211 = vpack.c.b16 %v4027, %v4023
    %v4212 = vpack.c.b16 %v4028, %v4024
    %v4213 = vpack.c.b16 %v4029, %v4025
    %v4214 = vpack.c.b16 %v4030, %v4026
    %v4215 = vpack.c.b16 %v4035, %v4031
    %v4216 = vpack.c.b16 %v4036, %v4032
    %v4217 = vpack.c.b16 %v4037, %v4033
    %v4218 = vpack.c.b16 %v4038, %v4034
    %v4219 = vpack.c.b16 %v4043, %v4039
    %v4220 = vpack.c.b16 %v4044, %v4040
    %v4221 = vpack.c.b16 %v4045, %v4041
    %v4222 = vpack.c.b16 %v4046, %v4042
    %v4223 = vpack.c.b16 %v4051, %v4047
    %v4224 = vpack.c.b16 %v4052, %v4048
    %v4225 = vpack.c.b16 %v4053, %v4049
    %v4226 = vpack.c.b16 %v4054, %v4050
    %v4227 = vpack.c.b16 %v4059, %v4055
    %v4228 = vpack.c.b16 %v4060, %v4056
    %v4229 = vpack.c.b16 %v4061, %v4057
    %v4230 = vpack.c.b16 %v4062, %v4058
    %v4231 = vpack.c.b16 %v4067, %v4063
    %v4232 = vpack.c.b16 %v4068, %v4064
    %v4233 = vpack.c.b16 %v4069, %v4065
    %v4234 = vpack.c.b16 %v4070, %v4066
    %v4235 = vpack.c.b16 %v4075, %v4071
    %v4236 = vpack.c.b16 %v4076, %v4072
    %v4237 = vpack.c.b16 %v4077, %v4073
    %v4238 = vpack.c.b16 %v4078, %v4074
    %v4239 = vpack.c.b16 %v4083, %v4079
    %v4240 = vpack.c.b16 %v4084, %v4080
    %v4241 = vpack.c.b16 %v4085, %v4081
    %v4242 = vpack.c.b16 %v4086, %v4082
    %v4243 = vpack.c.b16 %v4091, %v4087
    %v4244 = vpack.c.b16 %v4092, %v4088
    %v4245 = vpack.c.b16 %v4093, %v4089
    %v4246 = vpack.c.b16 %v4094, %v4090
    %v4247 = vpack.c.b16 %v4099, %v4095
    %v4248 = vpack.c.b16 %v4100, %v4096
    %v4249 = vpack.c.b16 %v4101, %v4097
    %v4250 = vpack.c.b16 %v4102, %v4098
    %v4251 = vpack.c.b16 %v4107, %v4103
    %v4252 = vpack.c.b16 %v4108, %v4104
    %v4253 = vpack.c.b16 %v4109, %v4105
    %v4254 = vpack.c.b16 %v4110, %v4106
    %v4255 = vpack.c.b16 %v4115, %v4111
    %v4256 = vpack.c.b16 %v4116, %v4112
    %v4257 = vpack.c.b16 %v4117, %v4113
    %v4258 = vpack.c.b16 %v4118, %v4114
    %v4259 = vpack.c.b16 %v4123, %v4119
    %v4260 = vpack.c.b16 %v4124, %v4120
    %v4261 = vpack.c.b16 %v4125, %v4121
    %v4262 = vpack.c.b16 %v4126, %v4122
    %v4263 = vpack.c.b16 %v4131, %v4127
    %v4264 = vpack.c.b16 %v4132, %v4128
    %v4265 = vpack.c.b16 %v4133, %v4129
    %v4266 = vpack.c.b16 %v4134, %v4130
    %v4267 = vpack.c.b16 %v4139, %v4135
    %v4268 = vpack.c.b16 %v4140, %v4136
    %v4269 = vpack.c.b16 %v4141, %v4137
    %v4270 = vpack.c.b16 %v4142, %v4138
    %4399 = vmatpush.bf16.msra.mxu0 %v4171
    %4400 = vmatpush.bf16.msra.mxu0 %v4167
    %4401 = vmatpush.bf16.msra.mxu0 %v4163
    %4402 = vmatpush.bf16.msra.mxu0 %v4159
    %4403 = vmatpush.bf16.msra.mxu0 %v4155
    %4404 = vmatpush.bf16.msra.mxu0 %v4151
    %4405 = vmatpush.bf16.msra.mxu0 %v4147
    %4406 = vmatpush.bf16.msra.mxu0 %v4143
    %4407 = vmatmul.bf16.gmra.mxu0 %v3625
    %v4408 = vpop.f32.mrf.mxu0
    %v4409 = vadd.f32 0.0, %v4408
    %v4410 = vpop.f32.mrf.mxu0
    %4411 = vdwg.mxu0
    %4412 = vmatpush.bf16.msra.mxu0 %v4203
    %4413 = vmatpush.bf16.msra.mxu0 %v4199
    %4414 = vmatpush.bf16.msra.mxu0 %v4195
    %4415 = vmatpush.bf16.msra.mxu0 %v4191
    %4416 = vmatpush.bf16.msra.mxu0 %v4187
    %4417 = vmatpush.bf16.msra.mxu0 %v4183
    %4418 = vmatpush.bf16.msra.mxu0 %v4179
    %4419 = vmatpush.bf16.msra.mxu0 %v4175
    %4420 = vmatmul.bf16.gmra.mxu0 %v3626
    %v4421 = vpop.f32.mrf.mxu0
    %v4422 = vadd.f32 %v4409, %v4421
    %v4423 = vpop.f32.mrf.mxu0
    %4424 = vdwg.mxu0
    %4425 = vmatpush.bf16.msra.mxu0 %v4235
    %4426 = vmatpush.bf16.msra.mxu0 %v4231
    %4427 = vmatpush.bf16.msra.mxu0 %v4227
    %4428 = vmatpush.bf16.msra.mxu0 %v4223
    %4429 = vmatpush.bf16.msra.mxu0 %v4219
    %4430 = vmatpush.bf16.msra.mxu0 %v4215
    %4431 = vmatpush.bf16.msra.mxu0 %v4211
    %4432 = vmatpush.bf16.msra.mxu0 %v4207
    %4433 = vmatmul.bf16.gmra.mxu0 %v3627
    %v4434 = vpop.f32.mrf.mxu0
    %v4435 = vadd.f32 %v4422, %v4434
    %v4436 = vpop.f32.mrf.mxu0
    %4437 = vdwg.mxu0
    %4438 = vmatpush.bf16.msra.mxu0 %v4267
    %4439 = vmatpush.bf16.msra.mxu0 %v4263
    %4440 = vmatpush.bf16.msra.mxu0 %v4259
    %4441 = vmatpush.bf16.msra.mxu0 %v4255
    %4442 = vmatpush.bf16.msra.mxu0 %v4251
    %4443 = vmatpush.bf16.msra.mxu0 %v4247
    %4444 = vmatpush.bf16.msra.mxu0 %v4243
    %4445 = vmatpush.bf16.msra.mxu0 %v4239
    %4446 = vmatmul.bf16.gmra.mxu0 %v3628
    %v4447 = vpop.f32.mrf.mxu0
    %v4448 = vadd.f32 %v4435, %v4447
    %v4449 = vpop.f32.mrf.mxu0
    %4450 = vdwg.mxu0
    %4451 = vmatpush.bf16.msra.mxu0 %v4172
    %4452 = vmatpush.bf16.msra.mxu0 %v4168
    %4453 = vmatpush.bf16.msra.mxu0 %v4164
    %4454 = vmatpush.bf16.msra.mxu0 %v4160
    %4455 = vmatpush.bf16.msra.mxu0 %v4156
    %4456 = vmatpush.bf16.msra.mxu0 %v4152
    %4457 = vmatpush.bf16.msra.mxu0 %v4148
    %4458 = vmatpush.bf16.msra.mxu0 %v4144
    %4459 = vmatmul.bf16.gmra.mxu0 %v3625
    %v4460 = vpop.f32.mrf.mxu0
    %v4461 = vadd.f32 0.0, %v4460
    %v4462 = vpop.f32.mrf.mxu0
    %4463 = vdwg.mxu0
    %4464 = vmatpush.bf16.msra.mxu0 %v4204
    %4465 = vmatpush.bf16.msra.mxu0 %v4200
    %4466 = vmatpush.bf16.msra.mxu0 %v4196
    %4467 = vmatpush.bf16.msra.mxu0 %v4192
    %4468 = vmatpush.bf16.msra.mxu0 %v4188
    %4469 = vmatpush.bf16.msra.mxu0 %v4184
    %4470 = vmatpush.bf16.msra.mxu0 %v4180
    %4471 = vmatpush.bf16.msra.mxu0 %v4176
    %4472 = vmatmul.bf16.gmra.mxu0 %v3626
    %v4473 = vpop.f32.mrf.mxu0
    %v4474 = vadd.f32 %v4461, %v4473
    %v4475 = vpop.f32.mrf.mxu0
    %4476 = vdwg.mxu0
    %4477 = vmatpush.bf16.msra.mxu0 %v4236
    %4478 = vmatpush.bf16.msra.mxu0 %v4232
    %4479 = vmatpush.bf16.msra.mxu0 %v4228
    %4480 = vmatpush.bf16.msra.mxu0 %v4224
    %4481 = vmatpush.bf16.msra.mxu0 %v4220
    %4482 = vmatpush.bf16.msra.mxu0 %v4216
    %4483 = vmatpush.bf16.msra.mxu0 %v4212
    %4484 = vmatpush.bf16.msra.mxu0 %v4208
    %4485 = vmatmul.bf16.gmra.mxu0 %v3627
    %v4486 = vpop.f32.mrf.mxu0
    %v4487 = vadd.f32 %v4474, %v4486
    %v4488 = vpop.f32.mrf.mxu0
    %4489 = vdwg.mxu0
    %4490 = vmatpush.bf16.msra.mxu0 %v4268
    %4491 = vmatpush.bf16.msra.mxu0 %v4264
    %4492 = vmatpush.bf16.msra.mxu0 %v4260
    %4493 = vmatpush.bf16.msra.mxu0 %v4256
    %4494 = vmatpush.bf16.msra.mxu0 %v4252
    %4495 = vmatpush.bf16.msra.mxu0 %v4248
    %4496 = vmatpush.bf16.msra.mxu0 %v4244
    %4497 = vmatpush.bf16.msra.mxu0 %v4240
    %4498 = vmatmul.bf16.gmra.mxu0 %v3628
    %v4499 = vpop.f32.mrf.mxu0
    %v4500 = vadd.f32 %v4487, %v4499
    %v4501 = vpop.f32.mrf.mxu0
    %4502 = vdwg.mxu0
    %4503 = vmatpush.bf16.msra.mxu0 %v4173
    %4504 = vmatpush.bf16.msra.mxu0 %v4169
    %4505 = vmatpush.bf16.msra.mxu0 %v4165
    %4506 = vmatpush.bf16.msra.mxu0 %v4161
    %4507 = vmatpush.bf16.msra.mxu0 %v4157
    %4508 = vmatpush.bf16.msra.mxu0 %v4153
    %4509 = vmatpush.bf16.msra.mxu0 %v4149
    %4510 = vmatpush.bf16.msra.mxu0 %v4145
    %4511 = vmatmul.bf16.gmra.mxu0 %v3625
    %v4512 = vpop.f32.mrf.mxu0
    %v4513 = vadd.f32 0.0, %v4512
    %v4514 = vpop.f32.mrf.mxu0
    %4515 = vdwg.mxu0
    %4516 = vmatpush.bf16.msra.mxu0 %v4205
    %4517 = vmatpush.bf16.msra.mxu0 %v4201
    %4518 = vmatpush.bf16.msra.mxu0 %v4197
    %4519 = vmatpush.bf16.msra.mxu0 %v4193
    %4520 = vmatpush.bf16.msra.mxu0 %v4189
    %4521 = vmatpush.bf16.msra.mxu0 %v4185
    %4522 = vmatpush.bf16.msra.mxu0 %v4181
    %4523 = vmatpush.bf16.msra.mxu0 %v4177
    %4524 = vmatmul.bf16.gmra.mxu0 %v3626
    %v4525 = vpop.f32.mrf.mxu0
    %v4526 = vadd.f32 %v4513, %v4525
    %v4527 = vpop.f32.mrf.mxu0
    %4528 = vdwg.mxu0
    %4529 = vmatpush.bf16.msra.mxu0 %v4237
    %4530 = vmatpush.bf16.msra.mxu0 %v4233
    %4531 = vmatpush.bf16.msra.mxu0 %v4229
    %4532 = vmatpush.bf16.msra.mxu0 %v4225
    %4533 = vmatpush.bf16.msra.mxu0 %v4221
    %4534 = vmatpush.bf16.msra.mxu0 %v4217
    %4535 = vmatpush.bf16.msra.mxu0 %v4213
    %4536 = vmatpush.bf16.msra.mxu0 %v4209
    %4537 = vmatmul.bf16.gmra.mxu0 %v3627
    %v4538 = vpop.f32.mrf.mxu0
    %v4539 = vadd.f32 %v4526, %v4538
    %v4540 = vpop.f32.mrf.mxu0
    %4541 = vdwg.mxu0
    %4542 = vmatpush.bf16.msra.mxu0 %v4269
    %4543 = vmatpush.bf16.msra.mxu0 %v4265
    %4544 = vmatpush.bf16.msra.mxu0 %v4261
    %4545 = vmatpush.bf16.msra.mxu0 %v4257
    %4546 = vmatpush.bf16.msra.mxu0 %v4253
    %4547 = vmatpush.bf16.msra.mxu0 %v4249
    %4548 = vmatpush.bf16.msra.mxu0 %v4245
    %4549 = vmatpush.bf16.msra.mxu0 %v4241
    %4550 = vmatmul.bf16.gmra.mxu0 %v3628
    %v4551 = vpop.f32.mrf.mxu0
    %v4552 = vadd.f32 %v4539, %v4551
    %v4553 = vpop.f32.mrf.mxu0
    %4554 = vdwg.mxu0
    %4555 = vmatpush.bf16.msra.mxu0 %v4174
    %4556 = vmatpush.bf16.msra.mxu0 %v4170
    %4557 = vmatpush.bf16.msra.mxu0 %v4166
    %4558 = vmatpush.bf16.msra.mxu0 %v4162
    %4559 = vmatpush.bf16.msra.mxu0 %v4158
    %4560 = vmatpush.bf16.msra.mxu0 %v4154
    %4561 = vmatpush.bf16.msra.mxu0 %v4150
    %4562 = vmatpush.bf16.msra.mxu0 %v4146
    %4563 = vmatmul.bf16.gmra.mxu0 %v3625
    %v4564 = vpop.f32.mrf.mxu0
    %v4565 = vadd.f32 0.0, %v4564
    %v4566 = vpop.f32.mrf.mxu0
    %4567 = vdwg.mxu0
    %4568 = vmatpush.bf16.msra.mxu0 %v4206
    %4569 = vmatpush.bf16.msra.mxu0 %v4202
    %4570 = vmatpush.bf16.msra.mxu0 %v4198
    %4571 = vmatpush.bf16.msra.mxu0 %v4194
    %4572 = vmatpush.bf16.msra.mxu0 %v4190
    %4573 = vmatpush.bf16.msra.mxu0 %v4186
    %4574 = vmatpush.bf16.msra.mxu0 %v4182
    %4575 = vmatpush.bf16.msra.mxu0 %v4178
    %4576 = vmatmul.bf16.gmra.mxu0 %v3626
    %v4577 = vpop.f32.mrf.mxu0
    %v4578 = vadd.f32 %v4565, %v4577
    %v4579 = vpop.f32.mrf.mxu0
    %4580 = vdwg.mxu0
    %4581 = vmatpush.bf16.msra.mxu0 %v4238
    %4582 = vmatpush.bf16.msra.mxu0 %v4234
    %4583 = vmatpush.bf16.msra.mxu0 %v4230
    %4584 = vmatpush.bf16.msra.mxu0 %v4226
    %4585 = vmatpush.bf16.msra.mxu0 %v4222
    %4586 = vmatpush.bf16.msra.mxu0 %v4218
    %4587 = vmatpush.bf16.msra.mxu0 %v4214
    %4588 = vmatpush.bf16.msra.mxu0 %v4210
    %4589 = vmatmul.bf16.gmra.mxu0 %v3627
    %v4590 = vpop.f32.mrf.mxu0
    %v4591 = vadd.f32 %v4578, %v4590
    %v4592 = vpop.f32.mrf.mxu0
    %4593 = vdwg.mxu0
    %4594 = vmatpush.bf16.msra.mxu0 %v4270
    %4595 = vmatpush.bf16.msra.mxu0 %v4266
    %4596 = vmatpush.bf16.msra.mxu0 %v4262
    %4597 = vmatpush.bf16.msra.mxu0 %v4258
    %4598 = vmatpush.bf16.msra.mxu0 %v4254
    %4599 = vmatpush.bf16.msra.mxu0 %v4250
    %4600 = vmatpush.bf16.msra.mxu0 %v4246
    %4601 = vmatpush.bf16.msra.mxu0 %v4242
    %4602 = vmatmul.bf16.gmra.mxu0 %v3628
    %v4603 = vpop.f32.mrf.mxu0
    %v4604 = vadd.f32 %v4591, %v4603
    %v4605 = vpop.f32.mrf.mxu0
    %4606 = vdwg.mxu0
    %v4607 = vrot.slane %v4448, 4
    %v4608 = vadd.f32 %v4448, %v4607
    %v4609 = vrot.slane %v4608, 2
    %v4610 = vadd.f32 %v4608, %v4609
    %v4611 = vrot.slane %v4610, 1
    %v4612 = vadd.f32 %v4610, %v4611
    %v4613 = vrot.slane %v4500, 4
    %v4614 = vadd.f32 %v4500, %v4613
    %v4615 = vrot.slane %v4614, 2
    %v4616 = vadd.f32 %v4614, %v4615
    %v4617 = vrot.slane %v4616, 1
    %v4618 = vadd.f32 %v4616, %v4617
    %v4619 = vrot.slane %v4552, 4
    %v4620 = vadd.f32 %v4552, %v4619
    %v4621 = vrot.slane %v4620, 2
    %v4622 = vadd.f32 %v4620, %v4621
    %v4623 = vrot.slane %v4622, 1
    %v4624 = vadd.f32 %v4622, %v4623
    %v4625 = vrot.slane %v4604, 4
    %v4626 = vadd.f32 %v4604, %v4625
    %v4627 = vrot.slane %v4626, 2
    %v4628 = vadd.f32 %v4626, %v4627
    %v4629 = vrot.slane %v4628, 1
    %v4630 = vadd.f32 %v4628, %v4629
    %v4631 = vmul.f32 %v4448, %v4448
    %v4632 = vmul.f32 %v4500, %v4500
    %v4633 = vmul.f32 %v4552, %v4552
    %v4634 = vmul.f32 %v4604, %v4604
    %v4635 = vrot.slane %v4631, 4
    %v4636 = vadd.f32 %v4631, %v4635
    %v4637 = vrot.slane %v4636, 2
    %v4638 = vadd.f32 %v4636, %v4637
    %v4639 = vrot.slane %v4638, 1
    %v4640 = vadd.f32 %v4638, %v4639
    %v4641 = vrot.slane %v4632, 4
    %v4642 = vadd.f32 %v4632, %v4641
    %v4643 = vrot.slane %v4642, 2
    %v4644 = vadd.f32 %v4642, %v4643
    %v4645 = vrot.slane %v4644, 1
    %v4646 = vadd.f32 %v4644, %v4645
    %v4647 = vrot.slane %v4633, 4
    %v4648 = vadd.f32 %v4633, %v4647
    %v4649 = vrot.slane %v4648, 2
    %v4650 = vadd.f32 %v4648, %v4649
    %v4651 = vrot.slane %v4650, 1
    %v4652 = vadd.f32 %v4650, %v4651
    %v4653 = vrot.slane %v4634, 4
    %v4654 = vadd.f32 %v4634, %v4653
    %v4655 = vrot.slane %v4654, 2
    %v4656 = vadd.f32 %v4654, %v4655
    %v4657 = vrot.slane %v4656, 1
    %v4658 = vadd.f32 %v4656, %v4657
    %v4659 = vmul.f32 %v4612, 0.125
    %v4660 = vmul.f32 %v4618, 0.125
    %v4661 = vmul.f32 %v4624, 0.125
    %v4662 = vmul.f32 %v4630, 0.125
    %v4663 = vmul.f32 %v4640, 0.125
    %v4664 = vmul.f32 %v4646, 0.125
    %v4665 = vmul.f32 %v4652, 0.125
    %v4666 = vmul.f32 %v4658, 0.125
    %v4667 = vmul.f32 %v4659, %v4659
    %v4668 = vmul.f32 %v4660, %v4660
    %v4669 = vmul.f32 %v4661, %v4661
    %v4670 = vmul.f32 %v4662, %v4662
    %v4671 = vsub.f32 %v4663, %v4667
    %v4672 = vsub.f32 %v4664, %v4668
    %v4673 = vsub.f32 %v4665, %v4669
    %v4674 = vsub.f32 %v4666, %v4670
    %v4675 = vmax.f32 %v4671, 0.0
    %v4676 = vmax.f32 %v4672, 0.0
    %v4677 = vmax.f32 %v4673, 0.0
    %v4678 = vmax.f32 %v4674, 0.0
    %s4679 = scalar_lea.vmem [#allocation7], 12
    %v4680 = vld [vmem:[%s4679] sm:$0xf]
    %v4681 = vadd.f32 %v4675, 1e-05
    %v4682 = vadd.f32 %v4676, 1e-05
    %v4683 = vadd.f32 %v4677, 1e-05
    %v4684 = vadd.f32 %v4678, 1e-05
    %v4685 = vrsqrt.pop %v4681
    %v4686 = vmul.f32 %v4685, %v4681
    %v4687 = vmul.f32 %v4686, %v4685
    %v4688 = vmul.f32 0.5, %v4687
    %v4689 = vsub.f32 1.5, %v4688
    %v4690 = vmul.f32 %v4685, %v4689
    %vm4691 = vweird.f32 %v4681
    %vm4692 = vweird.f32 %v4685
    %vm4693 = vmor %vm4691, %vm4692
    %v4694 = vsel %vm4693, %v4685, %v4690
    %v4695 = vrsqrt.pop %v4682
    %v4696 = vmul.f32 %v4695, %v4682
    %v4697 = vmul.f32 %v4696, %v4695
    %v4698 = vmul.f32 0.5, %v4697
    %v4699 = vsub.f32 1.5, %v4698
    %v4700 = vmul.f32 %v4695, %v4699
    %vm4701 = vweird.f32 %v4682
    %vm4702 = vweird.f32 %v4695
    %vm4703 = vmor %vm4701, %vm4702
    %v4704 = vsel %vm4703, %v4695, %v4700
    %v4705 = vrsqrt.pop %v4683
    %v4706 = vmul.f32 %v4705, %v4683
    %v4707 = vmul.f32 %v4706, %v4705
    %v4708 = vmul.f32 0.5, %v4707
    %v4709 = vsub.f32 1.5, %v4708
    %v4710 = vmul.f32 %v4705, %v4709
    %vm4711 = vweird.f32 %v4683
    %vm4712 = vweird.f32 %v4705
    %vm4713 = vmor %vm4711, %vm4712
    %v4714 = vsel %vm4713, %v4705, %v4710
    %v4715 = vrsqrt.pop %v4684
    %v4716 = vmul.f32 %v4715, %v4684
    %v4717 = vmul.f32 %v4716, %v4715
    %v4718 = vmul.f32 0.5, %v4717
    %v4719 = vsub.f32 1.5, %v4718
    %v4720 = vmul.f32 %v4715, %v4719
    %vm4721 = vweird.f32 %v4684
    %vm4722 = vweird.f32 %v4715
    %vm4723 = vmor %vm4721, %vm4722
    %v4724 = vsel %vm4723, %v4715, %v4720
    %v4729 = vrot.slane %v4704, 7
    %v4730 = vrot.slane %v4714, 6
    %v4731 = vrot.slane %v4724, 5
    %v4732 = vsel %vm1222, %v4694, %v4729
    %v4733 = vsel %vm1224, %v4730, %v4731
    %v4734 = vsel %vm1226, %v4732, %v4733
    %v4736 = vmul.f32 %v4680, %v4734
    %s4737 = scalar_lea.vmem [#allocation9], 12
    %v4738 = vld [vmem:[%s4737] sm:$0xf]
    %v4740 = vperm.slane %v4736, 0
    %v4741 = vperm.slane %v4736, 1
    %v4742 = vperm.slane %v4736, 2
    %v4743 = vperm.slane %v4736, 3
    %v4748 = vmul.f32 %v4659, %v4740
    %v4749 = vmul.f32 %v4660, %v4741
    %v4750 = vmul.f32 %v4661, %v4742
    %v4751 = vmul.f32 %v4662, %v4743
    %v4756 = vrot.slane %v4749, 7
    %v4757 = vrot.slane %v4750, 6
    %v4758 = vrot.slane %v4751, 5
    %v4759 = vsel %vm1222, %v4748, %v4756
    %v4760 = vsel %vm1224, %v4757, %v4758
    %v4761 = vsel %vm1226, %v4759, %v4760
    %v4763 = vsub.f32 %v4738, %v4761
    %v4764 = vmul.f32 %v4448, %v4740
    %v4765 = vmul.f32 %v4500, %v4741
    %v4766 = vmul.f32 %v4552, %v4742
    %v4767 = vmul.f32 %v4604, %v4743
    %v4769 = vperm.slane %v4763, 0
    %v4770 = vperm.slane %v4763, 1
    %v4771 = vperm.slane %v4763, 2
    %v4772 = vperm.slane %v4763, 3
    %v4777 = vadd.f32 %v4764, %v4769
    %v4778 = vadd.f32 %v4765, %v4770
    %v4779 = vadd.f32 %v4766, %v4771
    %v4780 = vadd.f32 %v4767, %v4772
    %v4781 = vmax.f32 %v4777, 0.0
    %v4782 = vmax.f32 %v4778, 0.0
    %v4783 = vmax.f32 %v4779, 0.0
    %v4784 = vmax.f32 %v4780, 0.0
    %v4785 = vpack.c.bf16 %v4782, %v4781
    %v4786 = vpack.c.bf16 %v4784, %v4783
    %v4787 = vunpack.c.l.bf16 %v4785
    %v4788 = vunpack.c.h.bf16 %v4785
    %v4789 = vunpack.c.l.bf16 %v4786
    %v4790 = vunpack.c.h.bf16 %v4786
    %v4791 = vld [vmem:[#allocation10] sm:$0xf]
    %v4793 = vperm.slane %v4791, 0
    %v4794 = vperm.slane %v4791, 1
    %v4795 = vperm.slane %v4791, 2
    %v4796 = vperm.slane %v4791, 3
    %v4801 = vmul.f32 %v4787, %v4793
    %v4802 = vmul.f32 %v4788, %v4794
    %v4803 = vmul.f32 %v4789, %v4795
    %v4804 = vmul.f32 %v4790, %v4796
    %v4805 = vadd.f32 %v4801, %v4802
    %v4806 = vadd.f32 %v4805, %v4803
    %v4807 = vadd.f32 %v4806, %v4804
    %4808 = vadd.xlane.f32.xlu0 %v4807
    %v4809 = vpop.xlane.xlu0 %4808
    %s4810 = sld [smem:[#allocation4]]
    %v4811 = vstv %s4810
    %v4812 = vadd.f32 %v4809, %v4811
    %vm4813 = vcmask 7168
    %4814 = vst.msk [vmem:[%s6] sm:$0xff] %vm4813, %v4812
    // Predicated region
    $region54: #{tpu_custom_call.1} parent=1 // pred_check
      _
    $region55: #{tpu_custom_call.1} parent=1 // pred_check_branch
      %4816 = sbr.rel (0) target = $region57
    $region56: #{tpu_custom_call.1} parent=1 // pred_region
      _
    $region57: #{tpu_custom_call.1} parent=1 // pred_fallthru
      _
    // Predicated region
    $region58: #{tpu_custom_call.1} parent=1 // pred_check
      _
    $region59: #{tpu_custom_call.1} parent=1 // pred_check_branch
      %4818 = sbr.rel (0) target = $region61
    $region60: #{tpu_custom_call.1} parent=1 // pred_region
      _
    $region61: #{tpu_custom_call.1} parent=1 // pred_fallthru
      _
    %4819 = vsyncpa [#allocation6], 1
    %4820 = vsyncpa [#allocation8], 1
    %4821 = vsyncpa [#allocation11], 1
  %4822 = vsyncmov [#allocation3]
  %s4823 = vpop.sfrf %4822
  %p4824 = scmp.eq.s32.totalorder %s4823, 0
  %p4825 = pneg %p4824
  %4827 = shalt.err (%p4825)
  %s4828 = scalar_lea.sflag [#allocation3], 1
  %4829 = vsyncmov %s4828
  %s4830 = vpop.sfrf %4829
  %p4831 = scmp.eq.s32.totalorder %s4830, 0
  %p4832 = pneg %p4831
  %4834 = shalt.err (%p4832)

</llo_original>
